<compile_context>
chip_gen: v5e
topology: v5e:2x2
jax: 0.10.0
libtpu: 0.0.40
codegen_flags: <defaults>
</compile_context>

<pallas_src>
import jax
import jax.numpy as jnp
from jax.experimental import pallas as pl
from jax.experimental.pallas import tpu as pltpu

BN_EPS = 1e-5
LANE = 128
HIDDEN = 500
BOTTLENECK = 3
HIDDEN_P = 512       # round_up(500, 128)
BOTTLENECK_P = 128   # round_up(3, 128)


def _round_up(n, m):
    return ((n + m - 1) // m) * m


# --------------------------------------------------------------------------- #
# Static packing plan (derived from input_dim only; shared by packer + kernel)
# --------------------------------------------------------------------------- #
def _pack_plan(input_dim):
    """Per-layer static info: slab index, row offset, padded dims, activation."""
    din0_p = _round_up(input_dim, LANE)
    dlast_p = _round_up(input_dim, LANE)
    dims = [
        (din0_p, HIDDEN_P, HIDDEN, "relu"),             # Linear(in,500)+BN+ReLU
        (HIDDEN_P, HIDDEN_P, HIDDEN, "relu"),           # Linear(500,500)+BN+ReLU
        (HIDDEN_P, BOTTLENECK_P, BOTTLENECK, "sigmoid"),  # Linear(500,3)+BN+Sig
        (BOTTLENECK_P, HIDDEN_P, HIDDEN, "relu"),       # Linear(3,500)+BN+ReLU
        (HIDDEN_P, HIDDEN_P, HIDDEN, "relu"),           # Linear(500,500)+BN+ReLU
        (HIDDEN_P, dlast_p, input_dim, "sigmoid"),      # Linear(500,in)+BN+Sig
    ]
    meta, slab_widths, slab_rows = [], [], []
    for din_p, dout_p, dout, act in dims:
        if dout_p in slab_widths:
            s = slab_widths.index(dout_p)
        else:
            s = len(slab_widths)
            slab_widths.append(dout_p)
            slab_rows.append(0)
        meta.append(dict(slab=s, row=slab_rows[s], din_p=din_p, dout_p=dout_p,
                         dout=dout, act=act))
        slab_rows[s] += din_p
    return tuple(meta), tuple(slab_widths), tuple(slab_rows)


# --------------------------------------------------------------------------- #
# Fused kernel: 6 x (Linear + BN + act) in one program, lazy per-layer DMA waits
# --------------------------------------------------------------------------- #
def _make_kernel(meta, n_slabs):
    n_layers = len(meta)

    def kernel(*refs):
        x_ref = refs[0]                                  # (B, din0_p) bf16, VMEM
        slab_refs = refs[1:1 + n_slabs]                  # packed weights, HBM
        p_ref = refs[1 + n_slabs]                        # (48, pw) f32, VMEM
        en_ref = refs[2 + n_slabs]                       # (B, 128) f32 output
        out_ref = refs[3 + n_slabs]                      # (B, dlast_p) f32 output
        w_bufs = refs[4 + n_slabs:4 + n_slabs + n_layers]  # per-layer VMEM bf16
        sems = refs[4 + n_slabs + n_layers]              # DMA sems (6,)

        # Issue ALL weight DMAs up front (in consumption order); wait lazily so
        # layer i's matmul/BN overlaps the transfers of layers i+1..5.
        copies = []
        for i, m in enumerate(meta):
            src = slab_refs[m["slab"]].at[m["row"]:m["row"] + m["din_p"], :]
            cp = pltpu.make_async_copy(src, w_bufs[i], sems.at[i])
            cp.start()
            copies.append(cp)

        h = x_ref[...]                                   # bf16, lane-padded
        for i, m in enumerate(meta):
            copies[i].wait()
            dp = m["dout_p"]
            # Linear on the MXU: bf16 x bf16 inputs, f32 accumulation.
            y = jnp.dot(h, w_bufs[i][...], preferred_element_type=jnp.float32)
            pk = p_ref[8 * i:8 * i + 3, :dp]             # [bias; gamma; beta]
            y = y + pk[0:1, :]
            # BatchNorm1d (training mode): batch mean / biased variance, in f32.
            mean = jnp.mean(y, axis=0, keepdims=True)
            c = y - mean
            var = jnp.mean(c * c, axis=0, keepdims=True)
            z = c * jax.lax.rsqrt(var + BN_EPS) * pk[1:2, :] + pk[2:3, :]
            if m["act"] == "relu":
                a = jnp.maximum(z, 0.0)
            else:
                # sigmoid(z) == 0.5*tanh(0.5*z)+0.5 : single EUP op, no divide.
                a = 0.5 * jnp.tanh(0.5 * z) + 0.5
            if i == 2:
                en_ref[...] = a                          # bottleneck (padded)
            if i == n_layers - 1:
                out_ref[...] = a                         # reconstruction (padded)
            h = a.astype(jnp.bfloat16)                   # bf16 for the next MXU op

    return kernel


def autoencoder_forward(x, slabs, pslab):
    """Fused forward. x: (B, input_dim) f32. Returns (enOutputs, outputs)."""
    B, input_dim = x.shape
    meta, slab_widths, _ = _pack_plan(input_dim)
    n_slabs = len(slab_widths)
    din0_p = meta[0]["din_p"]
    en_p_dim = meta[2]["dout_p"]
    out_p_dim = meta[-1]["dout_p"]

    # One tiny fused pad+cast in the wrapper (bf16 is the MXU-native format).
    x_p = x.astype(jnp.bfloat16)
    if din0_p != input_dim:
        x_p = jnp.pad(x_p, ((0, 0), (0, din0_p - input_dim)))

    scratch = [pltpu.VMEM((m["din_p"], m["dout_p"]), jnp.bfloat16) for m in meta]
    scratch.append(pltpu.SemaphoreType.DMA((len(meta),)))

    flops = 2 * B * sum(m["din_p"] * m["dout_p"] for m in meta)
    param_bytes = sum(int(s.size) * s.dtype.itemsize for s in slabs) \
        + int(pslab.size) * 4
    bytes_accessed = int(param_bytes + x_p.size * 2
                         + B * (en_p_dim + out_p_dim) * 4)

    en_p, out_p = pl.pallas_call(
        _make_kernel(meta, n_slabs),
        out_shape=(jax.ShapeDtypeStruct((B, en_p_dim), jnp.float32),
                   jax.ShapeDtypeStruct((B, out_p_dim), jnp.float32)),
        in_specs=(
            [pl.BlockSpec(memory_space=pltpu.MemorySpace.VMEM)]        # x
            + [pl.BlockSpec(memory_space=pl.ANY)] * n_slabs            # weight slabs stay in HBM
            + [pl.BlockSpec(memory_space=pltpu.MemorySpace.VMEM)]      # bias/gamma/beta slab
        ),
        out_specs=(pl.BlockSpec(memory_space=pltpu.MemorySpace.VMEM),
                   pl.BlockSpec(memory_space=pltpu.MemorySpace.VMEM)),
        scratch_shapes=scratch,
        cost_estimate=pl.CostEstimate(flops=flops,
                                      transcendentals=B * (en_p_dim + out_p_dim)
                                      + 12 * HIDDEN_P,
                                      bytes_accessed=bytes_accessed),
    )(x_p, *slabs, pslab)

    return en_p[:, :BOTTLENECK], out_p[:, :input_dim]


# --------------------------------------------------------------------------- #
# Parameter construction (PyTorch-equivalent init) + one-time kernel packing
# --------------------------------------------------------------------------- #
def init_linear(key, fan_in, fan_out):
    """PyTorch default Linear init: U(-1/sqrt(fan_in), 1/sqrt(fan_in))."""
    kw, kb = jax.random.split(key)
    bound = float(fan_in) ** -0.5
    w = jax.random.uniform(kw, (fan_out, fan_in), jnp.float32, -bound, bound)
    b = jax.random.uniform(kb, (fan_out,), jnp.float32, -bound, bound)
    return w, b


def make_params(key, input_dim):
    dims = [(input_dim, HIDDEN, "relu"), (HIDDEN, HIDDEN, "relu"),
            (HIDDEN, BOTTLENECK, "sigmoid"), (BOTTLENECK, HIDDEN, "relu"),
            (HIDDEN, HIDDEN, "relu"), (HIDDEN, input_dim, "sigmoid")]
    keys = jax.random.split(key, len(dims))
    params = []
    for k, (din, dout, act) in zip(keys, dims):
        w, b = init_linear(k, din, dout)
        params.append(dict(w=w, b=b, gamma=jnp.ones((dout,), jnp.float32),
                           beta=jnp.zeros((dout,), jnp.float32), act=act))
    return params


def prepare_kernel_params(params, input_dim):
    """One-time packing: transpose each weight to (din, dout), zero-pad to its
    (din_p, dout_p) block, stack blocks of equal lane width into one contiguous
    bf16 slab, and pack [bias; gamma; beta] into a single (48, 512) f32 slab.
    Padded rows/cols are EXACTLY zero (they must absorb the sigmoid(0)=0.5
    values that live in the padded bottleneck/output lanes)."""
    meta, slab_widths, slab_rows = _pack_plan(input_dim)
    slabs = [jnp.zeros((rows, width), jnp.float32)
             for rows, width in zip(slab_rows, slab_widths)]
    p_width = max(m["dout_p"] for m in meta)
    pslab = jnp.zeros((8 * len(meta), p_width), jnp.float32)
    for i, (p, m) in enumerate(zip(params, meta)):
        w = p["w"]                                    # (dout, din) torch layout
        dout, din = w.shape
        s, r = m["slab"], m["row"]
        slabs[s] = slabs[s].at[r:r + din, :dout].set(w.T)
        pslab = pslab.at[8 * i + 0, :dout].set(p["b"])
        pslab = pslab.at[8 * i + 1, :dout].set(p["gamma"])
        pslab = pslab.at[8 * i + 2, :dout].set(p["beta"])
    slabs = tuple(s.astype(jnp.bfloat16) for s in slabs)   # bf16(0) == 0 exactly
    return slabs, pslab


# --------------------------------------------------------------------------- #
# Pure-JAX reference with the SAME numerics (bf16 weights/activations into the
# matmul, f32 accumulation + f32 BatchNorm) for a tight correctness check.
# --------------------------------------------------------------------------- #
def reference_forward(x, params):
    h = x
    en = None
    for i, p in enumerate(params):
        wq = p["w"].astype(jnp.bfloat16)               # same storage quantization
        y = jax.lax.dot_general(h.astype(jnp.bfloat16), wq,
                                (((1,), (1,)), ((), ())),
                                preferred_element_type=jnp.float32) + p["b"]
        mean = jnp.mean(y, axis=0, keepdims=True)
        var = jnp.mean((y - mean) ** 2, axis=0, keepdims=True)
        z = (y - mean) * jax.lax.rsqrt(var + BN_EPS) * p["gamma"] + p["beta"]
        h = jnp.maximum(z, 0.0) if p["act"] == "relu" else jax.nn.sigmoid(z)
        if i == 2:
            en = h
    return en, h


if __name__ == "__main__":
    INPUT_DIM = 32
    BATCH = 8

    root = jax.random.PRNGKey(0)
    k_x, k_p = jax.random.split(root)
    x = jax.random.normal(k_x, (BATCH, INPUT_DIM), jnp.float32)

    params = make_params(k_p, INPUT_DIM)
    slabs, pslab = prepare_kernel_params(params, INPUT_DIM)   # pack/cast ONCE

    fwd = jax.jit(autoencoder_forward)
    en_out, out = fwd(x, slabs, pslab)
    en_out, out = jax.block_until_ready((en_out, out))

    en_ref, out_ref = reference_forward(x, params)
    assert en_out.shape == (BATCH, BOTTLENECK) and out.shape == (BATCH, INPUT_DIM)
    # bf16 storage + rounding-boundary effects across 6 layers -> 2e-3 tolerance
    # (outputs are sigmoid-bounded in [0,1], so this is still a tight check).
    assert jnp.allclose(en_out, en_ref, atol=2e-3, rtol=2e-3), \
        f"enOutputs max err {float(jnp.max(jnp.abs(en_out - en_ref)))}"
    assert jnp.allclose(out, out_ref, atol=2e-3, rtol=2e-3), \
        f"outputs max err {float(jnp.max(jnp.abs(out - out_ref)))}"

    print("KERNEL_OK")
</pallas_src>

<mosaic_0001>
module attributes {stable_mosaic.version = 11 : i64} {
  func.func @kernel(%arg0: memref<8x128xbf16, #tpu.memory_space<vmem>>, %arg1: memref<1280x512xbf16, #tpu.memory_space<any>>, %arg2: memref<1024x128xbf16, #tpu.memory_space<any>>, %arg3: memref<48x512xf32, #tpu.memory_space<vmem>>, %arg4: memref<8x128xf32, #tpu.memory_space<vmem>>, %arg5: memref<8x128xf32, #tpu.memory_space<vmem>>, %arg6: memref<128x512xbf16, #tpu.memory_space<vmem>>, %arg7: memref<512x512xbf16, #tpu.memory_space<vmem>>, %arg8: memref<512x128xbf16, #tpu.memory_space<vmem>>, %arg9: memref<128x512xbf16, #tpu.memory_space<vmem>>, %arg10: memref<512x512xbf16, #tpu.memory_space<vmem>>, %arg11: memref<512x128xbf16, #tpu.memory_space<vmem>>, %arg12: memref<6x!tpu.dma_semaphore, #tpu.memory_space<semaphore_mem>>) attributes {dimension_semantics = [], scalar_prefetch = 0 : i64, scratch_operands = 7 : i64, tpu.core_type = #tpu.core_type<tc>} {
    %c0_i32 = arith.constant 0 : i32
    %c0_i32_0 = arith.constant 0 : i32
    %c0_i32_1 = arith.constant 0 : i32
    %0 = tpu.memref_slice %arg1[%c0_i32_0, %c0_i32_1] : memref<1280x512xbf16, #tpu.memory_space<any>> -> memref<128x512xbf16, #tpu.memory_space<any>>
    %1 = tpu.memref_slice %arg12[%c0_i32] : memref<6x!tpu.dma_semaphore, #tpu.memory_space<semaphore_mem>> -> memref<1x!tpu.dma_semaphore, #tpu.memory_space<semaphore_mem>>
    %2 = tpu.memref_squeeze %1 : memref<1x!tpu.dma_semaphore, #tpu.memory_space<semaphore_mem>> -> memref<!tpu.dma_semaphore, #tpu.memory_space<semaphore_mem>>
    tpu.enqueue_dma source(%0 : memref<128x512xbf16, #tpu.memory_space<any>>) target(%arg6 : memref<128x512xbf16, #tpu.memory_space<vmem>>) target_semaphore(%2 : memref<!tpu.dma_semaphore, #tpu.memory_space<semaphore_mem>>)
    %c1_i32 = arith.constant 1 : i32
    %c128_i32 = arith.constant 128 : i32
    %c0_i32_2 = arith.constant 0 : i32
    %3 = tpu.memref_slice %arg1[%c128_i32, %c0_i32_2] : memref<1280x512xbf16, #tpu.memory_space<any>> -> memref<512x512xbf16, #tpu.memory_space<any>>
    %4 = tpu.memref_slice %arg12[%c1_i32] : memref<6x!tpu.dma_semaphore, #tpu.memory_space<semaphore_mem>> -> memref<1x!tpu.dma_semaphore, #tpu.memory_space<semaphore_mem>>
    %5 = tpu.memref_squeeze %4 : memref<1x!tpu.dma_semaphore, #tpu.memory_space<semaphore_mem>> -> memref<!tpu.dma_semaphore, #tpu.memory_space<semaphore_mem>>
    tpu.enqueue_dma source(%3 : memref<512x512xbf16, #tpu.memory_space<any>>) target(%arg7 : memref<512x512xbf16, #tpu.memory_space<vmem>>) target_semaphore(%5 : memref<!tpu.dma_semaphore, #tpu.memory_space<semaphore_mem>>)
    %c2_i32 = arith.constant 2 : i32
    %c0_i32_3 = arith.constant 0 : i32
    %c0_i32_4 = arith.constant 0 : i32
    %6 = tpu.memref_slice %arg2[%c0_i32_3, %c0_i32_4] : memref<1024x128xbf16, #tpu.memory_space<any>> -> memref<512x128xbf16, #tpu.memory_space<any>>
    %7 = tpu.memref_slice %arg12[%c2_i32] : memref<6x!tpu.dma_semaphore, #tpu.memory_space<semaphore_mem>> -> memref<1x!tpu.dma_semaphore, #tpu.memory_space<semaphore_mem>>
    %8 = tpu.memref_squeeze %7 : memref<1x!tpu.dma_semaphore, #tpu.memory_space<semaphore_mem>> -> memref<!tpu.dma_semaphore, #tpu.memory_space<semaphore_mem>>
    tpu.enqueue_dma source(%6 : memref<512x128xbf16, #tpu.memory_space<any>>) target(%arg8 : memref<512x128xbf16, #tpu.memory_space<vmem>>) target_semaphore(%8 : memref<!tpu.dma_semaphore, #tpu.memory_space<semaphore_mem>>)
    %c3_i32 = arith.constant 3 : i32
    %c640_i32 = arith.constant 640 : i32
    %c0_i32_5 = arith.constant 0 : i32
    %9 = tpu.memref_slice %arg1[%c640_i32, %c0_i32_5] : memref<1280x512xbf16, #tpu.memory_space<any>> -> memref<128x512xbf16, #tpu.memory_space<any>>
    %10 = tpu.memref_slice %arg12[%c3_i32] : memref<6x!tpu.dma_semaphore, #tpu.memory_space<semaphore_mem>> -> memref<1x!tpu.dma_semaphore, #tpu.memory_space<semaphore_mem>>
    %11 = tpu.memref_squeeze %10 : memref<1x!tpu.dma_semaphore, #tpu.memory_space<semaphore_mem>> -> memref<!tpu.dma_semaphore, #tpu.memory_space<semaphore_mem>>
    tpu.enqueue_dma source(%9 : memref<128x512xbf16, #tpu.memory_space<any>>) target(%arg9 : memref<128x512xbf16, #tpu.memory_space<vmem>>) target_semaphore(%11 : memref<!tpu.dma_semaphore, #tpu.memory_space<semaphore_mem>>)
    %c4_i32 = arith.constant 4 : i32
    %c768_i32 = arith.constant 768 : i32
    %c0_i32_6 = arith.constant 0 : i32
    %12 = tpu.memref_slice %arg1[%c768_i32, %c0_i32_6] : memref<1280x512xbf16, #tpu.memory_space<any>> -> memref<512x512xbf16, #tpu.memory_space<any>>
    %13 = tpu.memref_slice %arg12[%c4_i32] : memref<6x!tpu.dma_semaphore, #tpu.memory_space<semaphore_mem>> -> memref<1x!tpu.dma_semaphore, #tpu.memory_space<semaphore_mem>>
    %14 = tpu.memref_squeeze %13 : memref<1x!tpu.dma_semaphore, #tpu.memory_space<semaphore_mem>> -> memref<!tpu.dma_semaphore, #tpu.memory_space<semaphore_mem>>
    tpu.enqueue_dma source(%12 : memref<512x512xbf16, #tpu.memory_space<any>>) target(%arg10 : memref<512x512xbf16, #tpu.memory_space<vmem>>) target_semaphore(%14 : memref<!tpu.dma_semaphore, #tpu.memory_space<semaphore_mem>>)
    %c5_i32 = arith.constant 5 : i32
    %c512_i32 = arith.constant 512 : i32
    %c0_i32_7 = arith.constant 0 : i32
    %15 = tpu.memref_slice %arg2[%c512_i32, %c0_i32_7] : memref<1024x128xbf16, #tpu.memory_space<any>> -> memref<512x128xbf16, #tpu.memory_space<any>>
    %16 = tpu.memref_slice %arg12[%c5_i32] : memref<6x!tpu.dma_semaphore, #tpu.memory_space<semaphore_mem>> -> memref<1x!tpu.dma_semaphore, #tpu.memory_space<semaphore_mem>>
    %17 = tpu.memref_squeeze %16 : memref<1x!tpu.dma_semaphore, #tpu.memory_space<semaphore_mem>> -> memref<!tpu.dma_semaphore, #tpu.memory_space<semaphore_mem>>
    tpu.enqueue_dma source(%15 : memref<512x128xbf16, #tpu.memory_space<any>>) target(%arg11 : memref<512x128xbf16, #tpu.memory_space<vmem>>) target_semaphore(%17 : memref<!tpu.dma_semaphore, #tpu.memory_space<semaphore_mem>>)
    %c0 = arith.constant 0 : index
    %c0_8 = arith.constant 0 : index
    %18 = vector.load %arg0[%c0, %c0_8] : memref<8x128xbf16, #tpu.memory_space<vmem>>, vector<8x128xbf16>
    %c0_i32_9 = arith.constant 0 : i32
    %c0_i32_10 = arith.constant 0 : i32
    %c0_i32_11 = arith.constant 0 : i32
    %19 = tpu.memref_slice %arg1[%c0_i32_10, %c0_i32_11] : memref<1280x512xbf16, #tpu.memory_space<any>> -> memref<128x512xbf16, #tpu.memory_space<any>>
    %20 = tpu.memref_slice %arg12[%c0_i32_9] : memref<6x!tpu.dma_semaphore, #tpu.memory_space<semaphore_mem>> -> memref<1x!tpu.dma_semaphore, #tpu.memory_space<semaphore_mem>>
    %21 = tpu.memref_squeeze %20 : memref<1x!tpu.dma_semaphore, #tpu.memory_space<semaphore_mem>> -> memref<!tpu.dma_semaphore, #tpu.memory_space<semaphore_mem>>
    tpu.wait_dma2 semaphore(%21 : memref<!tpu.dma_semaphore, #tpu.memory_space<semaphore_mem>>) src(%19 : memref<128x512xbf16, #tpu.memory_space<any>>) dst(%arg6 : memref<128x512xbf16, #tpu.memory_space<vmem>>)
    %c0_12 = arith.constant 0 : index
    %c0_13 = arith.constant 0 : index
    %22 = vector.load %arg6[%c0_12, %c0_13] : memref<128x512xbf16, #tpu.memory_space<vmem>>, vector<128x512xbf16>
    %cst = arith.constant dense<0.000000e+00> : vector<8x512xf32>
    %23 = tpu.matmul %18, %22, %cst {dimension_numbers = #tpu.dot_dimension_numbers<[1], [0], [0], [1], [0, 0, 1, 1], [], []>} : vector<8x128xbf16>, vector<128x512xbf16>, vector<8x512xf32> -> vector<8x512xf32>
    %c0_14 = arith.constant 0 : index
    %c0_15 = arith.constant 0 : index
    %24 = vector.load %arg3[%c0_14, %c0_15] : memref<48x512xf32, #tpu.memory_space<vmem>>, vector<3x512xf32>
    %25 = vector.extract_strided_slice %24 {offsets = [0, 0], sizes = [1, 512], strides = [1, 1]} : vector<3x512xf32> to vector<1x512xf32>
    %26 = vector.broadcast %25 : vector<1x512xf32> to vector<8x512xf32>
    %27 = arith.addf %23, %26 : vector<8x512xf32>
    %cst_16 = arith.constant dense<0.000000e+00> : vector<512xf32>
    %28 = vector.multi_reduction <add>, %27, %cst_16 [0] : vector<8x512xf32> to vector<512xf32>
    %29 = vector.shape_cast %28 : vector<512xf32> to vector<1x512xf32>
    %cst_17 = arith.constant 8.000000e+00 : f32
    %30 = vector.broadcast %cst_17 : f32 to vector<1x512xf32>
    %31 = arith.divf %29, %30 : vector<1x512xf32>
    %32 = vector.broadcast %31 : vector<1x512xf32> to vector<8x512xf32>
    %33 = arith.subf %27, %32 : vector<8x512xf32>
    %34 = arith.mulf %33, %33 : vector<8x512xf32>
    %cst_18 = arith.constant dense<0.000000e+00> : vector<512xf32>
    %35 = vector.multi_reduction <add>, %34, %cst_18 [0] : vector<8x512xf32> to vector<512xf32>
    %36 = vector.shape_cast %35 : vector<512xf32> to vector<1x512xf32>
    %cst_19 = arith.constant 8.000000e+00 : f32
    %37 = vector.broadcast %cst_19 : f32 to vector<1x512xf32>
    %38 = arith.divf %36, %37 : vector<1x512xf32>
    %cst_20 = arith.constant 9.99999974E-6 : f32
    %39 = vector.broadcast %cst_20 : f32 to vector<1x512xf32>
    %40 = arith.addf %38, %39 : vector<1x512xf32>
    %41 = math.rsqrt %40 : vector<1x512xf32>
    %42 = vector.broadcast %41 : vector<1x512xf32> to vector<8x512xf32>
    %43 = arith.mulf %33, %42 : vector<8x512xf32>
    %44 = vector.extract_strided_slice %24 {offsets = [1, 0], sizes = [1, 512], strides = [1, 1]} : vector<3x512xf32> to vector<1x512xf32>
    %45 = vector.broadcast %44 : vector<1x512xf32> to vector<8x512xf32>
    %46 = arith.mulf %43, %45 : vector<8x512xf32>
    %47 = vector.extract_strided_slice %24 {offsets = [2, 0], sizes = [1, 512], strides = [1, 1]} : vector<3x512xf32> to vector<1x512xf32>
    %48 = vector.broadcast %47 : vector<1x512xf32> to vector<8x512xf32>
    %49 = arith.addf %46, %48 : vector<8x512xf32>
    %cst_21 = arith.constant 0.000000e+00 : f32
    %50 = vector.broadcast %cst_21 : f32 to vector<8x512xf32>
    %51 = arith.maximumf %49, %50 : vector<8x512xf32>
    %52 = arith.truncf %51 : vector<8x512xf32> to vector<8x512xbf16>
    %c1_i32_22 = arith.constant 1 : i32
    %c128_i32_23 = arith.constant 128 : i32
    %c0_i32_24 = arith.constant 0 : i32
    %53 = tpu.memref_slice %arg1[%c128_i32_23, %c0_i32_24] : memref<1280x512xbf16, #tpu.memory_space<any>> -> memref<512x512xbf16, #tpu.memory_space<any>>
    %54 = tpu.memref_slice %arg12[%c1_i32_22] : memref<6x!tpu.dma_semaphore, #tpu.memory_space<semaphore_mem>> -> memref<1x!tpu.dma_semaphore, #tpu.memory_space<semaphore_mem>>
    %55 = tpu.memref_squeeze %54 : memref<1x!tpu.dma_semaphore, #tpu.memory_space<semaphore_mem>> -> memref<!tpu.dma_semaphore, #tpu.memory_space<semaphore_mem>>
    tpu.wait_dma2 semaphore(%55 : memref<!tpu.dma_semaphore, #tpu.memory_space<semaphore_mem>>) src(%53 : memref<512x512xbf16, #tpu.memory_space<any>>) dst(%arg7 : memref<512x512xbf16, #tpu.memory_space<vmem>>)
    %c0_25 = arith.constant 0 : index
    %c0_26 = arith.constant 0 : index
    %56 = vector.load %arg7[%c0_25, %c0_26] : memref<512x512xbf16, #tpu.memory_space<vmem>>, vector<512x512xbf16>
    %cst_27 = arith.constant dense<0.000000e+00> : vector<8x512xf32>
    %57 = tpu.matmul %52, %56, %cst_27 {dimension_numbers = #tpu.dot_dimension_numbers<[1], [0], [0], [1], [0, 0, 1, 1], [], []>} : vector<8x512xbf16>, vector<512x512xbf16>, vector<8x512xf32> -> vector<8x512xf32>
    %c8 = arith.constant 8 : index
    %c0_28 = arith.constant 0 : index
    %58 = vector.load %arg3[%c8, %c0_28] : memref<48x512xf32, #tpu.memory_space<vmem>>, vector<3x512xf32>
    %59 = vector.extract_strided_slice %58 {offsets = [0, 0], sizes = [1, 512], strides = [1, 1]} : vector<3x512xf32> to vector<1x512xf32>
    %60 = vector.broadcast %59 : vector<1x512xf32> to vector<8x512xf32>
    %61 = arith.addf %57, %60 : vector<8x512xf32>
    %cst_29 = arith.constant dense<0.000000e+00> : vector<512xf32>
    %62 = vector.multi_reduction <add>, %61, %cst_29 [0] : vector<8x512xf32> to vector<512xf32>
    %63 = vector.shape_cast %62 : vector<512xf32> to vector<1x512xf32>
    %cst_30 = arith.constant 8.000000e+00 : f32
    %64 = vector.broadcast %cst_30 : f32 to vector<1x512xf32>
    %65 = arith.divf %63, %64 : vector<1x512xf32>
    %66 = vector.broadcast %65 : vector<1x512xf32> to vector<8x512xf32>
    %67 = arith.subf %61, %66 : vector<8x512xf32>
    %68 = arith.mulf %67, %67 : vector<8x512xf32>
    %cst_31 = arith.constant dense<0.000000e+00> : vector<512xf32>
    %69 = vector.multi_reduction <add>, %68, %cst_31 [0] : vector<8x512xf32> to vector<512xf32>
    %70 = vector.shape_cast %69 : vector<512xf32> to vector<1x512xf32>
    %cst_32 = arith.constant 8.000000e+00 : f32
    %71 = vector.broadcast %cst_32 : f32 to vector<1x512xf32>
    %72 = arith.divf %70, %71 : vector<1x512xf32>
    %cst_33 = arith.constant 9.99999974E-6 : f32
    %73 = vector.broadcast %cst_33 : f32 to vector<1x512xf32>
    %74 = arith.addf %72, %73 : vector<1x512xf32>
    %75 = math.rsqrt %74 : vector<1x512xf32>
    %76 = vector.broadcast %75 : vector<1x512xf32> to vector<8x512xf32>
    %77 = arith.mulf %67, %76 : vector<8x512xf32>
    %78 = vector.extract_strided_slice %58 {offsets = [1, 0], sizes = [1, 512], strides = [1, 1]} : vector<3x512xf32> to vector<1x512xf32>
    %79 = vector.broadcast %78 : vector<1x512xf32> to vector<8x512xf32>
    %80 = arith.mulf %77, %79 : vector<8x512xf32>
    %81 = vector.extract_strided_slice %58 {offsets = [2, 0], sizes = [1, 512], strides = [1, 1]} : vector<3x512xf32> to vector<1x512xf32>
    %82 = vector.broadcast %81 : vector<1x512xf32> to vector<8x512xf32>
    %83 = arith.addf %80, %82 : vector<8x512xf32>
    %cst_34 = arith.constant 0.000000e+00 : f32
    %84 = vector.broadcast %cst_34 : f32 to vector<8x512xf32>
    %85 = arith.maximumf %83, %84 : vector<8x512xf32>
    %86 = arith.truncf %85 : vector<8x512xf32> to vector<8x512xbf16>
    %c2_i32_35 = arith.constant 2 : i32
    %c0_i32_36 = arith.constant 0 : i32
    %c0_i32_37 = arith.constant 0 : i32
    %87 = tpu.memref_slice %arg2[%c0_i32_36, %c0_i32_37] : memref<1024x128xbf16, #tpu.memory_space<any>> -> memref<512x128xbf16, #tpu.memory_space<any>>
    %88 = tpu.memref_slice %arg12[%c2_i32_35] : memref<6x!tpu.dma_semaphore, #tpu.memory_space<semaphore_mem>> -> memref<1x!tpu.dma_semaphore, #tpu.memory_space<semaphore_mem>>
    %89 = tpu.memref_squeeze %88 : memref<1x!tpu.dma_semaphore, #tpu.memory_space<semaphore_mem>> -> memref<!tpu.dma_semaphore, #tpu.memory_space<semaphore_mem>>
    tpu.wait_dma2 semaphore(%89 : memref<!tpu.dma_semaphore, #tpu.memory_space<semaphore_mem>>) src(%87 : memref<512x128xbf16, #tpu.memory_space<any>>) dst(%arg8 : memref<512x128xbf16, #tpu.memory_space<vmem>>)
    %c0_38 = arith.constant 0 : index
    %c0_39 = arith.constant 0 : index
    %90 = vector.load %arg8[%c0_38, %c0_39] : memref<512x128xbf16, #tpu.memory_space<vmem>>, vector<512x128xbf16>
    %cst_40 = arith.constant dense<0.000000e+00> : vector<8x128xf32>
    %91 = tpu.matmul %86, %90, %cst_40 {dimension_numbers = #tpu.dot_dimension_numbers<[1], [0], [0], [1], [0, 0, 1, 1], [], []>} : vector<8x512xbf16>, vector<512x128xbf16>, vector<8x128xf32> -> vector<8x128xf32>
    %c16 = arith.constant 16 : index
    %c0_41 = arith.constant 0 : index
    %92 = vector.load %arg3[%c16, %c0_41] : memref<48x512xf32, #tpu.memory_space<vmem>>, vector<3x128xf32>
    %93 = vector.extract_strided_slice %92 {offsets = [0, 0], sizes = [1, 128], strides = [1, 1]} : vector<3x128xf32> to vector<1x128xf32>
    %94 = vector.broadcast %93 : vector<1x128xf32> to vector<8x128xf32>
    %95 = arith.addf %91, %94 : vector<8x128xf32>
    %cst_42 = arith.constant dense<0.000000e+00> : vector<128xf32>
    %96 = vector.multi_reduction <add>, %95, %cst_42 [0] : vector<8x128xf32> to vector<128xf32>
    %97 = vector.shape_cast %96 : vector<128xf32> to vector<1x128xf32>
    %cst_43 = arith.constant 8.000000e+00 : f32
    %98 = vector.broadcast %cst_43 : f32 to vector<1x128xf32>
    %99 = arith.divf %97, %98 : vector<1x128xf32>
    %100 = vector.broadcast %99 : vector<1x128xf32> to vector<8x128xf32>
    %101 = arith.subf %95, %100 : vector<8x128xf32>
    %102 = arith.mulf %101, %101 : vector<8x128xf32>
    %cst_44 = arith.constant dense<0.000000e+00> : vector<128xf32>
    %103 = vector.multi_reduction <add>, %102, %cst_44 [0] : vector<8x128xf32> to vector<128xf32>
    %104 = vector.shape_cast %103 : vector<128xf32> to vector<1x128xf32>
    %cst_45 = arith.constant 8.000000e+00 : f32
    %105 = vector.broadcast %cst_45 : f32 to vector<1x128xf32>
    %106 = arith.divf %104, %105 : vector<1x128xf32>
    %cst_46 = arith.constant 9.99999974E-6 : f32
    %107 = vector.broadcast %cst_46 : f32 to vector<1x128xf32>
    %108 = arith.addf %106, %107 : vector<1x128xf32>
    %109 = math.rsqrt %108 : vector<1x128xf32>
    %110 = vector.broadcast %109 : vector<1x128xf32> to vector<8x128xf32>
    %111 = arith.mulf %101, %110 : vector<8x128xf32>
    %112 = vector.extract_strided_slice %92 {offsets = [1, 0], sizes = [1, 128], strides = [1, 1]} : vector<3x128xf32> to vector<1x128xf32>
    %113 = vector.broadcast %112 : vector<1x128xf32> to vector<8x128xf32>
    %114 = arith.mulf %111, %113 : vector<8x128xf32>
    %115 = vector.extract_strided_slice %92 {offsets = [2, 0], sizes = [1, 128], strides = [1, 1]} : vector<3x128xf32> to vector<1x128xf32>
    %116 = vector.broadcast %115 : vector<1x128xf32> to vector<8x128xf32>
    %117 = arith.addf %114, %116 : vector<8x128xf32>
    %cst_47 = arith.constant 5.000000e-01 : f32
    %118 = vector.broadcast %cst_47 : f32 to vector<8x128xf32>
    %119 = arith.mulf %118, %117 : vector<8x128xf32>
    %120 = math.tanh %119 : vector<8x128xf32>
    %cst_48 = arith.constant 5.000000e-01 : f32
    %121 = vector.broadcast %cst_48 : f32 to vector<8x128xf32>
    %122 = arith.mulf %121, %120 : vector<8x128xf32>
    %cst_49 = arith.constant 5.000000e-01 : f32
    %123 = vector.broadcast %cst_49 : f32 to vector<8x128xf32>
    %124 = arith.addf %122, %123 : vector<8x128xf32>
    %c0_50 = arith.constant 0 : index
    %c0_51 = arith.constant 0 : index
    %125 = vector.load %arg4[%c0_50, %c0_51] : memref<8x128xf32, #tpu.memory_space<vmem>>, vector<8x128xf32>
    tpu.vector_store %arg4[%c0_50, %c0_51], %124 {strides = array<i32>} : memref<8x128xf32, #tpu.memory_space<vmem>>, vector<8x128xf32>,
    %126 = arith.truncf %124 : vector<8x128xf32> to vector<8x128xbf16>
    %c3_i32_52 = arith.constant 3 : i32
    %c640_i32_53 = arith.constant 640 : i32
    %c0_i32_54 = arith.constant 0 : i32
    %127 = tpu.memref_slice %arg1[%c640_i32_53, %c0_i32_54] : memref<1280x512xbf16, #tpu.memory_space<any>> -> memref<128x512xbf16, #tpu.memory_space<any>>
    %128 = tpu.memref_slice %arg12[%c3_i32_52] : memref<6x!tpu.dma_semaphore, #tpu.memory_space<semaphore_mem>> -> memref<1x!tpu.dma_semaphore, #tpu.memory_space<semaphore_mem>>
    %129 = tpu.memref_squeeze %128 : memref<1x!tpu.dma_semaphore, #tpu.memory_space<semaphore_mem>> -> memref<!tpu.dma_semaphore, #tpu.memory_space<semaphore_mem>>
    tpu.wait_dma2 semaphore(%129 : memref<!tpu.dma_semaphore, #tpu.memory_space<semaphore_mem>>) src(%127 : memref<128x512xbf16, #tpu.memory_space<any>>) dst(%arg9 : memref<128x512xbf16, #tpu.memory_space<vmem>>)
    %c0_55 = arith.constant 0 : index
    %c0_56 = arith.constant 0 : index
    %130 = vector.load %arg9[%c0_55, %c0_56] : memref<128x512xbf16, #tpu.memory_space<vmem>>, vector<128x512xbf16>
    %cst_57 = arith.constant dense<0.000000e+00> : vector<8x512xf32>
    %131 = tpu.matmul %126, %130, %cst_57 {dimension_numbers = #tpu.dot_dimension_numbers<[1], [0], [0], [1], [0, 0, 1, 1], [], []>} : vector<8x128xbf16>, vector<128x512xbf16>, vector<8x512xf32> -> vector<8x512xf32>
    %c24 = arith.constant 24 : index
    %c0_58 = arith.constant 0 : index
    %132 = vector.load %arg3[%c24, %c0_58] : memref<48x512xf32, #tpu.memory_space<vmem>>, vector<3x512xf32>
    %133 = vector.extract_strided_slice %132 {offsets = [0, 0], sizes = [1, 512], strides = [1, 1]} : vector<3x512xf32> to vector<1x512xf32>
    %134 = vector.broadcast %133 : vector<1x512xf32> to vector<8x512xf32>
    %135 = arith.addf %131, %134 : vector<8x512xf32>
    %cst_59 = arith.constant dense<0.000000e+00> : vector<512xf32>
    %136 = vector.multi_reduction <add>, %135, %cst_59 [0] : vector<8x512xf32> to vector<512xf32>
    %137 = vector.shape_cast %136 : vector<512xf32> to vector<1x512xf32>
    %cst_60 = arith.constant 8.000000e+00 : f32
    %138 = vector.broadcast %cst_60 : f32 to vector<1x512xf32>
    %139 = arith.divf %137, %138 : vector<1x512xf32>
    %140 = vector.broadcast %139 : vector<1x512xf32> to vector<8x512xf32>
    %141 = arith.subf %135, %140 : vector<8x512xf32>
    %142 = arith.mulf %141, %141 : vector<8x512xf32>
    %cst_61 = arith.constant dense<0.000000e+00> : vector<512xf32>
    %143 = vector.multi_reduction <add>, %142, %cst_61 [0] : vector<8x512xf32> to vector<512xf32>
    %144 = vector.shape_cast %143 : vector<512xf32> to vector<1x512xf32>
    %cst_62 = arith.constant 8.000000e+00 : f32
    %145 = vector.broadcast %cst_62 : f32 to vector<1x512xf32>
    %146 = arith.divf %144, %145 : vector<1x512xf32>
    %cst_63 = arith.constant 9.99999974E-6 : f32
    %147 = vector.broadcast %cst_63 : f32 to vector<1x512xf32>
    %148 = arith.addf %146, %147 : vector<1x512xf32>
    %149 = math.rsqrt %148 : vector<1x512xf32>
    %150 = vector.broadcast %149 : vector<1x512xf32> to vector<8x512xf32>
    %151 = arith.mulf %141, %150 : vector<8x512xf32>
    %152 = vector.extract_strided_slice %132 {offsets = [1, 0], sizes = [1, 512], strides = [1, 1]} : vector<3x512xf32> to vector<1x512xf32>
    %153 = vector.broadcast %152 : vector<1x512xf32> to vector<8x512xf32>
    %154 = arith.mulf %151, %153 : vector<8x512xf32>
    %155 = vector.extract_strided_slice %132 {offsets = [2, 0], sizes = [1, 512], strides = [1, 1]} : vector<3x512xf32> to vector<1x512xf32>
    %156 = vector.broadcast %155 : vector<1x512xf32> to vector<8x512xf32>
    %157 = arith.addf %154, %156 : vector<8x512xf32>
    %cst_64 = arith.constant 0.000000e+00 : f32
    %158 = vector.broadcast %cst_64 : f32 to vector<8x512xf32>
    %159 = arith.maximumf %157, %158 : vector<8x512xf32>
    %160 = arith.truncf %159 : vector<8x512xf32> to vector<8x512xbf16>
    %c4_i32_65 = arith.constant 4 : i32
    %c768_i32_66 = arith.constant 768 : i32
    %c0_i32_67 = arith.constant 0 : i32
    %161 = tpu.memref_slice %arg1[%c768_i32_66, %c0_i32_67] : memref<1280x512xbf16, #tpu.memory_space<any>> -> memref<512x512xbf16, #tpu.memory_space<any>>
    %162 = tpu.memref_slice %arg12[%c4_i32_65] : memref<6x!tpu.dma_semaphore, #tpu.memory_space<semaphore_mem>> -> memref<1x!tpu.dma_semaphore, #tpu.memory_space<semaphore_mem>>
    %163 = tpu.memref_squeeze %162 : memref<1x!tpu.dma_semaphore, #tpu.memory_space<semaphore_mem>> -> memref<!tpu.dma_semaphore, #tpu.memory_space<semaphore_mem>>
    tpu.wait_dma2 semaphore(%163 : memref<!tpu.dma_semaphore, #tpu.memory_space<semaphore_mem>>) src(%161 : memref<512x512xbf16, #tpu.memory_space<any>>) dst(%arg10 : memref<512x512xbf16, #tpu.memory_space<vmem>>)
    %c0_68 = arith.constant 0 : index
    %c0_69 = arith.constant 0 : index
    %164 = vector.load %arg10[%c0_68, %c0_69] : memref<512x512xbf16, #tpu.memory_space<vmem>>, vector<512x512xbf16>
    %cst_70 = arith.constant dense<0.000000e+00> : vector<8x512xf32>
    %165 = tpu.matmul %160, %164, %cst_70 {dimension_numbers = #tpu.dot_dimension_numbers<[1], [0], [0], [1], [0, 0, 1, 1], [], []>} : vector<8x512xbf16>, vector<512x512xbf16>, vector<8x512xf32> -> vector<8x512xf32>
    %c32 = arith.constant 32 : index
    %c0_71 = arith.constant 0 : index
    %166 = vector.load %arg3[%c32, %c0_71] : memref<48x512xf32, #tpu.memory_space<vmem>>, vector<3x512xf32>
    %167 = vector.extract_strided_slice %166 {offsets = [0, 0], sizes = [1, 512], strides = [1, 1]} : vector<3x512xf32> to vector<1x512xf32>
    %168 = vector.broadcast %167 : vector<1x512xf32> to vector<8x512xf32>
    %169 = arith.addf %165, %168 : vector<8x512xf32>
    %cst_72 = arith.constant dense<0.000000e+00> : vector<512xf32>
    %170 = vector.multi_reduction <add>, %169, %cst_72 [0] : vector<8x512xf32> to vector<512xf32>
    %171 = vector.shape_cast %170 : vector<512xf32> to vector<1x512xf32>
    %cst_73 = arith.constant 8.000000e+00 : f32
    %172 = vector.broadcast %cst_73 : f32 to vector<1x512xf32>
    %173 = arith.divf %171, %172 : vector<1x512xf32>
    %174 = vector.broadcast %173 : vector<1x512xf32> to vector<8x512xf32>
    %175 = arith.subf %169, %174 : vector<8x512xf32>
    %176 = arith.mulf %175, %175 : vector<8x512xf32>
    %cst_74 = arith.constant dense<0.000000e+00> : vector<512xf32>
    %177 = vector.multi_reduction <add>, %176, %cst_74 [0] : vector<8x512xf32> to vector<512xf32>
    %178 = vector.shape_cast %177 : vector<512xf32> to vector<1x512xf32>
    %cst_75 = arith.constant 8.000000e+00 : f32
    %179 = vector.broadcast %cst_75 : f32 to vector<1x512xf32>
    %180 = arith.divf %178, %179 : vector<1x512xf32>
    %cst_76 = arith.constant 9.99999974E-6 : f32
    %181 = vector.broadcast %cst_76 : f32 to vector<1x512xf32>
    %182 = arith.addf %180, %181 : vector<1x512xf32>
    %183 = math.rsqrt %182 : vector<1x512xf32>
    %184 = vector.broadcast %183 : vector<1x512xf32> to vector<8x512xf32>
    %185 = arith.mulf %175, %184 : vector<8x512xf32>
    %186 = vector.extract_strided_slice %166 {offsets = [1, 0], sizes = [1, 512], strides = [1, 1]} : vector<3x512xf32> to vector<1x512xf32>
    %187 = vector.broadcast %186 : vector<1x512xf32> to vector<8x512xf32>
    %188 = arith.mulf %185, %187 : vector<8x512xf32>
    %189 = vector.extract_strided_slice %166 {offsets = [2, 0], sizes = [1, 512], strides = [1, 1]} : vector<3x512xf32> to vector<1x512xf32>
    %190 = vector.broadcast %189 : vector<1x512xf32> to vector<8x512xf32>
    %191 = arith.addf %188, %190 : vector<8x512xf32>
    %cst_77 = arith.constant 0.000000e+00 : f32
    %192 = vector.broadcast %cst_77 : f32 to vector<8x512xf32>
    %193 = arith.maximumf %191, %192 : vector<8x512xf32>
    %194 = arith.truncf %193 : vector<8x512xf32> to vector<8x512xbf16>
    %c5_i32_78 = arith.constant 5 : i32
    %c512_i32_79 = arith.constant 512 : i32
    %c0_i32_80 = arith.constant 0 : i32
    %195 = tpu.memref_slice %arg2[%c512_i32_79, %c0_i32_80] : memref<1024x128xbf16, #tpu.memory_space<any>> -> memref<512x128xbf16, #tpu.memory_space<any>>
    %196 = tpu.memref_slice %arg12[%c5_i32_78] : memref<6x!tpu.dma_semaphore, #tpu.memory_space<semaphore_mem>> -> memref<1x!tpu.dma_semaphore, #tpu.memory_space<semaphore_mem>>
    %197 = tpu.memref_squeeze %196 : memref<1x!tpu.dma_semaphore, #tpu.memory_space<semaphore_mem>> -> memref<!tpu.dma_semaphore, #tpu.memory_space<semaphore_mem>>
    tpu.wait_dma2 semaphore(%197 : memref<!tpu.dma_semaphore, #tpu.memory_space<semaphore_mem>>) src(%195 : memref<512x128xbf16, #tpu.memory_space<any>>) dst(%arg11 : memref<512x128xbf16, #tpu.memory_space<vmem>>)
    %c0_81 = arith.constant 0 : index
    %c0_82 = arith.constant 0 : index
    %198 = vector.load %arg11[%c0_81, %c0_82] : memref<512x128xbf16, #tpu.memory_space<vmem>>, vector<512x128xbf16>
    %cst_83 = arith.constant dense<0.000000e+00> : vector<8x128xf32>
    %199 = tpu.matmul %194, %198, %cst_83 {dimension_numbers = #tpu.dot_dimension_numbers<[1], [0], [0], [1], [0, 0, 1, 1], [], []>} : vector<8x512xbf16>, vector<512x128xbf16>, vector<8x128xf32> -> vector<8x128xf32>
    %c40 = arith.constant 40 : index
    %c0_84 = arith.constant 0 : index
    %200 = vector.load %arg3[%c40, %c0_84] : memref<48x512xf32, #tpu.memory_space<vmem>>, vector<3x128xf32>
    %201 = vector.extract_strided_slice %200 {offsets = [0, 0], sizes = [1, 128], strides = [1, 1]} : vector<3x128xf32> to vector<1x128xf32>
    %202 = vector.broadcast %201 : vector<1x128xf32> to vector<8x128xf32>
    %203 = arith.addf %199, %202 : vector<8x128xf32>
    %cst_85 = arith.constant dense<0.000000e+00> : vector<128xf32>
    %204 = vector.multi_reduction <add>, %203, %cst_85 [0] : vector<8x128xf32> to vector<128xf32>
    %205 = vector.shape_cast %204 : vector<128xf32> to vector<1x128xf32>
    %cst_86 = arith.constant 8.000000e+00 : f32
    %206 = vector.broadcast %cst_86 : f32 to vector<1x128xf32>
    %207 = arith.divf %205, %206 : vector<1x128xf32>
    %208 = vector.broadcast %207 : vector<1x128xf32> to vector<8x128xf32>
    %209 = arith.subf %203, %208 : vector<8x128xf32>
    %210 = arith.mulf %209, %209 : vector<8x128xf32>
    %cst_87 = arith.constant dense<0.000000e+00> : vector<128xf32>
    %211 = vector.multi_reduction <add>, %210, %cst_87 [0] : vector<8x128xf32> to vector<128xf32>
    %212 = vector.shape_cast %211 : vector<128xf32> to vector<1x128xf32>
    %cst_88 = arith.constant 8.000000e+00 : f32
    %213 = vector.broadcast %cst_88 : f32 to vector<1x128xf32>
    %214 = arith.divf %212, %213 : vector<1x128xf32>
    %cst_89 = arith.constant 9.99999974E-6 : f32
    %215 = vector.broadcast %cst_89 : f32 to vector<1x128xf32>
    %216 = arith.addf %214, %215 : vector<1x128xf32>
    %217 = math.rsqrt %216 : vector<1x128xf32>
    %218 = vector.broadcast %217 : vector<1x128xf32> to vector<8x128xf32>
    %219 = arith.mulf %209, %218 : vector<8x128xf32>
    %220 = vector.extract_strided_slice %200 {offsets = [1, 0], sizes = [1, 128], strides = [1, 1]} : vector<3x128xf32> to vector<1x128xf32>
    %221 = vector.broadcast %220 : vector<1x128xf32> to vector<8x128xf32>
    %222 = arith.mulf %219, %221 : vector<8x128xf32>
    %223 = vector.extract_strided_slice %200 {offsets = [2, 0], sizes = [1, 128], strides = [1, 1]} : vector<3x128xf32> to vector<1x128xf32>
    %224 = vector.broadcast %223 : vector<1x128xf32> to vector<8x128xf32>
    %225 = arith.addf %222, %224 : vector<8x128xf32>
    %cst_90 = arith.constant 5.000000e-01 : f32
    %226 = vector.broadcast %cst_90 : f32 to vector<8x128xf32>
    %227 = arith.mulf %226, %225 : vector<8x128xf32>
    %228 = math.tanh %227 : vector<8x128xf32>
    %cst_91 = arith.constant 5.000000e-01 : f32
    %229 = vector.broadcast %cst_91 : f32 to vector<8x128xf32>
    %230 = arith.mulf %229, %228 : vector<8x128xf32>
    %cst_92 = arith.constant 5.000000e-01 : f32
    %231 = vector.broadcast %cst_92 : f32 to vector<8x128xf32>
    %232 = arith.addf %230, %231 : vector<8x128xf32>
    %c0_93 = arith.constant 0 : index
    %c0_94 = arith.constant 0 : index
    %233 = vector.load %arg5[%c0_93, %c0_94] : memref<8x128xf32, #tpu.memory_space<vmem>>, vector<8x128xf32>
    tpu.vector_store %arg5[%c0_93, %c0_94], %232 {strides = array<i32>} : memref<8x128xf32, #tpu.memory_space<vmem>>, vector<8x128xf32>,
    return
  }
}

</mosaic_0001>

<llo_original>
// kernel: autoencoder_forward.1
$region0: #{autoencoder_forward.1}
  #allocation0 [shape = 'u32[]', space=smem, size = 0x4, offset = 0x4, fixed_abs, tag = 'smem constant byte address 0x4 - core index']
  #allocation1 [shape = 'u32[72,128]{1,0:T(1,128)}', space=vmem, size = 0x9000, scoped, tag = 'internal scratch']
  #allocation2 [shape = 'bf16[128,512]{1,0:T(8,128)(2,1)}', space=vmem, size = 0x20000, scoped, tag = 'scratch operand']
  #allocation3 [shape = 'bf16[512,512]{1,0:T(8,128)(2,1)}', space=vmem, size = 0x80000, scoped, tag = 'scratch operand']
  #allocation4 [shape = 'bf16[512,128]{1,0:T(8,128)(2,1)}', space=vmem, size = 0x20000, scoped, tag = 'scratch operand']
  #allocation5 [shape = 'bf16[128,512]{1,0:T(8,128)(2,1)}', space=vmem, size = 0x20000, scoped, tag = 'scratch operand']
  #allocation6 [shape = 'bf16[512,512]{1,0:T(8,128)(2,1)}', space=vmem, size = 0x80000, scoped, tag = 'scratch operand']
  #allocation7 [shape = 'bf16[512,128]{1,0:T(8,128)(2,1)}', space=vmem, size = 0x20000, scoped, tag = 'scratch operand']
  #allocation8 [shape = 's32[6]{0}', space=sflag, size = 0x18, scoped, tag = 'scratch operand']
  #allocation13 [shape = 's32[]', space=sflag, size = 0x4, offset = 0, fixed_abs, tag = 'sflag constant byte address 0x0 - dummy sync flag']
  #allocation14 [shape = 's32[]', space=sflag, size = 0x4, offset = 0, fixed_abs, tag = 'sflag constant byte address 0x0 - dummy sync flag']
  #allocation15 [shape = 'u32[]', space=smem, size = 0x4, offset = 0x44, fixed_abs, tag = 'smem constant byte address 0x44 - assertion arg 0']
  #allocation16 [shape = 'u32[]', space=smem, size = 0x4, offset = 0x48, fixed_abs, tag = 'smem constant byte address 0x48 - assertion arg 1']
  #allocation17 [shape = 's32[]', space=sflag, size = 0x4, offset = 0, fixed_abs, tag = 'sflag constant byte address 0x0 - dummy sync flag']
  #allocation18 [shape = 's32[]', space=sflag, size = 0x4, offset = 0, fixed_abs, tag = 'sflag constant byte address 0x0 - dummy sync flag']
  #allocation19 [shape = 's32[]', space=sflag, size = 0x4, offset = 0, fixed_abs, tag = 'sflag constant byte address 0x0 - dummy sync flag']
  #allocation20 [shape = 's32[]', space=sflag, size = 0x4, offset = 0, fixed_abs, tag = 'sflag constant byte address 0x0 - dummy sync flag']
  #allocation21 [shape = 's32[]', space=sflag, size = 0x4, offset = 0, fixed_abs, tag = 'sflag constant byte address 0x0 - dummy sync flag']
  #allocation22 [shape = 's32[]', space=sflag, size = 0x4, offset = 0, fixed_abs, tag = 'sflag constant byte address 0x0 - dummy sync flag']
  #allocation23 [shape = 's32[]', space=sflag, size = 0x4, offset = 0, fixed_abs, tag = 'sflag constant byte address 0x0 - dummy sync flag']
  #allocation24 [shape = 's32[]', space=sflag, size = 0x4, offset = 0, fixed_abs, tag = 'sflag constant byte address 0x0 - dummy sync flag']
  #allocation25 [shape = 's32[]', space=sflag, size = 0x4, offset = 0, fixed_abs, tag = 'sflag constant byte address 0x0 - dummy sync flag']
  #allocation26 [shape = 's32[]', space=sflag, size = 0x4, offset = 0, fixed_abs, tag = 'sflag constant byte address 0x0 - dummy sync flag']
  %s0 = inlined_call_operand.vmem [shape: bf16[8,128], index: 0, kind: input, shape index: {}]
  %s1 = inlined_call_operand.hbm [shape: bf16[1280,512], index: 1, kind: input, shape index: {}]
  %s2 = inlined_call_operand.hbm [shape: bf16[1024,128], index: 2, kind: input, shape index: {}]
  %s3 = inlined_call_operand.hbm [shape: f32[48,512], index: 3, kind: input, shape index: {}]
  %s4 = inlined_call_operand.vmem [shape: f32[8,128], index: 4, kind: output, shape index: {0}]
  %s5 = inlined_call_operand.hbm [shape: f32[8,128], index: 5, kind: output, shape index: {1}]
  %6 = xla_tuple %s4, %s5
  %s7 = sld [smem:[#allocation0]]
  $region54: #{autoencoder_forward.1} parent=0
    _
  %s9 = ssub.s32 1, %s7
  %s10 = scalar_select 0, %s9, %s7
  $region1: #{autoencoder_forward.1} parent=0
    #allocation9 [shape = 'u8[98304]{0}', space=vmem, size = 0x18000, scoped, tag = 'input window, operand 3, single buffered']
    #allocation10 [shape = 's32[1]{0}', space=sflag, size = 0x4, scoped, tag = 'scoped memory for autoencoder_forward.1']
    #allocation11 [shape = 's32[1]{0}', space=sflag, size = 0x4, scoped, tag = 'scoped memory for autoencoder_forward.1']
    #allocation12 [shape = 'u8[4096]{0}', space=vmem, size = 0x1000, scoped, tag = 'output window, operand 1, single buffered']
    %11 = vsyncpa [#allocation10], 0
    %12 = vsyncpa [#allocation11], 0
    // Predicated region
    $region2: #{autoencoder_forward.1} parent=1 // pred_check
      _
    $region3: #{autoencoder_forward.1} parent=1 // pred_check_branch
      %14 = sbr.rel (0) target = $region5
    $region4: #{autoencoder_forward.1} parent=1 // pred_region
      _
    $region5: #{autoencoder_forward.1} parent=1 // pred_fallthru
      _
    // Predicated region
    $region6: #{autoencoder_forward.1} parent=1 // pred_check
      _
    $region7: #{autoencoder_forward.1} parent=1 // pred_check_branch
      %16 = sbr.rel (0) target = $region9
    $region8: #{autoencoder_forward.1} parent=1 // pred_region
      %18 = vsyncadd [#allocation10], 0
      %s19 = sshll.u32 %s3, 4
      %s20 = int_to_ptr.hbm [resolvable:$true] %s19
      %s21 = sshll.u32 [#allocation9], 4
      %s22 = int_to_ptr.vmem [resolvable:$true] %s21
      %27 = dma.hbm_to_vmem [thread:$0]  %s20, 3072, %s22, [#allocation10], 512, 512, 32
    $region9: #{autoencoder_forward.1} parent=1 // pred_fallthru
      _
    // Predicated region
    $region10: #{autoencoder_forward.1} parent=1 // pred_check
      _
    $region11: #{autoencoder_forward.1} parent=1 // pred_check_branch
      %29 = sbr.rel (0) target = $region13
    $region12: #{autoencoder_forward.1} parent=1 // pred_region
      %31 = dma.done [#allocation10], 3072
    $region13: #{autoencoder_forward.1} parent=1 // pred_fallthru
      _
    // Predicated region
    $region14: #{autoencoder_forward.1} parent=1 // pred_check
      _
    $region15: #{autoencoder_forward.1} parent=1 // pred_check_branch
      %33 = sbr.rel target = $region17
    $region16: #{autoencoder_forward.1} parent=1 // pred_region
      %34 = sst [smem:[#allocation15]] [#allocation14]
      %35 = sst [smem:[#allocation16]] [#allocation13]
    $region17: #{autoencoder_forward.1} parent=1 // pred_fallthru
      _
    %37 = shalt.err (0)
    %s39 = sshll.u32 %s1, 4
    %s40 = int_to_ptr.hbm [resolvable:$true] %s39
    %s41 = sshll.u32 [#allocation2], 4
    %s42 = int_to_ptr.vmem [resolvable:$true] %s41
    %44 = dma.hbm_to_vmem [thread:$0]  %s40, 4096, %s42, [#allocation8]
    %s45 = scalar_lea.hbm %s1, 256
    %s46 = scalar_lea.sflag [#allocation8], 1
    // Predicated region
    $region18: #{autoencoder_forward.1} parent=1 // pred_check
      _
    $region19: #{autoencoder_forward.1} parent=1 // pred_check_branch
      %48 = sbr.rel target = $region21
    $region20: #{autoencoder_forward.1} parent=1 // pred_region
      %49 = sst [smem:[#allocation15]] [#allocation18]
      %50 = sst [smem:[#allocation16]] [#allocation17]
    $region21: #{autoencoder_forward.1} parent=1 // pred_fallthru
      _
    %52 = shalt.err (0)
    %s54 = sshll.u32 %s45, 4
    %s55 = int_to_ptr.hbm [resolvable:$true] %s54
    %s56 = sshll.u32 [#allocation3], 4
    %s57 = int_to_ptr.vmem [resolvable:$true] %s56
    %59 = dma.hbm_to_vmem [thread:$0]  %s55, 16384, %s57, %s46
    %s60 = scalar_lea.sflag [#allocation8], 2
    // Predicated region
    $region22: #{autoencoder_forward.1} parent=1 // pred_check
      _
    $region23: #{autoencoder_forward.1} parent=1 // pred_check_branch
      %62 = sbr.rel target = $region25
    $region24: #{autoencoder_forward.1} parent=1 // pred_region
      %63 = sst [smem:[#allocation15]] [#allocation20]
      %64 = sst [smem:[#allocation16]] [#allocation19]
    $region25: #{autoencoder_forward.1} parent=1 // pred_fallthru
      _
    %66 = shalt.err (0)
    %s68 = sshll.u32 %s2, 4
    %s69 = int_to_ptr.hbm [resolvable:$true] %s68
    %s70 = sshll.u32 [#allocation4], 4
    %s71 = int_to_ptr.vmem [resolvable:$true] %s70
    %73 = dma.hbm_to_vmem [thread:$0]  %s69, 4096, %s71, %s60
    %s74 = scalar_lea.hbm %s1, 1280
    %s75 = scalar_lea.sflag [#allocation8], 3
    // Predicated region
    $region26: #{autoencoder_forward.1} parent=1 // pred_check
      _
    $region27: #{autoencoder_forward.1} parent=1 // pred_check_branch
      %77 = sbr.rel target = $region29
    $region28: #{autoencoder_forward.1} parent=1 // pred_region
      %78 = sst [smem:[#allocation15]] [#allocation22]
      %79 = sst [smem:[#allocation16]] [#allocation21]
    $region29: #{autoencoder_forward.1} parent=1 // pred_fallthru
      _
    %81 = shalt.err (0)
    %s83 = sshll.u32 %s74, 4
    %s84 = int_to_ptr.hbm [resolvable:$true] %s83
    %s85 = sshll.u32 [#allocation5], 4
    %s86 = int_to_ptr.vmem [resolvable:$true] %s85
    %88 = dma.hbm_to_vmem [thread:$0]  %s84, 4096, %s86, %s75
    %s89 = scalar_lea.hbm %s1, 1536
    %s90 = scalar_lea.sflag [#allocation8], 4
    // Predicated region
    $region30: #{autoencoder_forward.1} parent=1 // pred_check
      _
    $region31: #{autoencoder_forward.1} parent=1 // pred_check_branch
      %92 = sbr.rel target = $region33
    $region32: #{autoencoder_forward.1} parent=1 // pred_region
      %93 = sst [smem:[#allocation15]] [#allocation24]
      %94 = sst [smem:[#allocation16]] [#allocation23]
    $region33: #{autoencoder_forward.1} parent=1 // pred_fallthru
      _
    %96 = shalt.err (0)
    %s98 = sshll.u32 %s89, 4
    %s99 = int_to_ptr.hbm [resolvable:$true] %s98
    %s100 = sshll.u32 [#allocation6], 4
    %s101 = int_to_ptr.vmem [resolvable:$true] %s100
    %103 = dma.hbm_to_vmem [thread:$0]  %s99, 16384, %s101, %s90
    %s104 = scalar_lea.hbm %s2, 256
    %s105 = scalar_lea.sflag [#allocation8], 5
    // Predicated region
    $region34: #{autoencoder_forward.1} parent=1 // pred_check
      _
    $region35: #{autoencoder_forward.1} parent=1 // pred_check_branch
      %107 = sbr.rel target = $region37
    $region36: #{autoencoder_forward.1} parent=1 // pred_region
      %108 = sst [smem:[#allocation15]] [#allocation26]
      %109 = sst [smem:[#allocation16]] [#allocation25]
    $region37: #{autoencoder_forward.1} parent=1 // pred_fallthru
      _
    %111 = shalt.err (0)
    %s113 = sshll.u32 %s104, 4
    %s114 = int_to_ptr.hbm [resolvable:$true] %s113
    %s115 = sshll.u32 [#allocation7], 4
    %s116 = int_to_ptr.vmem [resolvable:$true] %s115
    %118 = dma.hbm_to_vmem [thread:$0]  %s114, 4096, %s116, %s105
    %v119 = vld [vmem:[%s0] sm:$0xf]
    %s120 = smul.u32 4, 16
    %s121 = smul.u32 %s120, 4
    %s122 = sshll.u32 %s121, 4
    %123 = dma.done [#allocation8], %s122
    %v124 = vld [vmem:[#allocation2] sm:$0xff]
    %v125 = vld [vmem:[#allocation2 + $0x8] sm:$0xff]
    %v126 = vld [vmem:[#allocation2 + $0x10] sm:$0xff]
    %v127 = vld [vmem:[#allocation2 + $0x18] sm:$0xff]
    %v128 = vld [vmem:[#allocation2 + $0x20] sm:$0xff]
    %v129 = vld [vmem:[#allocation2 + $0x28] sm:$0xff]
    %v130 = vld [vmem:[#allocation2 + $0x30] sm:$0xff]
    %v131 = vld [vmem:[#allocation2 + $0x38] sm:$0xff]
    %v132 = vld [vmem:[#allocation2 + $0x40] sm:$0xff]
    %v133 = vld [vmem:[#allocation2 + $0x48] sm:$0xff]
    %v134 = vld [vmem:[#allocation2 + $0x50] sm:$0xff]
    %v135 = vld [vmem:[#allocation2 + $0x58] sm:$0xff]
    %v136 = vld [vmem:[#allocation2 + $0x60] sm:$0xff]
    %v137 = vld [vmem:[#allocation2 + $0x68] sm:$0xff]
    %v138 = vld [vmem:[#allocation2 + $0x70] sm:$0xff]
    %v139 = vld [vmem:[#allocation2 + $0x78] sm:$0xff]
    %v140 = vld [vmem:[#allocation2 + $0x80] sm:$0xff]
    %v141 = vld [vmem:[#allocation2 + $0x88] sm:$0xff]
    %v142 = vld [vmem:[#allocation2 + $0x90] sm:$0xff]
    %v143 = vld [vmem:[#allocation2 + $0x98] sm:$0xff]
    %v144 = vld [vmem:[#allocation2 + $0xa0] sm:$0xff]
    %v145 = vld [vmem:[#allocation2 + $0xa8] sm:$0xff]
    %v146 = vld [vmem:[#allocation2 + $0xb0] sm:$0xff]
    %v147 = vld [vmem:[#allocation2 + $0xb8] sm:$0xff]
    %v148 = vld [vmem:[#allocation2 + $0xc0] sm:$0xff]
    %v149 = vld [vmem:[#allocation2 + $0xc8] sm:$0xff]
    %v150 = vld [vmem:[#allocation2 + $0xd0] sm:$0xff]
    %v151 = vld [vmem:[#allocation2 + $0xd8] sm:$0xff]
    %v152 = vld [vmem:[#allocation2 + $0xe0] sm:$0xff]
    %v153 = vld [vmem:[#allocation2 + $0xe8] sm:$0xff]
    %v154 = vld [vmem:[#allocation2 + $0xf0] sm:$0xff]
    %v155 = vld [vmem:[#allocation2 + $0xf8] sm:$0xff]
    %v156 = vld [vmem:[#allocation9] sm:$0x7]
    %v157 = vld [vmem:[#allocation9 + $0x8] sm:$0x7]
    %v158 = vld [vmem:[#allocation9 + $0x10] sm:$0x7]
    %v159 = vld [vmem:[#allocation9 + $0x18] sm:$0x7]
    %v160 = vperm.slane %v156, 0
    %v161 = vperm.slane %v157, 0
    %v162 = vperm.slane %v158, 0
    %v163 = vperm.slane %v159, 0
    %v196 = vunpack.c.l.b16 %v124
    %v197 = vunpack.c.h.b16 %v124
    %v198 = vunpack.c.l.b16 %v125
    %v199 = vunpack.c.h.b16 %v125
    %v200 = vunpack.c.l.b16 %v126
    %v201 = vunpack.c.h.b16 %v126
    %v202 = vunpack.c.l.b16 %v127
    %v203 = vunpack.c.h.b16 %v127
    %v204 = vunpack.c.l.b16 %v128
    %v205 = vunpack.c.h.b16 %v128
    %v206 = vunpack.c.l.b16 %v129
    %v207 = vunpack.c.h.b16 %v129
    %v208 = vunpack.c.l.b16 %v130
    %v209 = vunpack.c.h.b16 %v130
    %v210 = vunpack.c.l.b16 %v131
    %v211 = vunpack.c.h.b16 %v131
    %v212 = vunpack.c.l.b16 %v132
    %v213 = vunpack.c.h.b16 %v132
    %v214 = vunpack.c.l.b16 %v133
    %v215 = vunpack.c.h.b16 %v133
    %v216 = vunpack.c.l.b16 %v134
    %v217 = vunpack.c.h.b16 %v134
    %v218 = vunpack.c.l.b16 %v135
    %v219 = vunpack.c.h.b16 %v135
    %v220 = vunpack.c.l.b16 %v136
    %v221 = vunpack.c.h.b16 %v136
    %v222 = vunpack.c.l.b16 %v137
    %v223 = vunpack.c.h.b16 %v137
    %v224 = vunpack.c.l.b16 %v138
    %v225 = vunpack.c.h.b16 %v138
    %v226 = vunpack.c.l.b16 %v139
    %v227 = vunpack.c.h.b16 %v139
    %v228 = vunpack.c.l.b16 %v140
    %v229 = vunpack.c.h.b16 %v140
    %v230 = vunpack.c.l.b16 %v141
    %v231 = vunpack.c.h.b16 %v141
    %v232 = vunpack.c.l.b16 %v142
    %v233 = vunpack.c.h.b16 %v142
    %v234 = vunpack.c.l.b16 %v143
    %v235 = vunpack.c.h.b16 %v143
    %v236 = vunpack.c.l.b16 %v144
    %v237 = vunpack.c.h.b16 %v144
    %v238 = vunpack.c.l.b16 %v145
    %v239 = vunpack.c.h.b16 %v145
    %v240 = vunpack.c.l.b16 %v146
    %v241 = vunpack.c.h.b16 %v146
    %v242 = vunpack.c.l.b16 %v147
    %v243 = vunpack.c.h.b16 %v147
    %v244 = vunpack.c.l.b16 %v148
    %v245 = vunpack.c.h.b16 %v148
    %v246 = vunpack.c.l.b16 %v149
    %v247 = vunpack.c.h.b16 %v149
    %v248 = vunpack.c.l.b16 %v150
    %v249 = vunpack.c.h.b16 %v150
    %v250 = vunpack.c.l.b16 %v151
    %v251 = vunpack.c.h.b16 %v151
    %v252 = vunpack.c.l.b16 %v152
    %v253 = vunpack.c.h.b16 %v152
    %v254 = vunpack.c.l.b16 %v153
    %v255 = vunpack.c.h.b16 %v153
    %v256 = vunpack.c.l.b16 %v154
    %v257 = vunpack.c.h.b16 %v154
    %v258 = vunpack.c.l.b16 %v155
    %v259 = vunpack.c.h.b16 %v155
    %v260 = vpack.c.b16 %v200, %v196
    %v261 = vpack.c.b16 %v201, %v197
    %v262 = vpack.c.b16 %v202, %v198
    %v263 = vpack.c.b16 %v203, %v199
    %v264 = vpack.c.b16 %v208, %v204
    %v265 = vpack.c.b16 %v209, %v205
    %v266 = vpack.c.b16 %v210, %v206
    %v267 = vpack.c.b16 %v211, %v207
    %v268 = vpack.c.b16 %v216, %v212
    %v269 = vpack.c.b16 %v217, %v213
    %v270 = vpack.c.b16 %v218, %v214
    %v271 = vpack.c.b16 %v219, %v215
    %v272 = vpack.c.b16 %v224, %v220
    %v273 = vpack.c.b16 %v225, %v221
    %v274 = vpack.c.b16 %v226, %v222
    %v275 = vpack.c.b16 %v227, %v223
    %v276 = vpack.c.b16 %v232, %v228
    %v277 = vpack.c.b16 %v233, %v229
    %v278 = vpack.c.b16 %v234, %v230
    %v279 = vpack.c.b16 %v235, %v231
    %v280 = vpack.c.b16 %v240, %v236
    %v281 = vpack.c.b16 %v241, %v237
    %v282 = vpack.c.b16 %v242, %v238
    %v283 = vpack.c.b16 %v243, %v239
    %v284 = vpack.c.b16 %v248, %v244
    %v285 = vpack.c.b16 %v249, %v245
    %v286 = vpack.c.b16 %v250, %v246
    %v287 = vpack.c.b16 %v251, %v247
    %v288 = vpack.c.b16 %v256, %v252
    %v289 = vpack.c.b16 %v257, %v253
    %v290 = vpack.c.b16 %v258, %v254
    %v291 = vpack.c.b16 %v259, %v255
    %324 = vmatpush.bf16.msra.mxu0 %v288
    %325 = vmatpush.bf16.msra.mxu0 %v284
    %326 = vmatpush.bf16.msra.mxu0 %v280
    %327 = vmatpush.bf16.msra.mxu0 %v276
    %328 = vmatpush.bf16.msra.mxu0 %v272
    %329 = vmatpush.bf16.msra.mxu0 %v268
    %330 = vmatpush.bf16.msra.mxu0 %v264
    %331 = vmatpush.bf16.msra.mxu0 %v260
    %332 = vmatmul.bf16.gmra.mxu0 %v119
    %v333 = vpop.f32.mrf.mxu0
    %v334 = vadd.f32 %v160, %v333
    %v335 = vpop.f32.mrf.mxu0
    %336 = vdwg.mxu0
    %337 = vmatpush.bf16.msra.mxu0 %v289
    %338 = vmatpush.bf16.msra.mxu0 %v285
    %339 = vmatpush.bf16.msra.mxu0 %v281
    %340 = vmatpush.bf16.msra.mxu0 %v277
    %341 = vmatpush.bf16.msra.mxu0 %v273
    %342 = vmatpush.bf16.msra.mxu0 %v269
    %343 = vmatpush.bf16.msra.mxu0 %v265
    %344 = vmatpush.bf16.msra.mxu0 %v261
    %345 = vmatmul.bf16.gmra.mxu0 %v119
    %v346 = vpop.f32.mrf.mxu0
    %v347 = vadd.f32 %v161, %v346
    %v348 = vpop.f32.mrf.mxu0
    %349 = vdwg.mxu0
    %350 = vmatpush.bf16.msra.mxu0 %v290
    %351 = vmatpush.bf16.msra.mxu0 %v286
    %352 = vmatpush.bf16.msra.mxu0 %v282
    %353 = vmatpush.bf16.msra.mxu0 %v278
    %354 = vmatpush.bf16.msra.mxu0 %v274
    %355 = vmatpush.bf16.msra.mxu0 %v270
    %356 = vmatpush.bf16.msra.mxu0 %v266
    %357 = vmatpush.bf16.msra.mxu0 %v262
    %358 = vmatmul.bf16.gmra.mxu0 %v119
    %v359 = vpop.f32.mrf.mxu0
    %v360 = vadd.f32 %v162, %v359
    %v361 = vpop.f32.mrf.mxu0
    %362 = vdwg.mxu0
    %363 = vmatpush.bf16.msra.mxu0 %v291
    %364 = vmatpush.bf16.msra.mxu0 %v287
    %365 = vmatpush.bf16.msra.mxu0 %v283
    %366 = vmatpush.bf16.msra.mxu0 %v279
    %367 = vmatpush.bf16.msra.mxu0 %v275
    %368 = vmatpush.bf16.msra.mxu0 %v271
    %369 = vmatpush.bf16.msra.mxu0 %v267
    %370 = vmatpush.bf16.msra.mxu0 %v263
    %371 = vmatmul.bf16.gmra.mxu0 %v119
    %v372 = vpop.f32.mrf.mxu0
    %v373 = vadd.f32 %v163, %v372
    %v374 = vpop.f32.mrf.mxu0
    %375 = vdwg.mxu0
    %v376 = vrot.slane %v334, 4
    %v377 = vadd.f32 %v334, %v376
    %v378 = vrot.slane %v377, 2
    %v379 = vadd.f32 %v377, %v378
    %v380 = vrot.slane %v379, 1
    %v381 = vadd.f32 %v379, %v380
    %v382 = vrot.slane %v347, 4
    %v383 = vadd.f32 %v347, %v382
    %v384 = vrot.slane %v383, 2
    %v385 = vadd.f32 %v383, %v384
    %v386 = vrot.slane %v385, 1
    %v387 = vadd.f32 %v385, %v386
    %v388 = vrot.slane %v360, 4
    %v389 = vadd.f32 %v360, %v388
    %v390 = vrot.slane %v389, 2
    %v391 = vadd.f32 %v389, %v390
    %v392 = vrot.slane %v391, 1
    %v393 = vadd.f32 %v391, %v392
    %v394 = vrot.slane %v373, 4
    %v395 = vadd.f32 %v373, %v394
    %v396 = vrot.slane %v395, 2
    %v397 = vadd.f32 %v395, %v396
    %v398 = vrot.slane %v397, 1
    %v399 = vadd.f32 %v397, %v398
    %v400 = vrcp.pop 8.0
    %v401 = vmul.f32 8.0, %v400
    %v402 = vsub.f32 1.0, %v401
    %v403 = vmul.f32 %v400, %v402
    %v404 = vadd.f32 %v400, %v403
    %vm405 = vweird.f32 %v400
    %v406 = vsel %vm405, %v400, %v404
    %v407 = vmul.f32 %v381, %v406
    %v408 = vmul.f32 %v387, %v406
    %v409 = vmul.f32 %v393, %v406
    %v410 = vmul.f32 %v399, %v406
    %v411 = vsub.f32 %v334, %v407
    %v412 = vsub.f32 %v347, %v408
    %v413 = vsub.f32 %v360, %v409
    %v414 = vsub.f32 %v373, %v410
    %v415 = vmul.f32 %v411, %v411
    %v416 = vmul.f32 %v412, %v412
    %v417 = vmul.f32 %v413, %v413
    %v418 = vmul.f32 %v414, %v414
    %v419 = vrot.slane %v415, 4
    %v420 = vadd.f32 %v415, %v419
    %v421 = vrot.slane %v420, 2
    %v422 = vadd.f32 %v420, %v421
    %v423 = vrot.slane %v422, 1
    %v424 = vadd.f32 %v422, %v423
    %v425 = vrot.slane %v416, 4
    %v426 = vadd.f32 %v416, %v425
    %v427 = vrot.slane %v426, 2
    %v428 = vadd.f32 %v426, %v427
    %v429 = vrot.slane %v428, 1
    %v430 = vadd.f32 %v428, %v429
    %v431 = vrot.slane %v417, 4
    %v432 = vadd.f32 %v417, %v431
    %v433 = vrot.slane %v432, 2
    %v434 = vadd.f32 %v432, %v433
    %v435 = vrot.slane %v434, 1
    %v436 = vadd.f32 %v434, %v435
    %v437 = vrot.slane %v418, 4
    %v438 = vadd.f32 %v418, %v437
    %v439 = vrot.slane %v438, 2
    %v440 = vadd.f32 %v438, %v439
    %v441 = vrot.slane %v440, 1
    %v442 = vadd.f32 %v440, %v441
    %v443 = vmul.f32 %v424, %v406
    %v444 = vmul.f32 %v430, %v406
    %v445 = vmul.f32 %v436, %v406
    %v446 = vmul.f32 %v442, %v406
    %v447 = vadd.f32 %v443, 1e-05
    %v448 = vadd.f32 %v444, 1e-05
    %v449 = vadd.f32 %v445, 1e-05
    %v450 = vadd.f32 %v446, 1e-05
    %v451 = vrsqrt.pop %v447
    %v452 = vmul.f32 %v451, %v447
    %v453 = vmul.f32 %v452, %v451
    %v454 = vmul.f32 0.5, %v453
    %v455 = vsub.f32 1.5, %v454
    %v456 = vmul.f32 %v451, %v455
    %vm457 = vweird.f32 %v447
    %vm458 = vweird.f32 %v451
    %vm459 = vmor %vm457, %vm458
    %v460 = vsel %vm459, %v451, %v456
    %v461 = vrsqrt.pop %v448
    %v462 = vmul.f32 %v461, %v448
    %v463 = vmul.f32 %v462, %v461
    %v464 = vmul.f32 0.5, %v463
    %v465 = vsub.f32 1.5, %v464
    %v466 = vmul.f32 %v461, %v465
    %vm467 = vweird.f32 %v448
    %vm468 = vweird.f32 %v461
    %vm469 = vmor %vm467, %vm468
    %v470 = vsel %vm469, %v461, %v466
    %v471 = vrsqrt.pop %v449
    %v472 = vmul.f32 %v471, %v449
    %v473 = vmul.f32 %v472, %v471
    %v474 = vmul.f32 0.5, %v473
    %v475 = vsub.f32 1.5, %v474
    %v476 = vmul.f32 %v471, %v475
    %vm477 = vweird.f32 %v449
    %vm478 = vweird.f32 %v471
    %vm479 = vmor %vm477, %vm478
    %v480 = vsel %vm479, %v471, %v476
    %v481 = vrsqrt.pop %v450
    %v482 = vmul.f32 %v481, %v450
    %v483 = vmul.f32 %v482, %v481
    %v484 = vmul.f32 0.5, %v483
    %v485 = vsub.f32 1.5, %v484
    %v486 = vmul.f32 %v481, %v485
    %vm487 = vweird.f32 %v450
    %vm488 = vweird.f32 %v481
    %vm489 = vmor %vm487, %vm488
    %v490 = vsel %vm489, %v481, %v486
    %v491 = vmul.f32 %v411, %v460
    %v492 = vmul.f32 %v412, %v470
    %v493 = vmul.f32 %v413, %v480
    %v494 = vmul.f32 %v414, %v490
    %v495 = vperm.slane %v156, 1
    %v496 = vperm.slane %v157, 1
    %v497 = vperm.slane %v158, 1
    %v498 = vperm.slane %v159, 1
    %v499 = vmul.f32 %v491, %v495
    %v500 = vmul.f32 %v492, %v496
    %v501 = vmul.f32 %v493, %v497
    %v502 = vmul.f32 %v494, %v498
    %v503 = vperm.slane %v156, 2
    %v504 = vperm.slane %v157, 2
    %v505 = vperm.slane %v158, 2
    %v506 = vperm.slane %v159, 2
    %v507 = vadd.f32 %v499, %v503
    %v508 = vadd.f32 %v500, %v504
    %v509 = vadd.f32 %v501, %v505
    %v510 = vadd.f32 %v502, %v506
    %v511 = vmax.f32 %v507, 0.0
    %v512 = vmax.f32 %v508, 0.0
    %v513 = vmax.f32 %v509, 0.0
    %v514 = vmax.f32 %v510, 0.0
    %v515 = vpack.c.bf16 %v511, %v511
    %v516 = vpack.c.bf16 %v512, %v512
    %v517 = vpack.c.bf16 %v513, %v513
    %v518 = vpack.c.bf16 %v514, %v514
    %s519 = smul.u32 4, 64
    %s520 = smul.u32 %s519, 4
    %s521 = sshll.u32 %s520, 4
    %522 = dma.done %s46, %s521
    %v523 = vld [vmem:[#allocation3] sm:$0xff]
    %v524 = vld [vmem:[#allocation3 + $0x8] sm:$0xff]
    %v525 = vld [vmem:[#allocation3 + $0x10] sm:$0xff]
    %v526 = vld [vmem:[#allocation3 + $0x18] sm:$0xff]
    %v527 = vld [vmem:[#allocation3 + $0x20] sm:$0xff]
    %v528 = vld [vmem:[#allocation3 + $0x28] sm:$0xff]
    %v529 = vld [vmem:[#allocation3 + $0x30] sm:$0xff]
    %v530 = vld [vmem:[#allocation3 + $0x38] sm:$0xff]
    %v531 = vld [vmem:[#allocation3 + $0x40] sm:$0xff]
    %v532 = vld [vmem:[#allocation3 + $0x48] sm:$0xff]
    %v533 = vld [vmem:[#allocation3 + $0x50] sm:$0xff]
    %v534 = vld [vmem:[#allocation3 + $0x58] sm:$0xff]
    %v535 = vld [vmem:[#allocation3 + $0x60] sm:$0xff]
    %v536 = vld [vmem:[#allocation3 + $0x68] sm:$0xff]
    %v537 = vld [vmem:[#allocation3 + $0x70] sm:$0xff]
    %v538 = vld [vmem:[#allocation3 + $0x78] sm:$0xff]
    %v539 = vld [vmem:[#allocation3 + $0x80] sm:$0xff]
    %v540 = vld [vmem:[#allocation3 + $0x88] sm:$0xff]
    %v541 = vld [vmem:[#allocation3 + $0x90] sm:$0xff]
    %v542 = vld [vmem:[#allocation3 + $0x98] sm:$0xff]
    %v543 = vld [vmem:[#allocation3 + $0xa0] sm:$0xff]
    %v544 = vld [vmem:[#allocation3 + $0xa8] sm:$0xff]
    %v545 = vld [vmem:[#allocation3 + $0xb0] sm:$0xff]
    %v546 = vld [vmem:[#allocation3 + $0xb8] sm:$0xff]
    %v547 = vld [vmem:[#allocation3 + $0xc0] sm:$0xff]
    %v548 = vld [vmem:[#allocation3 + $0xc8] sm:$0xff]
    %v549 = vld [vmem:[#allocation3 + $0xd0] sm:$0xff]
    %v550 = vld [vmem:[#allocation3 + $0xd8] sm:$0xff]
    %v551 = vld [vmem:[#allocation3 + $0xe0] sm:$0xff]
    %v552 = vld [vmem:[#allocation3 + $0xe8] sm:$0xff]
    %v553 = vld [vmem:[#allocation3 + $0xf0] sm:$0xff]
    %v554 = vld [vmem:[#allocation3 + $0xf8] sm:$0xff]
    %v555 = vld [vmem:[#allocation3 + $0x100] sm:$0xff]
    %v556 = vld [vmem:[#allocation3 + $0x108] sm:$0xff]
    %v557 = vld [vmem:[#allocation3 + $0x110] sm:$0xff]
    %v558 = vld [vmem:[#allocation3 + $0x118] sm:$0xff]
    %v559 = vld [vmem:[#allocation3 + $0x120] sm:$0xff]
    %v560 = vld [vmem:[#allocation3 + $0x128] sm:$0xff]
    %v561 = vld [vmem:[#allocation3 + $0x130] sm:$0xff]
    %v562 = vld [vmem:[#allocation3 + $0x138] sm:$0xff]
    %v563 = vld [vmem:[#allocation3 + $0x140] sm:$0xff]
    %v564 = vld [vmem:[#allocation3 + $0x148] sm:$0xff]
    %v565 = vld [vmem:[#allocation3 + $0x150] sm:$0xff]
    %v566 = vld [vmem:[#allocation3 + $0x158] sm:$0xff]
    %v567 = vld [vmem:[#allocation3 + $0x160] sm:$0xff]
    %v568 = vld [vmem:[#allocation3 + $0x168] sm:$0xff]
    %v569 = vld [vmem:[#allocation3 + $0x170] sm:$0xff]
    %v570 = vld [vmem:[#allocation3 + $0x178] sm:$0xff]
    %v571 = vld [vmem:[#allocation3 + $0x180] sm:$0xff]
    %v572 = vld [vmem:[#allocation3 + $0x188] sm:$0xff]
    %v573 = vld [vmem:[#allocation3 + $0x190] sm:$0xff]
    %v574 = vld [vmem:[#allocation3 + $0x198] sm:$0xff]
    %v575 = vld [vmem:[#allocation3 + $0x1a0] sm:$0xff]
    %v576 = vld [vmem:[#allocation3 + $0x1a8] sm:$0xff]
    %v577 = vld [vmem:[#allocation3 + $0x1b0] sm:$0xff]
    %v578 = vld [vmem:[#allocation3 + $0x1b8] sm:$0xff]
    %v579 = vld [vmem:[#allocation3 + $0x1c0] sm:$0xff]
    %v580 = vld [vmem:[#allocation3 + $0x1c8] sm:$0xff]
    %v581 = vld [vmem:[#allocation3 + $0x1d0] sm:$0xff]
    %v582 = vld [vmem:[#allocation3 + $0x1d8] sm:$0xff]
    %v583 = vld [vmem:[#allocation3 + $0x1e0] sm:$0xff]
    %v584 = vld [vmem:[#allocation3 + $0x1e8] sm:$0xff]
    %v585 = vld [vmem:[#allocation3 + $0x1f0] sm:$0xff]
    %v586 = vld [vmem:[#allocation3 + $0x1f8] sm:$0xff]
    %v587 = vld [vmem:[#allocation3 + $0x200] sm:$0xff]
    %v588 = vld [vmem:[#allocation3 + $0x208] sm:$0xff]
    %v589 = vld [vmem:[#allocation3 + $0x210] sm:$0xff]
    %v590 = vld [vmem:[#allocation3 + $0x218] sm:$0xff]
    %v591 = vld [vmem:[#allocation3 + $0x220] sm:$0xff]
    %v592 = vld [vmem:[#allocation3 + $0x228] sm:$0xff]
    %v593 = vld [vmem:[#allocation3 + $0x230] sm:$0xff]
    %v594 = vld [vmem:[#allocation3 + $0x238] sm:$0xff]
    %v595 = vld [vmem:[#allocation3 + $0x240] sm:$0xff]
    %v596 = vld [vmem:[#allocation3 + $0x248] sm:$0xff]
    %v597 = vld [vmem:[#allocation3 + $0x250] sm:$0xff]
    %v598 = vld [vmem:[#allocation3 + $0x258] sm:$0xff]
    %v599 = vld [vmem:[#allocation3 + $0x260] sm:$0xff]
    %v600 = vld [vmem:[#allocation3 + $0x268] sm:$0xff]
    %v601 = vld [vmem:[#allocation3 + $0x270] sm:$0xff]
    %v602 = vld [vmem:[#allocation3 + $0x278] sm:$0xff]
    %v603 = vld [vmem:[#allocation3 + $0x280] sm:$0xff]
    %v604 = vld [vmem:[#allocation3 + $0x288] sm:$0xff]
    %v605 = vld [vmem:[#allocation3 + $0x290] sm:$0xff]
    %v606 = vld [vmem:[#allocation3 + $0x298] sm:$0xff]
    %v607 = vld [vmem:[#allocation3 + $0x2a0] sm:$0xff]
    %v608 = vld [vmem:[#allocation3 + $0x2a8] sm:$0xff]
    %v609 = vld [vmem:[#allocation3 + $0x2b0] sm:$0xff]
    %v610 = vld [vmem:[#allocation3 + $0x2b8] sm:$0xff]
    %v611 = vld [vmem:[#allocation3 + $0x2c0] sm:$0xff]
    %v612 = vld [vmem:[#allocation3 + $0x2c8] sm:$0xff]
    %v613 = vld [vmem:[#allocation3 + $0x2d0] sm:$0xff]
    %v614 = vld [vmem:[#allocation3 + $0x2d8] sm:$0xff]
    %v615 = vld [vmem:[#allocation3 + $0x2e0] sm:$0xff]
    %v616 = vld [vmem:[#allocation3 + $0x2e8] sm:$0xff]
    %v617 = vld [vmem:[#allocation3 + $0x2f0] sm:$0xff]
    %v618 = vld [vmem:[#allocation3 + $0x2f8] sm:$0xff]
    %v619 = vld [vmem:[#allocation3 + $0x300] sm:$0xff]
    %v620 = vld [vmem:[#allocation3 + $0x308] sm:$0xff]
    %v621 = vld [vmem:[#allocation3 + $0x310] sm:$0xff]
    %v622 = vld [vmem:[#allocation3 + $0x318] sm:$0xff]
    %v623 = vld [vmem:[#allocation3 + $0x320] sm:$0xff]
    %v624 = vld [vmem:[#allocation3 + $0x328] sm:$0xff]
    %v625 = vld [vmem:[#allocation3 + $0x330] sm:$0xff]
    %v626 = vld [vmem:[#allocation3 + $0x338] sm:$0xff]
    %v627 = vld [vmem:[#allocation3 + $0x340] sm:$0xff]
    %v628 = vld [vmem:[#allocation3 + $0x348] sm:$0xff]
    %v629 = vld [vmem:[#allocation3 + $0x350] sm:$0xff]
    %v630 = vld [vmem:[#allocation3 + $0x358] sm:$0xff]
    %v631 = vld [vmem:[#allocation3 + $0x360] sm:$0xff]
    %v632 = vld [vmem:[#allocation3 + $0x368] sm:$0xff]
    %v633 = vld [vmem:[#allocation3 + $0x370] sm:$0xff]
    %v634 = vld [vmem:[#allocation3 + $0x378] sm:$0xff]
    %v635 = vld [vmem:[#allocation3 + $0x380] sm:$0xff]
    %v636 = vld [vmem:[#allocation3 + $0x388] sm:$0xff]
    %v637 = vld [vmem:[#allocation3 + $0x390] sm:$0xff]
    %v638 = vld [vmem:[#allocation3 + $0x398] sm:$0xff]
    %v639 = vld [vmem:[#allocation3 + $0x3a0] sm:$0xff]
    %v640 = vld [vmem:[#allocation3 + $0x3a8] sm:$0xff]
    %v641 = vld [vmem:[#allocation3 + $0x3b0] sm:$0xff]
    %v642 = vld [vmem:[#allocation3 + $0x3b8] sm:$0xff]
    %v643 = vld [vmem:[#allocation3 + $0x3c0] sm:$0xff]
    %v644 = vld [vmem:[#allocation3 + $0x3c8] sm:$0xff]
    %v645 = vld [vmem:[#allocation3 + $0x3d0] sm:$0xff]
    %v646 = vld [vmem:[#allocation3 + $0x3d8] sm:$0xff]
    %v647 = vld [vmem:[#allocation3 + $0x3e0] sm:$0xff]
    %v648 = vld [vmem:[#allocation3 + $0x3e8] sm:$0xff]
    %v649 = vld [vmem:[#allocation3 + $0x3f0] sm:$0xff]
    %v650 = vld [vmem:[#allocation3 + $0x3f8] sm:$0xff]
    %v651 = vld [vmem:[#allocation9 + $0x20] sm:$0x7]
    %v652 = vld [vmem:[#allocation9 + $0x28] sm:$0x7]
    %v653 = vld [vmem:[#allocation9 + $0x30] sm:$0x7]
    %v654 = vld [vmem:[#allocation9 + $0x38] sm:$0x7]
    %v655 = vperm.slane %v651, 0
    %v656 = vperm.slane %v652, 0
    %v657 = vperm.slane %v653, 0
    %v658 = vperm.slane %v654, 0
    %v787 = vunpack.c.l.b16 %v523
    %v788 = vunpack.c.h.b16 %v523
    %v789 = vunpack.c.l.b16 %v524
    %v790 = vunpack.c.h.b16 %v524
    %v791 = vunpack.c.l.b16 %v525
    %v792 = vunpack.c.h.b16 %v525
    %v793 = vunpack.c.l.b16 %v526
    %v794 = vunpack.c.h.b16 %v526
    %v795 = vunpack.c.l.b16 %v527
    %v796 = vunpack.c.h.b16 %v527
    %v797 = vunpack.c.l.b16 %v528
    %v798 = vunpack.c.h.b16 %v528
    %v799 = vunpack.c.l.b16 %v529
    %v800 = vunpack.c.h.b16 %v529
    %v801 = vunpack.c.l.b16 %v530
    %v802 = vunpack.c.h.b16 %v530
    %v803 = vunpack.c.l.b16 %v531
    %v804 = vunpack.c.h.b16 %v531
    %v805 = vunpack.c.l.b16 %v532
    %v806 = vunpack.c.h.b16 %v532
    %v807 = vunpack.c.l.b16 %v533
    %v808 = vunpack.c.h.b16 %v533
    %v809 = vunpack.c.l.b16 %v534
    %v810 = vunpack.c.h.b16 %v534
    %v811 = vunpack.c.l.b16 %v535
    %v812 = vunpack.c.h.b16 %v535
    %v813 = vunpack.c.l.b16 %v536
    %v814 = vunpack.c.h.b16 %v536
    %v815 = vunpack.c.l.b16 %v537
    %v816 = vunpack.c.h.b16 %v537
    %v817 = vunpack.c.l.b16 %v538
    %v818 = vunpack.c.h.b16 %v538
    %v819 = vunpack.c.l.b16 %v539
    %v820 = vunpack.c.h.b16 %v539
    %v821 = vunpack.c.l.b16 %v540
    %v822 = vunpack.c.h.b16 %v540
    %v823 = vunpack.c.l.b16 %v541
    %v824 = vunpack.c.h.b16 %v541
    %v825 = vunpack.c.l.b16 %v542
    %v826 = vunpack.c.h.b16 %v542
    %v827 = vunpack.c.l.b16 %v543
    %v828 = vunpack.c.h.b16 %v543
    %v829 = vunpack.c.l.b16 %v544
    %v830 = vunpack.c.h.b16 %v544
    %v831 = vunpack.c.l.b16 %v545
    %v832 = vunpack.c.h.b16 %v545
    %v833 = vunpack.c.l.b16 %v546
    %v834 = vunpack.c.h.b16 %v546
    %v835 = vunpack.c.l.b16 %v547
    %v836 = vunpack.c.h.b16 %v547
    %v837 = vunpack.c.l.b16 %v548
    %v838 = vunpack.c.h.b16 %v548
    %v839 = vunpack.c.l.b16 %v549
    %v840 = vunpack.c.h.b16 %v549
    %v841 = vunpack.c.l.b16 %v550
    %v842 = vunpack.c.h.b16 %v550
    %v843 = vunpack.c.l.b16 %v551
    %v844 = vunpack.c.h.b16 %v551
    %v845 = vunpack.c.l.b16 %v552
    %v846 = vunpack.c.h.b16 %v552
    %v847 = vunpack.c.l.b16 %v553
    %v848 = vunpack.c.h.b16 %v553
    %v849 = vunpack.c.l.b16 %v554
    %v850 = vunpack.c.h.b16 %v554
    %v851 = vunpack.c.l.b16 %v555
    %v852 = vunpack.c.h.b16 %v555
    %v853 = vunpack.c.l.b16 %v556
    %v854 = vunpack.c.h.b16 %v556
    %v855 = vunpack.c.l.b16 %v557
    %v856 = vunpack.c.h.b16 %v557
    %v857 = vunpack.c.l.b16 %v558
    %v858 = vunpack.c.h.b16 %v558
    %v859 = vunpack.c.l.b16 %v559
    %v860 = vunpack.c.h.b16 %v559
    %v861 = vunpack.c.l.b16 %v560
    %v862 = vunpack.c.h.b16 %v560
    %v863 = vunpack.c.l.b16 %v561
    %v864 = vunpack.c.h.b16 %v561
    %v865 = vunpack.c.l.b16 %v562
    %v866 = vunpack.c.h.b16 %v562
    %v867 = vunpack.c.l.b16 %v563
    %v868 = vunpack.c.h.b16 %v563
    %v869 = vunpack.c.l.b16 %v564
    %v870 = vunpack.c.h.b16 %v564
    %v871 = vunpack.c.l.b16 %v565
    %v872 = vunpack.c.h.b16 %v565
    %v873 = vunpack.c.l.b16 %v566
    %v874 = vunpack.c.h.b16 %v566
    %v875 = vunpack.c.l.b16 %v567
    %v876 = vunpack.c.h.b16 %v567
    %v877 = vunpack.c.l.b16 %v568
    %v878 = vunpack.c.h.b16 %v568
    %v879 = vunpack.c.l.b16 %v569
    %v880 = vunpack.c.h.b16 %v569
    %v881 = vunpack.c.l.b16 %v570
    %v882 = vunpack.c.h.b16 %v570
    %v883 = vunpack.c.l.b16 %v571
    %v884 = vunpack.c.h.b16 %v571
    %v885 = vunpack.c.l.b16 %v572
    %v886 = vunpack.c.h.b16 %v572
    %v887 = vunpack.c.l.b16 %v573
    %v888 = vunpack.c.h.b16 %v573
    %v889 = vunpack.c.l.b16 %v574
    %v890 = vunpack.c.h.b16 %v574
    %v891 = vunpack.c.l.b16 %v575
    %v892 = vunpack.c.h.b16 %v575
    %v893 = vunpack.c.l.b16 %v576
    %v894 = vunpack.c.h.b16 %v576
    %v895 = vunpack.c.l.b16 %v577
    %v896 = vunpack.c.h.b16 %v577
    %v897 = vunpack.c.l.b16 %v578
    %v898 = vunpack.c.h.b16 %v578
    %v899 = vunpack.c.l.b16 %v579
    %v900 = vunpack.c.h.b16 %v579
    %v901 = vunpack.c.l.b16 %v580
    %v902 = vunpack.c.h.b16 %v580
    %v903 = vunpack.c.l.b16 %v581
    %v904 = vunpack.c.h.b16 %v581
    %v905 = vunpack.c.l.b16 %v582
    %v906 = vunpack.c.h.b16 %v582
    %v907 = vunpack.c.l.b16 %v583
    %v908 = vunpack.c.h.b16 %v583
    %v909 = vunpack.c.l.b16 %v584
    %v910 = vunpack.c.h.b16 %v584
    %v911 = vunpack.c.l.b16 %v585
    %v912 = vunpack.c.h.b16 %v585
    %v913 = vunpack.c.l.b16 %v586
    %v914 = vunpack.c.h.b16 %v586
    %v915 = vunpack.c.l.b16 %v587
    %v916 = vunpack.c.h.b16 %v587
    %v917 = vunpack.c.l.b16 %v588
    %v918 = vunpack.c.h.b16 %v588
    %v919 = vunpack.c.l.b16 %v589
    %v920 = vunpack.c.h.b16 %v589
    %v921 = vunpack.c.l.b16 %v590
    %v922 = vunpack.c.h.b16 %v590
    %v923 = vunpack.c.l.b16 %v591
    %v924 = vunpack.c.h.b16 %v591
    %v925 = vunpack.c.l.b16 %v592
    %v926 = vunpack.c.h.b16 %v592
    %v927 = vunpack.c.l.b16 %v593
    %v928 = vunpack.c.h.b16 %v593
    %v929 = vunpack.c.l.b16 %v594
    %v930 = vunpack.c.h.b16 %v594
    %v931 = vunpack.c.l.b16 %v595
    %v932 = vunpack.c.h.b16 %v595
    %v933 = vunpack.c.l.b16 %v596
    %v934 = vunpack.c.h.b16 %v596
    %v935 = vunpack.c.l.b16 %v597
    %v936 = vunpack.c.h.b16 %v597
    %v937 = vunpack.c.l.b16 %v598
    %v938 = vunpack.c.h.b16 %v598
    %v939 = vunpack.c.l.b16 %v599
    %v940 = vunpack.c.h.b16 %v599
    %v941 = vunpack.c.l.b16 %v600
    %v942 = vunpack.c.h.b16 %v600
    %v943 = vunpack.c.l.b16 %v601
    %v944 = vunpack.c.h.b16 %v601
    %v945 = vunpack.c.l.b16 %v602
    %v946 = vunpack.c.h.b16 %v602
    %v947 = vunpack.c.l.b16 %v603
    %v948 = vunpack.c.h.b16 %v603
    %v949 = vunpack.c.l.b16 %v604
    %v950 = vunpack.c.h.b16 %v604
    %v951 = vunpack.c.l.b16 %v605
    %v952 = vunpack.c.h.b16 %v605
    %v953 = vunpack.c.l.b16 %v606
    %v954 = vunpack.c.h.b16 %v606
    %v955 = vunpack.c.l.b16 %v607
    %v956 = vunpack.c.h.b16 %v607
    %v957 = vunpack.c.l.b16 %v608
    %v958 = vunpack.c.h.b16 %v608
    %v959 = vunpack.c.l.b16 %v609
    %v960 = vunpack.c.h.b16 %v609
    %v961 = vunpack.c.l.b16 %v610
    %v962 = vunpack.c.h.b16 %v610
    %v963 = vunpack.c.l.b16 %v611
    %v964 = vunpack.c.h.b16 %v611
    %v965 = vunpack.c.l.b16 %v612
    %v966 = vunpack.c.h.b16 %v612
    %v967 = vunpack.c.l.b16 %v613
    %v968 = vunpack.c.h.b16 %v613
    %v969 = vunpack.c.l.b16 %v614
    %v970 = vunpack.c.h.b16 %v614
    %v971 = vunpack.c.l.b16 %v615
    %v972 = vunpack.c.h.b16 %v615
    %v973 = vunpack.c.l.b16 %v616
    %v974 = vunpack.c.h.b16 %v616
    %v975 = vunpack.c.l.b16 %v617
    %v976 = vunpack.c.h.b16 %v617
    %v977 = vunpack.c.l.b16 %v618
    %v978 = vunpack.c.h.b16 %v618
    %v979 = vunpack.c.l.b16 %v619
    %v980 = vunpack.c.h.b16 %v619
    %v981 = vunpack.c.l.b16 %v620
    %v982 = vunpack.c.h.b16 %v620
    %v983 = vunpack.c.l.b16 %v621
    %v984 = vunpack.c.h.b16 %v621
    %v985 = vunpack.c.l.b16 %v622
    %v986 = vunpack.c.h.b16 %v622
    %v987 = vunpack.c.l.b16 %v623
    %v988 = vunpack.c.h.b16 %v623
    %v989 = vunpack.c.l.b16 %v624
    %v990 = vunpack.c.h.b16 %v624
    %v991 = vunpack.c.l.b16 %v625
    %v992 = vunpack.c.h.b16 %v625
    %v993 = vunpack.c.l.b16 %v626
    %v994 = vunpack.c.h.b16 %v626
    %v995 = vunpack.c.l.b16 %v627
    %v996 = vunpack.c.h.b16 %v627
    %v997 = vunpack.c.l.b16 %v628
    %v998 = vunpack.c.h.b16 %v628
    %v999 = vunpack.c.l.b16 %v629
    %v1000 = vunpack.c.h.b16 %v629
    %v1001 = vunpack.c.l.b16 %v630
    %v1002 = vunpack.c.h.b16 %v630
    %v1003 = vunpack.c.l.b16 %v631
    %v1004 = vunpack.c.h.b16 %v631
    %v1005 = vunpack.c.l.b16 %v632
    %v1006 = vunpack.c.h.b16 %v632
    %v1007 = vunpack.c.l.b16 %v633
    %v1008 = vunpack.c.h.b16 %v633
    %v1009 = vunpack.c.l.b16 %v634
    %v1010 = vunpack.c.h.b16 %v634
    %v1011 = vunpack.c.l.b16 %v635
    %v1012 = vunpack.c.h.b16 %v635
    %v1013 = vunpack.c.l.b16 %v636
    %v1014 = vunpack.c.h.b16 %v636
    %v1015 = vunpack.c.l.b16 %v637
    %v1016 = vunpack.c.h.b16 %v637
    %v1017 = vunpack.c.l.b16 %v638
    %v1018 = vunpack.c.h.b16 %v638
    %v1019 = vunpack.c.l.b16 %v639
    %v1020 = vunpack.c.h.b16 %v639
    %v1021 = vunpack.c.l.b16 %v640
    %v1022 = vunpack.c.h.b16 %v640
    %v1023 = vunpack.c.l.b16 %v641
    %v1024 = vunpack.c.h.b16 %v641
    %v1025 = vunpack.c.l.b16 %v642
    %v1026 = vunpack.c.h.b16 %v642
    %v1027 = vunpack.c.l.b16 %v643
    %v1028 = vunpack.c.h.b16 %v643
    %v1029 = vunpack.c.l.b16 %v644
    %v1030 = vunpack.c.h.b16 %v644
    %v1031 = vunpack.c.l.b16 %v645
    %v1032 = vunpack.c.h.b16 %v645
    %v1033 = vunpack.c.l.b16 %v646
    %v1034 = vunpack.c.h.b16 %v646
    %v1035 = vunpack.c.l.b16 %v647
    %v1036 = vunpack.c.h.b16 %v647
    %v1037 = vunpack.c.l.b16 %v648
    %v1038 = vunpack.c.h.b16 %v648
    %v1039 = vunpack.c.l.b16 %v649
    %v1040 = vunpack.c.h.b16 %v649
    %v1041 = vunpack.c.l.b16 %v650
    %v1042 = vunpack.c.h.b16 %v650
    %v1043 = vpack.c.b16 %v791, %v787
    %v1044 = vpack.c.b16 %v792, %v788
    %v1045 = vpack.c.b16 %v793, %v789
    %v1046 = vpack.c.b16 %v794, %v790
    %v1047 = vpack.c.b16 %v799, %v795
    %v1048 = vpack.c.b16 %v800, %v796
    %v1049 = vpack.c.b16 %v801, %v797
    %v1050 = vpack.c.b16 %v802, %v798
    %v1051 = vpack.c.b16 %v807, %v803
    %v1052 = vpack.c.b16 %v808, %v804
    %v1053 = vpack.c.b16 %v809, %v805
    %v1054 = vpack.c.b16 %v810, %v806
    %v1055 = vpack.c.b16 %v815, %v811
    %v1056 = vpack.c.b16 %v816, %v812
    %v1057 = vpack.c.b16 %v817, %v813
    %v1058 = vpack.c.b16 %v818, %v814
    %v1059 = vpack.c.b16 %v823, %v819
    %v1060 = vpack.c.b16 %v824, %v820
    %v1061 = vpack.c.b16 %v825, %v821
    %v1062 = vpack.c.b16 %v826, %v822
    %v1063 = vpack.c.b16 %v831, %v827
    %v1064 = vpack.c.b16 %v832, %v828
    %v1065 = vpack.c.b16 %v833, %v829
    %v1066 = vpack.c.b16 %v834, %v830
    %v1067 = vpack.c.b16 %v839, %v835
    %v1068 = vpack.c.b16 %v840, %v836
    %v1069 = vpack.c.b16 %v841, %v837
    %v1070 = vpack.c.b16 %v842, %v838
    %v1071 = vpack.c.b16 %v847, %v843
    %v1072 = vpack.c.b16 %v848, %v844
    %v1073 = vpack.c.b16 %v849, %v845
    %v1074 = vpack.c.b16 %v850, %v846
    %v1075 = vpack.c.b16 %v855, %v851
    %v1076 = vpack.c.b16 %v856, %v852
    %v1077 = vpack.c.b16 %v857, %v853
    %v1078 = vpack.c.b16 %v858, %v854
    %v1079 = vpack.c.b16 %v863, %v859
    %v1080 = vpack.c.b16 %v864, %v860
    %v1081 = vpack.c.b16 %v865, %v861
    %v1082 = vpack.c.b16 %v866, %v862
    %v1083 = vpack.c.b16 %v871, %v867
    %v1084 = vpack.c.b16 %v872, %v868
    %v1085 = vpack.c.b16 %v873, %v869
    %v1086 = vpack.c.b16 %v874, %v870
    %v1087 = vpack.c.b16 %v879, %v875
    %v1088 = vpack.c.b16 %v880, %v876
    %v1089 = vpack.c.b16 %v881, %v877
    %v1090 = vpack.c.b16 %v882, %v878
    %v1091 = vpack.c.b16 %v887, %v883
    %v1092 = vpack.c.b16 %v888, %v884
    %v1093 = vpack.c.b16 %v889, %v885
    %v1094 = vpack.c.b16 %v890, %v886
    %v1095 = vpack.c.b16 %v895, %v891
    %v1096 = vpack.c.b16 %v896, %v892
    %v1097 = vpack.c.b16 %v897, %v893
    %v1098 = vpack.c.b16 %v898, %v894
    %v1099 = vpack.c.b16 %v903, %v899
    %v1100 = vpack.c.b16 %v904, %v900
    %v1101 = vpack.c.b16 %v905, %v901
    %v1102 = vpack.c.b16 %v906, %v902
    %v1103 = vpack.c.b16 %v911, %v907
    %v1104 = vpack.c.b16 %v912, %v908
    %v1105 = vpack.c.b16 %v913, %v909
    %v1106 = vpack.c.b16 %v914, %v910
    %v1107 = vpack.c.b16 %v919, %v915
    %v1108 = vpack.c.b16 %v920, %v916
    %v1109 = vpack.c.b16 %v921, %v917
    %v1110 = vpack.c.b16 %v922, %v918
    %v1111 = vpack.c.b16 %v927, %v923
    %v1112 = vpack.c.b16 %v928, %v924
    %v1113 = vpack.c.b16 %v929, %v925
    %v1114 = vpack.c.b16 %v930, %v926
    %v1115 = vpack.c.b16 %v935, %v931
    %v1116 = vpack.c.b16 %v936, %v932
    %v1117 = vpack.c.b16 %v937, %v933
    %v1118 = vpack.c.b16 %v938, %v934
    %v1119 = vpack.c.b16 %v943, %v939
    %v1120 = vpack.c.b16 %v944, %v940
    %v1121 = vpack.c.b16 %v945, %v941
    %v1122 = vpack.c.b16 %v946, %v942
    %v1123 = vpack.c.b16 %v951, %v947
    %v1124 = vpack.c.b16 %v952, %v948
    %v1125 = vpack.c.b16 %v953, %v949
    %v1126 = vpack.c.b16 %v954, %v950
    %v1127 = vpack.c.b16 %v959, %v955
    %v1128 = vpack.c.b16 %v960, %v956
    %v1129 = vpack.c.b16 %v961, %v957
    %v1130 = vpack.c.b16 %v962, %v958
    %v1131 = vpack.c.b16 %v967, %v963
    %v1132 = vpack.c.b16 %v968, %v964
    %v1133 = vpack.c.b16 %v969, %v965
    %v1134 = vpack.c.b16 %v970, %v966
    %v1135 = vpack.c.b16 %v975, %v971
    %v1136 = vpack.c.b16 %v976, %v972
    %v1137 = vpack.c.b16 %v977, %v973
    %v1138 = vpack.c.b16 %v978, %v974
    %v1139 = vpack.c.b16 %v983, %v979
    %v1140 = vpack.c.b16 %v984, %v980
    %v1141 = vpack.c.b16 %v985, %v981
    %v1142 = vpack.c.b16 %v986, %v982
    %v1143 = vpack.c.b16 %v991, %v987
    %v1144 = vpack.c.b16 %v992, %v988
    %v1145 = vpack.c.b16 %v993, %v989
    %v1146 = vpack.c.b16 %v994, %v990
    %v1147 = vpack.c.b16 %v999, %v995
    %v1148 = vpack.c.b16 %v1000, %v996
    %v1149 = vpack.c.b16 %v1001, %v997
    %v1150 = vpack.c.b16 %v1002, %v998
    %v1151 = vpack.c.b16 %v1007, %v1003
    %v1152 = vpack.c.b16 %v1008, %v1004
    %v1153 = vpack.c.b16 %v1009, %v1005
    %v1154 = vpack.c.b16 %v1010, %v1006
    %v1155 = vpack.c.b16 %v1015, %v1011
    %v1156 = vpack.c.b16 %v1016, %v1012
    %v1157 = vpack.c.b16 %v1017, %v1013
    %v1158 = vpack.c.b16 %v1018, %v1014
    %v1159 = vpack.c.b16 %v1023, %v1019
    %v1160 = vpack.c.b16 %v1024, %v1020
    %v1161 = vpack.c.b16 %v1025, %v1021
    %v1162 = vpack.c.b16 %v1026, %v1022
    %v1163 = vpack.c.b16 %v1031, %v1027
    %v1164 = vpack.c.b16 %v1032, %v1028
    %v1165 = vpack.c.b16 %v1033, %v1029
    %v1166 = vpack.c.b16 %v1034, %v1030
    %v1167 = vpack.c.b16 %v1039, %v1035
    %v1168 = vpack.c.b16 %v1040, %v1036
    %v1169 = vpack.c.b16 %v1041, %v1037
    %v1170 = vpack.c.b16 %v1042, %v1038
    %1299 = vmatpush.bf16.msra.mxu0 %v1071
    %1300 = vmatpush.bf16.msra.mxu0 %v1067
    %1301 = vmatpush.bf16.msra.mxu0 %v1063
    %1302 = vmatpush.bf16.msra.mxu0 %v1059
    %1303 = vmatpush.bf16.msra.mxu0 %v1055
    %1304 = vmatpush.bf16.msra.mxu0 %v1051
    %1305 = vmatpush.bf16.msra.mxu0 %v1047
    %1306 = vmatpush.bf16.msra.mxu0 %v1043
    %1307 = vmatmul.bf16.gmra.mxu0 %v515
    %v1308 = vpop.f32.mrf.mxu0
    %v1309 = vadd.f32 %v655, %v1308
    %v1310 = vpop.f32.mrf.mxu0
    %1311 = vdwg.mxu0
    %1312 = vmatpush.bf16.msra.mxu0 %v1103
    %1313 = vmatpush.bf16.msra.mxu0 %v1099
    %1314 = vmatpush.bf16.msra.mxu0 %v1095
    %1315 = vmatpush.bf16.msra.mxu0 %v1091
    %1316 = vmatpush.bf16.msra.mxu0 %v1087
    %1317 = vmatpush.bf16.msra.mxu0 %v1083
    %1318 = vmatpush.bf16.msra.mxu0 %v1079
    %1319 = vmatpush.bf16.msra.mxu0 %v1075
    %1320 = vmatmul.bf16.gmra.mxu0 %v516
    %v1321 = vpop.f32.mrf.mxu0
    %v1322 = vadd.f32 %v1309, %v1321
    %v1323 = vpop.f32.mrf.mxu0
    %1324 = vdwg.mxu0
    %1325 = vmatpush.bf16.msra.mxu0 %v1135
    %1326 = vmatpush.bf16.msra.mxu0 %v1131
    %1327 = vmatpush.bf16.msra.mxu0 %v1127
    %1328 = vmatpush.bf16.msra.mxu0 %v1123
    %1329 = vmatpush.bf16.msra.mxu0 %v1119
    %1330 = vmatpush.bf16.msra.mxu0 %v1115
    %1331 = vmatpush.bf16.msra.mxu0 %v1111
    %1332 = vmatpush.bf16.msra.mxu0 %v1107
    %1333 = vmatmul.bf16.gmra.mxu0 %v517
    %v1334 = vpop.f32.mrf.mxu0
    %v1335 = vadd.f32 %v1322, %v1334
    %v1336 = vpop.f32.mrf.mxu0
    %1337 = vdwg.mxu0
    %1338 = vmatpush.bf16.msra.mxu0 %v1167
    %1339 = vmatpush.bf16.msra.mxu0 %v1163
    %1340 = vmatpush.bf16.msra.mxu0 %v1159
    %1341 = vmatpush.bf16.msra.mxu0 %v1155
    %1342 = vmatpush.bf16.msra.mxu0 %v1151
    %1343 = vmatpush.bf16.msra.mxu0 %v1147
    %1344 = vmatpush.bf16.msra.mxu0 %v1143
    %1345 = vmatpush.bf16.msra.mxu0 %v1139
    %1346 = vmatmul.bf16.gmra.mxu0 %v518
    %v1347 = vpop.f32.mrf.mxu0
    %v1348 = vadd.f32 %v1335, %v1347
    %v1349 = vpop.f32.mrf.mxu0
    %1350 = vdwg.mxu0
    %1351 = vmatpush.bf16.msra.mxu0 %v1072
    %1352 = vmatpush.bf16.msra.mxu0 %v1068
    %1353 = vmatpush.bf16.msra.mxu0 %v1064
    %1354 = vmatpush.bf16.msra.mxu0 %v1060
    %1355 = vmatpush.bf16.msra.mxu0 %v1056
    %1356 = vmatpush.bf16.msra.mxu0 %v1052
    %1357 = vmatpush.bf16.msra.mxu0 %v1048
    %1358 = vmatpush.bf16.msra.mxu0 %v1044
    %1359 = vmatmul.bf16.gmra.mxu0 %v515
    %v1360 = vpop.f32.mrf.mxu0
    %v1361 = vadd.f32 %v656, %v1360
    %v1362 = vpop.f32.mrf.mxu0
    %1363 = vdwg.mxu0
    %1364 = vmatpush.bf16.msra.mxu0 %v1104
    %1365 = vmatpush.bf16.msra.mxu0 %v1100
    %1366 = vmatpush.bf16.msra.mxu0 %v1096
    %1367 = vmatpush.bf16.msra.mxu0 %v1092
    %1368 = vmatpush.bf16.msra.mxu0 %v1088
    %1369 = vmatpush.bf16.msra.mxu0 %v1084
    %1370 = vmatpush.bf16.msra.mxu0 %v1080
    %1371 = vmatpush.bf16.msra.mxu0 %v1076
    %1372 = vmatmul.bf16.gmra.mxu0 %v516
    %v1373 = vpop.f32.mrf.mxu0
    %v1374 = vadd.f32 %v1361, %v1373
    %v1375 = vpop.f32.mrf.mxu0
    %1376 = vdwg.mxu0
    %1377 = vmatpush.bf16.msra.mxu0 %v1136
    %1378 = vmatpush.bf16.msra.mxu0 %v1132
    %1379 = vmatpush.bf16.msra.mxu0 %v1128
    %1380 = vmatpush.bf16.msra.mxu0 %v1124
    %1381 = vmatpush.bf16.msra.mxu0 %v1120
    %1382 = vmatpush.bf16.msra.mxu0 %v1116
    %1383 = vmatpush.bf16.msra.mxu0 %v1112
    %1384 = vmatpush.bf16.msra.mxu0 %v1108
    %1385 = vmatmul.bf16.gmra.mxu0 %v517
    %v1386 = vpop.f32.mrf.mxu0
    %v1387 = vadd.f32 %v1374, %v1386
    %v1388 = vpop.f32.mrf.mxu0
    %1389 = vdwg.mxu0
    %1390 = vmatpush.bf16.msra.mxu0 %v1168
    %1391 = vmatpush.bf16.msra.mxu0 %v1164
    %1392 = vmatpush.bf16.msra.mxu0 %v1160
    %1393 = vmatpush.bf16.msra.mxu0 %v1156
    %1394 = vmatpush.bf16.msra.mxu0 %v1152
    %1395 = vmatpush.bf16.msra.mxu0 %v1148
    %1396 = vmatpush.bf16.msra.mxu0 %v1144
    %1397 = vmatpush.bf16.msra.mxu0 %v1140
    %1398 = vmatmul.bf16.gmra.mxu0 %v518
    %v1399 = vpop.f32.mrf.mxu0
    %v1400 = vadd.f32 %v1387, %v1399
    %v1401 = vpop.f32.mrf.mxu0
    %1402 = vdwg.mxu0
    %1403 = vmatpush.bf16.msra.mxu0 %v1073
    %1404 = vmatpush.bf16.msra.mxu0 %v1069
    %1405 = vmatpush.bf16.msra.mxu0 %v1065
    %1406 = vmatpush.bf16.msra.mxu0 %v1061
    %1407 = vmatpush.bf16.msra.mxu0 %v1057
    %1408 = vmatpush.bf16.msra.mxu0 %v1053
    %1409 = vmatpush.bf16.msra.mxu0 %v1049
    %1410 = vmatpush.bf16.msra.mxu0 %v1045
    %1411 = vmatmul.bf16.gmra.mxu0 %v515
    %v1412 = vpop.f32.mrf.mxu0
    %v1413 = vadd.f32 %v657, %v1412
    %v1414 = vpop.f32.mrf.mxu0
    %1415 = vdwg.mxu0
    %1416 = vmatpush.bf16.msra.mxu0 %v1105
    %1417 = vmatpush.bf16.msra.mxu0 %v1101
    %1418 = vmatpush.bf16.msra.mxu0 %v1097
    %1419 = vmatpush.bf16.msra.mxu0 %v1093
    %1420 = vmatpush.bf16.msra.mxu0 %v1089
    %1421 = vmatpush.bf16.msra.mxu0 %v1085
    %1422 = vmatpush.bf16.msra.mxu0 %v1081
    %1423 = vmatpush.bf16.msra.mxu0 %v1077
    %1424 = vmatmul.bf16.gmra.mxu0 %v516
    %v1425 = vpop.f32.mrf.mxu0
    %v1426 = vadd.f32 %v1413, %v1425
    %v1427 = vpop.f32.mrf.mxu0
    %1428 = vdwg.mxu0
    %1429 = vmatpush.bf16.msra.mxu0 %v1137
    %1430 = vmatpush.bf16.msra.mxu0 %v1133
    %1431 = vmatpush.bf16.msra.mxu0 %v1129
    %1432 = vmatpush.bf16.msra.mxu0 %v1125
    %1433 = vmatpush.bf16.msra.mxu0 %v1121
    %1434 = vmatpush.bf16.msra.mxu0 %v1117
    %1435 = vmatpush.bf16.msra.mxu0 %v1113
    %1436 = vmatpush.bf16.msra.mxu0 %v1109
    %1437 = vmatmul.bf16.gmra.mxu0 %v517
    %v1438 = vpop.f32.mrf.mxu0
    %v1439 = vadd.f32 %v1426, %v1438
    %v1440 = vpop.f32.mrf.mxu0
    %1441 = vdwg.mxu0
    %1442 = vmatpush.bf16.msra.mxu0 %v1169
    %1443 = vmatpush.bf16.msra.mxu0 %v1165
    %1444 = vmatpush.bf16.msra.mxu0 %v1161
    %1445 = vmatpush.bf16.msra.mxu0 %v1157
    %1446 = vmatpush.bf16.msra.mxu0 %v1153
    %1447 = vmatpush.bf16.msra.mxu0 %v1149
    %1448 = vmatpush.bf16.msra.mxu0 %v1145
    %1449 = vmatpush.bf16.msra.mxu0 %v1141
    %1450 = vmatmul.bf16.gmra.mxu0 %v518
    %v1451 = vpop.f32.mrf.mxu0
    %v1452 = vadd.f32 %v1439, %v1451
    %v1453 = vpop.f32.mrf.mxu0
    %1454 = vdwg.mxu0
    %1455 = vmatpush.bf16.msra.mxu0 %v1074
    %1456 = vmatpush.bf16.msra.mxu0 %v1070
    %1457 = vmatpush.bf16.msra.mxu0 %v1066
    %1458 = vmatpush.bf16.msra.mxu0 %v1062
    %1459 = vmatpush.bf16.msra.mxu0 %v1058
    %1460 = vmatpush.bf16.msra.mxu0 %v1054
    %1461 = vmatpush.bf16.msra.mxu0 %v1050
    %1462 = vmatpush.bf16.msra.mxu0 %v1046
    %1463 = vmatmul.bf16.gmra.mxu0 %v515
    %v1464 = vpop.f32.mrf.mxu0
    %v1465 = vadd.f32 %v658, %v1464
    %v1466 = vpop.f32.mrf.mxu0
    %1467 = vdwg.mxu0
    %1468 = vmatpush.bf16.msra.mxu0 %v1106
    %1469 = vmatpush.bf16.msra.mxu0 %v1102
    %1470 = vmatpush.bf16.msra.mxu0 %v1098
    %1471 = vmatpush.bf16.msra.mxu0 %v1094
    %1472 = vmatpush.bf16.msra.mxu0 %v1090
    %1473 = vmatpush.bf16.msra.mxu0 %v1086
    %1474 = vmatpush.bf16.msra.mxu0 %v1082
    %1475 = vmatpush.bf16.msra.mxu0 %v1078
    %1476 = vmatmul.bf16.gmra.mxu0 %v516
    %v1477 = vpop.f32.mrf.mxu0
    %v1478 = vadd.f32 %v1465, %v1477
    %v1479 = vpop.f32.mrf.mxu0
    %1480 = vdwg.mxu0
    %1481 = vmatpush.bf16.msra.mxu0 %v1138
    %1482 = vmatpush.bf16.msra.mxu0 %v1134
    %1483 = vmatpush.bf16.msra.mxu0 %v1130
    %1484 = vmatpush.bf16.msra.mxu0 %v1126
    %1485 = vmatpush.bf16.msra.mxu0 %v1122
    %1486 = vmatpush.bf16.msra.mxu0 %v1118
    %1487 = vmatpush.bf16.msra.mxu0 %v1114
    %1488 = vmatpush.bf16.msra.mxu0 %v1110
    %1489 = vmatmul.bf16.gmra.mxu0 %v517
    %v1490 = vpop.f32.mrf.mxu0
    %v1491 = vadd.f32 %v1478, %v1490
    %v1492 = vpop.f32.mrf.mxu0
    %1493 = vdwg.mxu0
    %1494 = vmatpush.bf16.msra.mxu0 %v1170
    %1495 = vmatpush.bf16.msra.mxu0 %v1166
    %1496 = vmatpush.bf16.msra.mxu0 %v1162
    %1497 = vmatpush.bf16.msra.mxu0 %v1158
    %1498 = vmatpush.bf16.msra.mxu0 %v1154
    %1499 = vmatpush.bf16.msra.mxu0 %v1150
    %1500 = vmatpush.bf16.msra.mxu0 %v1146
    %1501 = vmatpush.bf16.msra.mxu0 %v1142
    %1502 = vmatmul.bf16.gmra.mxu0 %v518
    %v1503 = vpop.f32.mrf.mxu0
    %v1504 = vadd.f32 %v1491, %v1503
    %v1505 = vpop.f32.mrf.mxu0
    %1506 = vdwg.mxu0
    %v1507 = vrot.slane %v1348, 4
    %v1508 = vadd.f32 %v1348, %v1507
    %v1509 = vrot.slane %v1508, 2
    %v1510 = vadd.f32 %v1508, %v1509
    %v1511 = vrot.slane %v1510, 1
    %v1512 = vadd.f32 %v1510, %v1511
    %v1513 = vrot.slane %v1400, 4
    %v1514 = vadd.f32 %v1400, %v1513
    %v1515 = vrot.slane %v1514, 2
    %v1516 = vadd.f32 %v1514, %v1515
    %v1517 = vrot.slane %v1516, 1
    %v1518 = vadd.f32 %v1516, %v1517
    %v1519 = vrot.slane %v1452, 4
    %v1520 = vadd.f32 %v1452, %v1519
    %v1521 = vrot.slane %v1520, 2
    %v1522 = vadd.f32 %v1520, %v1521
    %v1523 = vrot.slane %v1522, 1
    %v1524 = vadd.f32 %v1522, %v1523
    %v1525 = vrot.slane %v1504, 4
    %v1526 = vadd.f32 %v1504, %v1525
    %v1527 = vrot.slane %v1526, 2
    %v1528 = vadd.f32 %v1526, %v1527
    %v1529 = vrot.slane %v1528, 1
    %v1530 = vadd.f32 %v1528, %v1529
    %v1531 = vmul.f32 %v1512, %v406
    %v1532 = vmul.f32 %v1518, %v406
    %v1533 = vmul.f32 %v1524, %v406
    %v1534 = vmul.f32 %v1530, %v406
    %v1535 = vsub.f32 %v1348, %v1531
    %v1536 = vsub.f32 %v1400, %v1532
    %v1537 = vsub.f32 %v1452, %v1533
    %v1538 = vsub.f32 %v1504, %v1534
    %v1539 = vmul.f32 %v1535, %v1535
    %v1540 = vmul.f32 %v1536, %v1536
    %v1541 = vmul.f32 %v1537, %v1537
    %v1542 = vmul.f32 %v1538, %v1538
    %v1543 = vrot.slane %v1539, 4
    %v1544 = vadd.f32 %v1539, %v1543
    %v1545 = vrot.slane %v1544, 2
    %v1546 = vadd.f32 %v1544, %v1545
    %v1547 = vrot.slane %v1546, 1
    %v1548 = vadd.f32 %v1546, %v1547
    %v1549 = vrot.slane %v1540, 4
    %v1550 = vadd.f32 %v1540, %v1549
    %v1551 = vrot.slane %v1550, 2
    %v1552 = vadd.f32 %v1550, %v1551
    %v1553 = vrot.slane %v1552, 1
    %v1554 = vadd.f32 %v1552, %v1553
    %v1555 = vrot.slane %v1541, 4
    %v1556 = vadd.f32 %v1541, %v1555
    %v1557 = vrot.slane %v1556, 2
    %v1558 = vadd.f32 %v1556, %v1557
    %v1559 = vrot.slane %v1558, 1
    %v1560 = vadd.f32 %v1558, %v1559
    %v1561 = vrot.slane %v1542, 4
    %v1562 = vadd.f32 %v1542, %v1561
    %v1563 = vrot.slane %v1562, 2
    %v1564 = vadd.f32 %v1562, %v1563
    %v1565 = vrot.slane %v1564, 1
    %v1566 = vadd.f32 %v1564, %v1565
    %v1567 = vmul.f32 %v1548, %v406
    %v1568 = vmul.f32 %v1554, %v406
    %v1569 = vmul.f32 %v1560, %v406
    %v1570 = vmul.f32 %v1566, %v406
    %v1571 = vadd.f32 %v1567, 1e-05
    %v1572 = vadd.f32 %v1568, 1e-05
    %v1573 = vadd.f32 %v1569, 1e-05
    %v1574 = vadd.f32 %v1570, 1e-05
    %v1575 = vrsqrt.pop %v1571
    %v1576 = vmul.f32 %v1575, %v1571
    %v1577 = vmul.f32 %v1576, %v1575
    %v1578 = vmul.f32 0.5, %v1577
    %v1579 = vsub.f32 1.5, %v1578
    %v1580 = vmul.f32 %v1575, %v1579
    %vm1581 = vweird.f32 %v1571
    %vm1582 = vweird.f32 %v1575
    %vm1583 = vmor %vm1581, %vm1582
    %v1584 = vsel %vm1583, %v1575, %v1580
    %v1585 = vrsqrt.pop %v1572
    %v1586 = vmul.f32 %v1585, %v1572
    %v1587 = vmul.f32 %v1586, %v1585
    %v1588 = vmul.f32 0.5, %v1587
    %v1589 = vsub.f32 1.5, %v1588
    %v1590 = vmul.f32 %v1585, %v1589
    %vm1591 = vweird.f32 %v1572
    %vm1592 = vweird.f32 %v1585
    %vm1593 = vmor %vm1591, %vm1592
    %v1594 = vsel %vm1593, %v1585, %v1590
    %v1595 = vrsqrt.pop %v1573
    %v1596 = vmul.f32 %v1595, %v1573
    %v1597 = vmul.f32 %v1596, %v1595
    %v1598 = vmul.f32 0.5, %v1597
    %v1599 = vsub.f32 1.5, %v1598
    %v1600 = vmul.f32 %v1595, %v1599
    %vm1601 = vweird.f32 %v1573
    %vm1602 = vweird.f32 %v1595
    %vm1603 = vmor %vm1601, %vm1602
    %v1604 = vsel %vm1603, %v1595, %v1600
    %v1605 = vrsqrt.pop %v1574
    %v1606 = vmul.f32 %v1605, %v1574
    %v1607 = vmul.f32 %v1606, %v1605
    %v1608 = vmul.f32 0.5, %v1607
    %v1609 = vsub.f32 1.5, %v1608
    %v1610 = vmul.f32 %v1605, %v1609
    %vm1611 = vweird.f32 %v1574
    %vm1612 = vweird.f32 %v1605
    %vm1613 = vmor %vm1611, %vm1612
    %v1614 = vsel %vm1613, %v1605, %v1610
    %v1615 = vmul.f32 %v1535, %v1584
    %v1616 = vmul.f32 %v1536, %v1594
    %v1617 = vmul.f32 %v1537, %v1604
    %v1618 = vmul.f32 %v1538, %v1614
    %v1619 = vperm.slane %v651, 1
    %v1620 = vperm.slane %v652, 1
    %v1621 = vperm.slane %v653, 1
    %v1622 = vperm.slane %v654, 1
    %v1623 = vmul.f32 %v1615, %v1619
    %v1624 = vmul.f32 %v1616, %v1620
    %v1625 = vmul.f32 %v1617, %v1621
    %v1626 = vmul.f32 %v1618, %v1622
    %v1627 = vperm.slane %v651, 2
    %v1628 = vperm.slane %v652, 2
    %v1629 = vperm.slane %v653, 2
    %v1630 = vperm.slane %v654, 2
    %v1631 = vadd.f32 %v1623, %v1627
    %v1632 = vadd.f32 %v1624, %v1628
    %v1633 = vadd.f32 %v1625, %v1629
    %v1634 = vadd.f32 %v1626, %v1630
    %v1635 = vmax.f32 %v1631, 0.0
    %v1636 = vmax.f32 %v1632, 0.0
    %v1637 = vmax.f32 %v1633, 0.0
    %v1638 = vmax.f32 %v1634, 0.0
    %v1639 = vpack.c.bf16 %v1635, %v1635
    %v1640 = vpack.c.bf16 %v1636, %v1636
    %v1641 = vpack.c.bf16 %v1637, %v1637
    %v1642 = vpack.c.bf16 %v1638, %v1638
    %s1643 = smul.u32 %s519, 1
    %s1644 = sshll.u32 %s1643, 4
    %1645 = dma.done %s60, %s1644
    %v1646 = vld [vmem:[#allocation4] sm:$0xf]
    %v1647 = vld [vmem:[#allocation4 + $0x4] sm:$0xf]
    %v1648 = vld [vmem:[#allocation4 + $0x8] sm:$0xf]
    %v1649 = vld [vmem:[#allocation4 + $0xc] sm:$0xf]
    %v1650 = vld [vmem:[#allocation4 + $0x10] sm:$0xf]
    %v1651 = vld [vmem:[#allocation4 + $0x14] sm:$0xf]
    %v1652 = vld [vmem:[#allocation4 + $0x18] sm:$0xf]
    %v1653 = vld [vmem:[#allocation4 + $0x1c] sm:$0xf]
    %v1654 = vld [vmem:[#allocation4 + $0x20] sm:$0xf]
    %v1655 = vld [vmem:[#allocation4 + $0x24] sm:$0xf]
    %v1656 = vld [vmem:[#allocation4 + $0x28] sm:$0xf]
    %v1657 = vld [vmem:[#allocation4 + $0x2c] sm:$0xf]
    %v1658 = vld [vmem:[#allocation4 + $0x30] sm:$0xf]
    %v1659 = vld [vmem:[#allocation4 + $0x34] sm:$0xf]
    %v1660 = vld [vmem:[#allocation4 + $0x38] sm:$0xf]
    %v1661 = vld [vmem:[#allocation4 + $0x3c] sm:$0xf]
    %v1662 = vld [vmem:[#allocation4 + $0x40] sm:$0xf]
    %v1663 = vld [vmem:[#allocation4 + $0x44] sm:$0xf]
    %v1664 = vld [vmem:[#allocation4 + $0x48] sm:$0xf]
    %v1665 = vld [vmem:[#allocation4 + $0x4c] sm:$0xf]
    %v1666 = vld [vmem:[#allocation4 + $0x50] sm:$0xf]
    %v1667 = vld [vmem:[#allocation4 + $0x54] sm:$0xf]
    %v1668 = vld [vmem:[#allocation4 + $0x58] sm:$0xf]
    %v1669 = vld [vmem:[#allocation4 + $0x5c] sm:$0xf]
    %v1670 = vld [vmem:[#allocation4 + $0x60] sm:$0xf]
    %v1671 = vld [vmem:[#allocation4 + $0x64] sm:$0xf]
    %v1672 = vld [vmem:[#allocation4 + $0x68] sm:$0xf]
    %v1673 = vld [vmem:[#allocation4 + $0x6c] sm:$0xf]
    %v1674 = vld [vmem:[#allocation4 + $0x70] sm:$0xf]
    %v1675 = vld [vmem:[#allocation4 + $0x74] sm:$0xf]
    %v1676 = vld [vmem:[#allocation4 + $0x78] sm:$0xf]
    %v1677 = vld [vmem:[#allocation4 + $0x7c] sm:$0xf]
    %v1678 = vld [vmem:[#allocation4 + $0x80] sm:$0xf]
    %v1679 = vld [vmem:[#allocation4 + $0x84] sm:$0xf]
    %v1680 = vld [vmem:[#allocation4 + $0x88] sm:$0xf]
    %v1681 = vld [vmem:[#allocation4 + $0x8c] sm:$0xf]
    %v1682 = vld [vmem:[#allocation4 + $0x90] sm:$0xf]
    %v1683 = vld [vmem:[#allocation4 + $0x94] sm:$0xf]
    %v1684 = vld [vmem:[#allocation4 + $0x98] sm:$0xf]
    %v1685 = vld [vmem:[#allocation4 + $0x9c] sm:$0xf]
    %v1686 = vld [vmem:[#allocation4 + $0xa0] sm:$0xf]
    %v1687 = vld [vmem:[#allocation4 + $0xa4] sm:$0xf]
    %v1688 = vld [vmem:[#allocation4 + $0xa8] sm:$0xf]
    %v1689 = vld [vmem:[#allocation4 + $0xac] sm:$0xf]
    %v1690 = vld [vmem:[#allocation4 + $0xb0] sm:$0xf]
    %v1691 = vld [vmem:[#allocation4 + $0xb4] sm:$0xf]
    %v1692 = vld [vmem:[#allocation4 + $0xb8] sm:$0xf]
    %v1693 = vld [vmem:[#allocation4 + $0xbc] sm:$0xf]
    %v1694 = vld [vmem:[#allocation4 + $0xc0] sm:$0xf]
    %v1695 = vld [vmem:[#allocation4 + $0xc4] sm:$0xf]
    %v1696 = vld [vmem:[#allocation4 + $0xc8] sm:$0xf]
    %v1697 = vld [vmem:[#allocation4 + $0xcc] sm:$0xf]
    %v1698 = vld [vmem:[#allocation4 + $0xd0] sm:$0xf]
    %v1699 = vld [vmem:[#allocation4 + $0xd4] sm:$0xf]
    %v1700 = vld [vmem:[#allocation4 + $0xd8] sm:$0xf]
    %v1701 = vld [vmem:[#allocation4 + $0xdc] sm:$0xf]
    %v1702 = vld [vmem:[#allocation4 + $0xe0] sm:$0xf]
    %v1703 = vld [vmem:[#allocation4 + $0xe4] sm:$0xf]
    %v1704 = vld [vmem:[#allocation4 + $0xe8] sm:$0xf]
    %v1705 = vld [vmem:[#allocation4 + $0xec] sm:$0xf]
    %v1706 = vld [vmem:[#allocation4 + $0xf0] sm:$0xf]
    %v1707 = vld [vmem:[#allocation4 + $0xf4] sm:$0xf]
    %v1708 = vld [vmem:[#allocation4 + $0xf8] sm:$0xf]
    %v1709 = vld [vmem:[#allocation4 + $0xfc] sm:$0xf]
    %v1710 = vld [vmem:[#allocation9 + $0x40] sm:$0x7]
    %v1711 = vperm.slane %v1710, 0
    %v1776 = vunpack.c.l.b16 %v1646
    %v1777 = vunpack.c.l.b16 %v1647
    %v1778 = vunpack.c.l.b16 %v1648
    %v1779 = vunpack.c.l.b16 %v1649
    %v1780 = vunpack.c.l.b16 %v1650
    %v1781 = vunpack.c.l.b16 %v1651
    %v1782 = vunpack.c.l.b16 %v1652
    %v1783 = vunpack.c.l.b16 %v1653
    %v1784 = vunpack.c.l.b16 %v1654
    %v1785 = vunpack.c.l.b16 %v1655
    %v1786 = vunpack.c.l.b16 %v1656
    %v1787 = vunpack.c.l.b16 %v1657
    %v1788 = vunpack.c.l.b16 %v1658
    %v1789 = vunpack.c.l.b16 %v1659
    %v1790 = vunpack.c.l.b16 %v1660
    %v1791 = vunpack.c.l.b16 %v1661
    %v1792 = vunpack.c.l.b16 %v1662
    %v1793 = vunpack.c.l.b16 %v1663
    %v1794 = vunpack.c.l.b16 %v1664
    %v1795 = vunpack.c.l.b16 %v1665
    %v1796 = vunpack.c.l.b16 %v1666
    %v1797 = vunpack.c.l.b16 %v1667
    %v1798 = vunpack.c.l.b16 %v1668
    %v1799 = vunpack.c.l.b16 %v1669
    %v1800 = vunpack.c.l.b16 %v1670
    %v1801 = vunpack.c.l.b16 %v1671
    %v1802 = vunpack.c.l.b16 %v1672
    %v1803 = vunpack.c.l.b16 %v1673
    %v1804 = vunpack.c.l.b16 %v1674
    %v1805 = vunpack.c.l.b16 %v1675
    %v1806 = vunpack.c.l.b16 %v1676
    %v1807 = vunpack.c.l.b16 %v1677
    %v1808 = vunpack.c.l.b16 %v1678
    %v1809 = vunpack.c.l.b16 %v1679
    %v1810 = vunpack.c.l.b16 %v1680
    %v1811 = vunpack.c.l.b16 %v1681
    %v1812 = vunpack.c.l.b16 %v1682
    %v1813 = vunpack.c.l.b16 %v1683
    %v1814 = vunpack.c.l.b16 %v1684
    %v1815 = vunpack.c.l.b16 %v1685
    %v1816 = vunpack.c.l.b16 %v1686
    %v1817 = vunpack.c.l.b16 %v1687
    %v1818 = vunpack.c.l.b16 %v1688
    %v1819 = vunpack.c.l.b16 %v1689
    %v1820 = vunpack.c.l.b16 %v1690
    %v1821 = vunpack.c.l.b16 %v1691
    %v1822 = vunpack.c.l.b16 %v1692
    %v1823 = vunpack.c.l.b16 %v1693
    %v1824 = vunpack.c.l.b16 %v1694
    %v1825 = vunpack.c.l.b16 %v1695
    %v1826 = vunpack.c.l.b16 %v1696
    %v1827 = vunpack.c.l.b16 %v1697
    %v1828 = vunpack.c.l.b16 %v1698
    %v1829 = vunpack.c.l.b16 %v1699
    %v1830 = vunpack.c.l.b16 %v1700
    %v1831 = vunpack.c.l.b16 %v1701
    %v1832 = vunpack.c.l.b16 %v1702
    %v1833 = vunpack.c.l.b16 %v1703
    %v1834 = vunpack.c.l.b16 %v1704
    %v1835 = vunpack.c.l.b16 %v1705
    %v1836 = vunpack.c.l.b16 %v1706
    %v1837 = vunpack.c.l.b16 %v1707
    %v1838 = vunpack.c.l.b16 %v1708
    %v1839 = vunpack.c.l.b16 %v1709
    %v1840 = vpack.c.b16 %v1777, %v1776
    %v1841 = vpack.c.b16 %v1779, %v1778
    %v1842 = vpack.c.b16 %v1781, %v1780
    %v1843 = vpack.c.b16 %v1783, %v1782
    %v1844 = vpack.c.b16 %v1785, %v1784
    %v1845 = vpack.c.b16 %v1787, %v1786
    %v1846 = vpack.c.b16 %v1789, %v1788
    %v1847 = vpack.c.b16 %v1791, %v1790
    %v1848 = vpack.c.b16 %v1793, %v1792
    %v1849 = vpack.c.b16 %v1795, %v1794
    %v1850 = vpack.c.b16 %v1797, %v1796
    %v1851 = vpack.c.b16 %v1799, %v1798
    %v1852 = vpack.c.b16 %v1801, %v1800
    %v1853 = vpack.c.b16 %v1803, %v1802
    %v1854 = vpack.c.b16 %v1805, %v1804
    %v1855 = vpack.c.b16 %v1807, %v1806
    %v1856 = vpack.c.b16 %v1809, %v1808
    %v1857 = vpack.c.b16 %v1811, %v1810
    %v1858 = vpack.c.b16 %v1813, %v1812
    %v1859 = vpack.c.b16 %v1815, %v1814
    %v1860 = vpack.c.b16 %v1817, %v1816
    %v1861 = vpack.c.b16 %v1819, %v1818
    %v1862 = vpack.c.b16 %v1821, %v1820
    %v1863 = vpack.c.b16 %v1823, %v1822
    %v1864 = vpack.c.b16 %v1825, %v1824
    %v1865 = vpack.c.b16 %v1827, %v1826
    %v1866 = vpack.c.b16 %v1829, %v1828
    %v1867 = vpack.c.b16 %v1831, %v1830
    %v1868 = vpack.c.b16 %v1833, %v1832
    %v1869 = vpack.c.b16 %v1835, %v1834
    %v1870 = vpack.c.b16 %v1837, %v1836
    %v1871 = vpack.c.b16 %v1839, %v1838
    %1904 = vmatpush.bf16.msra.mxu0 %v1847
    %1905 = vmatpush.bf16.msra.mxu0 %v1846
    %1906 = vmatpush.bf16.msra.mxu0 %v1845
    %1907 = vmatpush.bf16.msra.mxu0 %v1844
    %1908 = vmatpush.bf16.msra.mxu0 %v1843
    %1909 = vmatpush.bf16.msra.mxu0 %v1842
    %1910 = vmatpush.bf16.msra.mxu0 %v1841
    %1911 = vmatpush.bf16.msra.mxu0 %v1840
    %1912 = vmatmul.bf16.gmra.mxu0 %v1639
    %v1913 = vpop.f32.mrf.mxu0
    %v1914 = vadd.f32 %v1711, %v1913
    %v1915 = vpop.f32.mrf.mxu0
    %1916 = vdwg.mxu0
    %1917 = vmatpush.bf16.msra.mxu0 %v1855
    %1918 = vmatpush.bf16.msra.mxu0 %v1854
    %1919 = vmatpush.bf16.msra.mxu0 %v1853
    %1920 = vmatpush.bf16.msra.mxu0 %v1852
    %1921 = vmatpush.bf16.msra.mxu0 %v1851
    %1922 = vmatpush.bf16.msra.mxu0 %v1850
    %1923 = vmatpush.bf16.msra.mxu0 %v1849
    %1924 = vmatpush.bf16.msra.mxu0 %v1848
    %1925 = vmatmul.bf16.gmra.mxu0 %v1640
    %v1926 = vpop.f32.mrf.mxu0
    %v1927 = vadd.f32 %v1914, %v1926
    %v1928 = vpop.f32.mrf.mxu0
    %1929 = vdwg.mxu0
    %1930 = vmatpush.bf16.msra.mxu0 %v1863
    %1931 = vmatpush.bf16.msra.mxu0 %v1862
    %1932 = vmatpush.bf16.msra.mxu0 %v1861
    %1933 = vmatpush.bf16.msra.mxu0 %v1860
    %1934 = vmatpush.bf16.msra.mxu0 %v1859
    %1935 = vmatpush.bf16.msra.mxu0 %v1858
    %1936 = vmatpush.bf16.msra.mxu0 %v1857
    %1937 = vmatpush.bf16.msra.mxu0 %v1856
    %1938 = vmatmul.bf16.gmra.mxu0 %v1641
    %v1939 = vpop.f32.mrf.mxu0
    %v1940 = vadd.f32 %v1927, %v1939
    %v1941 = vpop.f32.mrf.mxu0
    %1942 = vdwg.mxu0
    %1943 = vmatpush.bf16.msra.mxu0 %v1871
    %1944 = vmatpush.bf16.msra.mxu0 %v1870
    %1945 = vmatpush.bf16.msra.mxu0 %v1869
    %1946 = vmatpush.bf16.msra.mxu0 %v1868
    %1947 = vmatpush.bf16.msra.mxu0 %v1867
    %1948 = vmatpush.bf16.msra.mxu0 %v1866
    %1949 = vmatpush.bf16.msra.mxu0 %v1865
    %1950 = vmatpush.bf16.msra.mxu0 %v1864
    %1951 = vmatmul.bf16.gmra.mxu0 %v1642
    %v1952 = vpop.f32.mrf.mxu0
    %v1953 = vadd.f32 %v1940, %v1952
    %v1954 = vpop.f32.mrf.mxu0
    %1955 = vdwg.mxu0
    %v1956 = vrot.slane %v1953, 4
    %v1957 = vadd.f32 %v1953, %v1956
    %v1958 = vrot.slane %v1957, 2
    %v1959 = vadd.f32 %v1957, %v1958
    %v1960 = vrot.slane %v1959, 1
    %v1961 = vadd.f32 %v1959, %v1960
    %v1962 = vmul.f32 %v1961, %v406
    %v1963 = vsub.f32 %v1953, %v1962
    %v1964 = vmul.f32 %v1963, %v1963
    %v1965 = vrot.slane %v1964, 4
    %v1966 = vadd.f32 %v1964, %v1965
    %v1967 = vrot.slane %v1966, 2
    %v1968 = vadd.f32 %v1966, %v1967
    %v1969 = vrot.slane %v1968, 1
    %v1970 = vadd.f32 %v1968, %v1969
    %v1971 = vmul.f32 %v1970, %v406
    %v1972 = vadd.f32 %v1971, 1e-05
    %v1973 = vrsqrt.pop %v1972
    %v1974 = vmul.f32 %v1973, %v1972
    %v1975 = vmul.f32 %v1974, %v1973
    %v1976 = vmul.f32 0.5, %v1975
    %v1977 = vsub.f32 1.5, %v1976
    %v1978 = vmul.f32 %v1973, %v1977
    %vm1979 = vweird.f32 %v1972
    %vm1980 = vweird.f32 %v1973
    %vm1981 = vmor %vm1979, %vm1980
    %v1982 = vsel %vm1981, %v1973, %v1978
    %v1983 = vmul.f32 %v1963, %v1982
    %v1984 = vperm.slane %v1710, 1
    %v1985 = vmul.f32 %v1983, %v1984
    %v1986 = vperm.slane %v1710, 2
    %v1987 = vadd.f32 %v1985, %v1986
    %v1988 = vmul.f32 %v1987, 0.5
    %v1989 = vtanh.pop %v1988
    %v1990 = vmul.f32 %v1989, 0.5
    %v1991 = vadd.f32 %v1990, 0.5
    %1992 = vst [vmem:[%s4] sm:$0xff] %v1991
    %v1993 = vpack.c.bf16 %v1991, %v1991
    %s1994 = sshll.u32 %s121, 4
    %1995 = dma.done %s75, %s1994
    %v1996 = vld [vmem:[#allocation5] sm:$0xff]
    %v1997 = vld [vmem:[#allocation5 + $0x8] sm:$0xff]
    %v1998 = vld [vmem:[#allocation5 + $0x10] sm:$0xff]
    %v1999 = vld [vmem:[#allocation5 + $0x18] sm:$0xff]
    %v2000 = vld [vmem:[#allocation5 + $0x20] sm:$0xff]
    %v2001 = vld [vmem:[#allocation5 + $0x28] sm:$0xff]
    %v2002 = vld [vmem:[#allocation5 + $0x30] sm:$0xff]
    %v2003 = vld [vmem:[#allocation5 + $0x38] sm:$0xff]
    %v2004 = vld [vmem:[#allocation5 + $0x40] sm:$0xff]
    %v2005 = vld [vmem:[#allocation5 + $0x48] sm:$0xff]
    %v2006 = vld [vmem:[#allocation5 + $0x50] sm:$0xff]
    %v2007 = vld [vmem:[#allocation5 + $0x58] sm:$0xff]
    %v2008 = vld [vmem:[#allocation5 + $0x60] sm:$0xff]
    %v2009 = vld [vmem:[#allocation5 + $0x68] sm:$0xff]
    %v2010 = vld [vmem:[#allocation5 + $0x70] sm:$0xff]
    %v2011 = vld [vmem:[#allocation5 + $0x78] sm:$0xff]
    %v2012 = vld [vmem:[#allocation5 + $0x80] sm:$0xff]
    %v2013 = vld [vmem:[#allocation5 + $0x88] sm:$0xff]
    %v2014 = vld [vmem:[#allocation5 + $0x90] sm:$0xff]
    %v2015 = vld [vmem:[#allocation5 + $0x98] sm:$0xff]
    %v2016 = vld [vmem:[#allocation5 + $0xa0] sm:$0xff]
    %v2017 = vld [vmem:[#allocation5 + $0xa8] sm:$0xff]
    %v2018 = vld [vmem:[#allocation5 + $0xb0] sm:$0xff]
    %v2019 = vld [vmem:[#allocation5 + $0xb8] sm:$0xff]
    %v2020 = vld [vmem:[#allocation5 + $0xc0] sm:$0xff]
    %v2021 = vld [vmem:[#allocation5 + $0xc8] sm:$0xff]
    %v2022 = vld [vmem:[#allocation5 + $0xd0] sm:$0xff]
    %v2023 = vld [vmem:[#allocation5 + $0xd8] sm:$0xff]
    %v2024 = vld [vmem:[#allocation5 + $0xe0] sm:$0xff]
    %v2025 = vld [vmem:[#allocation5 + $0xe8] sm:$0xff]
    %v2026 = vld [vmem:[#allocation5 + $0xf0] sm:$0xff]
    %v2027 = vld [vmem:[#allocation5 + $0xf8] sm:$0xff]
    %v2028 = vld [vmem:[#allocation9 + $0x60] sm:$0x7]
    %v2029 = vld [vmem:[#allocation9 + $0x68] sm:$0x7]
    %v2030 = vld [vmem:[#allocation9 + $0x70] sm:$0x7]
    %v2031 = vld [vmem:[#allocation9 + $0x78] sm:$0x7]
    %v2032 = vperm.slane %v2028, 0
    %v2033 = vperm.slane %v2029, 0
    %v2034 = vperm.slane %v2030, 0
    %v2035 = vperm.slane %v2031, 0
    %v2068 = vunpack.c.l.b16 %v1996
    %v2069 = vunpack.c.h.b16 %v1996
    %v2070 = vunpack.c.l.b16 %v1997
    %v2071 = vunpack.c.h.b16 %v1997
    %v2072 = vunpack.c.l.b16 %v1998
    %v2073 = vunpack.c.h.b16 %v1998
    %v2074 = vunpack.c.l.b16 %v1999
    %v2075 = vunpack.c.h.b16 %v1999
    %v2076 = vunpack.c.l.b16 %v2000
    %v2077 = vunpack.c.h.b16 %v2000
    %v2078 = vunpack.c.l.b16 %v2001
    %v2079 = vunpack.c.h.b16 %v2001
    %v2080 = vunpack.c.l.b16 %v2002
    %v2081 = vunpack.c.h.b16 %v2002
    %v2082 = vunpack.c.l.b16 %v2003
    %v2083 = vunpack.c.h.b16 %v2003
    %v2084 = vunpack.c.l.b16 %v2004
    %v2085 = vunpack.c.h.b16 %v2004
    %v2086 = vunpack.c.l.b16 %v2005
    %v2087 = vunpack.c.h.b16 %v2005
    %v2088 = vunpack.c.l.b16 %v2006
    %v2089 = vunpack.c.h.b16 %v2006
    %v2090 = vunpack.c.l.b16 %v2007
    %v2091 = vunpack.c.h.b16 %v2007
    %v2092 = vunpack.c.l.b16 %v2008
    %v2093 = vunpack.c.h.b16 %v2008
    %v2094 = vunpack.c.l.b16 %v2009
    %v2095 = vunpack.c.h.b16 %v2009
    %v2096 = vunpack.c.l.b16 %v2010
    %v2097 = vunpack.c.h.b16 %v2010
    %v2098 = vunpack.c.l.b16 %v2011
    %v2099 = vunpack.c.h.b16 %v2011
    %v2100 = vunpack.c.l.b16 %v2012
    %v2101 = vunpack.c.h.b16 %v2012
    %v2102 = vunpack.c.l.b16 %v2013
    %v2103 = vunpack.c.h.b16 %v2013
    %v2104 = vunpack.c.l.b16 %v2014
    %v2105 = vunpack.c.h.b16 %v2014
    %v2106 = vunpack.c.l.b16 %v2015
    %v2107 = vunpack.c.h.b16 %v2015
    %v2108 = vunpack.c.l.b16 %v2016
    %v2109 = vunpack.c.h.b16 %v2016
    %v2110 = vunpack.c.l.b16 %v2017
    %v2111 = vunpack.c.h.b16 %v2017
    %v2112 = vunpack.c.l.b16 %v2018
    %v2113 = vunpack.c.h.b16 %v2018
    %v2114 = vunpack.c.l.b16 %v2019
    %v2115 = vunpack.c.h.b16 %v2019
    %v2116 = vunpack.c.l.b16 %v2020
    %v2117 = vunpack.c.h.b16 %v2020
    %v2118 = vunpack.c.l.b16 %v2021
    %v2119 = vunpack.c.h.b16 %v2021
    %v2120 = vunpack.c.l.b16 %v2022
    %v2121 = vunpack.c.h.b16 %v2022
    %v2122 = vunpack.c.l.b16 %v2023
    %v2123 = vunpack.c.h.b16 %v2023
    %v2124 = vunpack.c.l.b16 %v2024
    %v2125 = vunpack.c.h.b16 %v2024
    %v2126 = vunpack.c.l.b16 %v2025
    %v2127 = vunpack.c.h.b16 %v2025
    %v2128 = vunpack.c.l.b16 %v2026
    %v2129 = vunpack.c.h.b16 %v2026
    %v2130 = vunpack.c.l.b16 %v2027
    %v2131 = vunpack.c.h.b16 %v2027
    %v2132 = vpack.c.b16 %v2072, %v2068
    %v2133 = vpack.c.b16 %v2073, %v2069
    %v2134 = vpack.c.b16 %v2074, %v2070
    %v2135 = vpack.c.b16 %v2075, %v2071
    %v2136 = vpack.c.b16 %v2080, %v2076
    %v2137 = vpack.c.b16 %v2081, %v2077
    %v2138 = vpack.c.b16 %v2082, %v2078
    %v2139 = vpack.c.b16 %v2083, %v2079
    %v2140 = vpack.c.b16 %v2088, %v2084
    %v2141 = vpack.c.b16 %v2089, %v2085
    %v2142 = vpack.c.b16 %v2090, %v2086
    %v2143 = vpack.c.b16 %v2091, %v2087
    %v2144 = vpack.c.b16 %v2096, %v2092
    %v2145 = vpack.c.b16 %v2097, %v2093
    %v2146 = vpack.c.b16 %v2098, %v2094
    %v2147 = vpack.c.b16 %v2099, %v2095
    %v2148 = vpack.c.b16 %v2104, %v2100
    %v2149 = vpack.c.b16 %v2105, %v2101
    %v2150 = vpack.c.b16 %v2106, %v2102
    %v2151 = vpack.c.b16 %v2107, %v2103
    %v2152 = vpack.c.b16 %v2112, %v2108
    %v2153 = vpack.c.b16 %v2113, %v2109
    %v2154 = vpack.c.b16 %v2114, %v2110
    %v2155 = vpack.c.b16 %v2115, %v2111
    %v2156 = vpack.c.b16 %v2120, %v2116
    %v2157 = vpack.c.b16 %v2121, %v2117
    %v2158 = vpack.c.b16 %v2122, %v2118
    %v2159 = vpack.c.b16 %v2123, %v2119
    %v2160 = vpack.c.b16 %v2128, %v2124
    %v2161 = vpack.c.b16 %v2129, %v2125
    %v2162 = vpack.c.b16 %v2130, %v2126
    %v2163 = vpack.c.b16 %v2131, %v2127
    %2196 = vmatpush.bf16.msra.mxu0 %v2160
    %2197 = vmatpush.bf16.msra.mxu0 %v2156
    %2198 = vmatpush.bf16.msra.mxu0 %v2152
    %2199 = vmatpush.bf16.msra.mxu0 %v2148
    %2200 = vmatpush.bf16.msra.mxu0 %v2144
    %2201 = vmatpush.bf16.msra.mxu0 %v2140
    %2202 = vmatpush.bf16.msra.mxu0 %v2136
    %2203 = vmatpush.bf16.msra.mxu0 %v2132
    %2204 = vmatmul.bf16.gmra.mxu0 %v1993
    %v2205 = vpop.f32.mrf.mxu0
    %v2206 = vadd.f32 %v2032, %v2205
    %v2207 = vpop.f32.mrf.mxu0
    %2208 = vdwg.mxu0
    %2209 = vmatpush.bf16.msra.mxu0 %v2161
    %2210 = vmatpush.bf16.msra.mxu0 %v2157
    %2211 = vmatpush.bf16.msra.mxu0 %v2153
    %2212 = vmatpush.bf16.msra.mxu0 %v2149
    %2213 = vmatpush.bf16.msra.mxu0 %v2145
    %2214 = vmatpush.bf16.msra.mxu0 %v2141
    %2215 = vmatpush.bf16.msra.mxu0 %v2137
    %2216 = vmatpush.bf16.msra.mxu0 %v2133
    %2217 = vmatmul.bf16.gmra.mxu0 %v1993
    %v2218 = vpop.f32.mrf.mxu0
    %v2219 = vadd.f32 %v2033, %v2218
    %v2220 = vpop.f32.mrf.mxu0
    %2221 = vdwg.mxu0
    %2222 = vmatpush.bf16.msra.mxu0 %v2162
    %2223 = vmatpush.bf16.msra.mxu0 %v2158
    %2224 = vmatpush.bf16.msra.mxu0 %v2154
    %2225 = vmatpush.bf16.msra.mxu0 %v2150
    %2226 = vmatpush.bf16.msra.mxu0 %v2146
    %2227 = vmatpush.bf16.msra.mxu0 %v2142
    %2228 = vmatpush.bf16.msra.mxu0 %v2138
    %2229 = vmatpush.bf16.msra.mxu0 %v2134
    %2230 = vmatmul.bf16.gmra.mxu0 %v1993
    %v2231 = vpop.f32.mrf.mxu0
    %v2232 = vadd.f32 %v2034, %v2231
    %v2233 = vpop.f32.mrf.mxu0
    %2234 = vdwg.mxu0
    %2235 = vmatpush.bf16.msra.mxu0 %v2163
    %2236 = vmatpush.bf16.msra.mxu0 %v2159
    %2237 = vmatpush.bf16.msra.mxu0 %v2155
    %2238 = vmatpush.bf16.msra.mxu0 %v2151
    %2239 = vmatpush.bf16.msra.mxu0 %v2147
    %2240 = vmatpush.bf16.msra.mxu0 %v2143
    %2241 = vmatpush.bf16.msra.mxu0 %v2139
    %2242 = vmatpush.bf16.msra.mxu0 %v2135
    %2243 = vmatmul.bf16.gmra.mxu0 %v1993
    %v2244 = vpop.f32.mrf.mxu0
    %v2245 = vadd.f32 %v2035, %v2244
    %v2246 = vpop.f32.mrf.mxu0
    %2247 = vdwg.mxu0
    %v2248 = vrot.slane %v2206, 4
    %v2249 = vadd.f32 %v2206, %v2248
    %v2250 = vrot.slane %v2249, 2
    %v2251 = vadd.f32 %v2249, %v2250
    %v2252 = vrot.slane %v2251, 1
    %v2253 = vadd.f32 %v2251, %v2252
    %v2254 = vrot.slane %v2219, 4
    %v2255 = vadd.f32 %v2219, %v2254
    %v2256 = vrot.slane %v2255, 2
    %v2257 = vadd.f32 %v2255, %v2256
    %v2258 = vrot.slane %v2257, 1
    %v2259 = vadd.f32 %v2257, %v2258
    %v2260 = vrot.slane %v2232, 4
    %v2261 = vadd.f32 %v2232, %v2260
    %v2262 = vrot.slane %v2261, 2
    %v2263 = vadd.f32 %v2261, %v2262
    %v2264 = vrot.slane %v2263, 1
    %v2265 = vadd.f32 %v2263, %v2264
    %v2266 = vrot.slane %v2245, 4
    %v2267 = vadd.f32 %v2245, %v2266
    %v2268 = vrot.slane %v2267, 2
    %v2269 = vadd.f32 %v2267, %v2268
    %v2270 = vrot.slane %v2269, 1
    %v2271 = vadd.f32 %v2269, %v2270
    %v2272 = vmul.f32 %v2253, %v406
    %v2273 = vmul.f32 %v2259, %v406
    %v2274 = vmul.f32 %v2265, %v406
    %v2275 = vmul.f32 %v2271, %v406
    %v2276 = vsub.f32 %v2206, %v2272
    %v2277 = vsub.f32 %v2219, %v2273
    %v2278 = vsub.f32 %v2232, %v2274
    %v2279 = vsub.f32 %v2245, %v2275
    %v2280 = vmul.f32 %v2276, %v2276
    %v2281 = vmul.f32 %v2277, %v2277
    %v2282 = vmul.f32 %v2278, %v2278
    %v2283 = vmul.f32 %v2279, %v2279
    %v2284 = vrot.slane %v2280, 4
    %v2285 = vadd.f32 %v2280, %v2284
    %v2286 = vrot.slane %v2285, 2
    %v2287 = vadd.f32 %v2285, %v2286
    %v2288 = vrot.slane %v2287, 1
    %v2289 = vadd.f32 %v2287, %v2288
    %v2290 = vrot.slane %v2281, 4
    %v2291 = vadd.f32 %v2281, %v2290
    %v2292 = vrot.slane %v2291, 2
    %v2293 = vadd.f32 %v2291, %v2292
    %v2294 = vrot.slane %v2293, 1
    %v2295 = vadd.f32 %v2293, %v2294
    %v2296 = vrot.slane %v2282, 4
    %v2297 = vadd.f32 %v2282, %v2296
    %v2298 = vrot.slane %v2297, 2
    %v2299 = vadd.f32 %v2297, %v2298
    %v2300 = vrot.slane %v2299, 1
    %v2301 = vadd.f32 %v2299, %v2300
    %v2302 = vrot.slane %v2283, 4
    %v2303 = vadd.f32 %v2283, %v2302
    %v2304 = vrot.slane %v2303, 2
    %v2305 = vadd.f32 %v2303, %v2304
    %v2306 = vrot.slane %v2305, 1
    %v2307 = vadd.f32 %v2305, %v2306
    %v2308 = vmul.f32 %v2289, %v406
    %v2309 = vmul.f32 %v2295, %v406
    %v2310 = vmul.f32 %v2301, %v406
    %v2311 = vmul.f32 %v2307, %v406
    %v2312 = vadd.f32 %v2308, 1e-05
    %v2313 = vadd.f32 %v2309, 1e-05
    %v2314 = vadd.f32 %v2310, 1e-05
    %v2315 = vadd.f32 %v2311, 1e-05
    %v2316 = vrsqrt.pop %v2312
    %v2317 = vmul.f32 %v2316, %v2312
    %v2318 = vmul.f32 %v2317, %v2316
    %v2319 = vmul.f32 0.5, %v2318
    %v2320 = vsub.f32 1.5, %v2319
    %v2321 = vmul.f32 %v2316, %v2320
    %vm2322 = vweird.f32 %v2312
    %vm2323 = vweird.f32 %v2316
    %vm2324 = vmor %vm2322, %vm2323
    %v2325 = vsel %vm2324, %v2316, %v2321
    %v2326 = vrsqrt.pop %v2313
    %v2327 = vmul.f32 %v2326, %v2313
    %v2328 = vmul.f32 %v2327, %v2326
    %v2329 = vmul.f32 0.5, %v2328
    %v2330 = vsub.f32 1.5, %v2329
    %v2331 = vmul.f32 %v2326, %v2330
    %vm2332 = vweird.f32 %v2313
    %vm2333 = vweird.f32 %v2326
    %vm2334 = vmor %vm2332, %vm2333
    %v2335 = vsel %vm2334, %v2326, %v2331
    %v2336 = vrsqrt.pop %v2314
    %v2337 = vmul.f32 %v2336, %v2314
    %v2338 = vmul.f32 %v2337, %v2336
    %v2339 = vmul.f32 0.5, %v2338
    %v2340 = vsub.f32 1.5, %v2339
    %v2341 = vmul.f32 %v2336, %v2340
    %vm2342 = vweird.f32 %v2314
    %vm2343 = vweird.f32 %v2336
    %vm2344 = vmor %vm2342, %vm2343
    %v2345 = vsel %vm2344, %v2336, %v2341
    %v2346 = vrsqrt.pop %v2315
    %v2347 = vmul.f32 %v2346, %v2315
    %v2348 = vmul.f32 %v2347, %v2346
    %v2349 = vmul.f32 0.5, %v2348
    %v2350 = vsub.f32 1.5, %v2349
    %v2351 = vmul.f32 %v2346, %v2350
    %vm2352 = vweird.f32 %v2315
    %vm2353 = vweird.f32 %v2346
    %vm2354 = vmor %vm2352, %vm2353
    %v2355 = vsel %vm2354, %v2346, %v2351
    %v2356 = vmul.f32 %v2276, %v2325
    %v2357 = vmul.f32 %v2277, %v2335
    %v2358 = vmul.f32 %v2278, %v2345
    %v2359 = vmul.f32 %v2279, %v2355
    %v2360 = vperm.slane %v2028, 1
    %v2361 = vperm.slane %v2029, 1
    %v2362 = vperm.slane %v2030, 1
    %v2363 = vperm.slane %v2031, 1
    %v2364 = vmul.f32 %v2356, %v2360
    %v2365 = vmul.f32 %v2357, %v2361
    %v2366 = vmul.f32 %v2358, %v2362
    %v2367 = vmul.f32 %v2359, %v2363
    %v2368 = vperm.slane %v2028, 2
    %v2369 = vperm.slane %v2029, 2
    %v2370 = vperm.slane %v2030, 2
    %v2371 = vperm.slane %v2031, 2
    %v2372 = vadd.f32 %v2364, %v2368
    %v2373 = vadd.f32 %v2365, %v2369
    %v2374 = vadd.f32 %v2366, %v2370
    %v2375 = vadd.f32 %v2367, %v2371
    %v2376 = vmax.f32 %v2372, 0.0
    %v2377 = vmax.f32 %v2373, 0.0
    %v2378 = vmax.f32 %v2374, 0.0
    %v2379 = vmax.f32 %v2375, 0.0
    %v2380 = vpack.c.bf16 %v2376, %v2376
    %v2381 = vpack.c.bf16 %v2377, %v2377
    %v2382 = vpack.c.bf16 %v2378, %v2378
    %v2383 = vpack.c.bf16 %v2379, %v2379
    %s2384 = sshll.u32 %s520, 4
    %2385 = dma.done %s90, %s2384
    %v2386 = vld [vmem:[#allocation6] sm:$0xff]
    %v2387 = vld [vmem:[#allocation6 + $0x8] sm:$0xff]
    %v2388 = vld [vmem:[#allocation6 + $0x10] sm:$0xff]
    %v2389 = vld [vmem:[#allocation6 + $0x18] sm:$0xff]
    %v2390 = vld [vmem:[#allocation6 + $0x20] sm:$0xff]
    %v2391 = vld [vmem:[#allocation6 + $0x28] sm:$0xff]
    %v2392 = vld [vmem:[#allocation6 + $0x30] sm:$0xff]
    %v2393 = vld [vmem:[#allocation6 + $0x38] sm:$0xff]
    %v2394 = vld [vmem:[#allocation6 + $0x40] sm:$0xff]
    %v2395 = vld [vmem:[#allocation6 + $0x48] sm:$0xff]
    %v2396 = vld [vmem:[#allocation6 + $0x50] sm:$0xff]
    %v2397 = vld [vmem:[#allocation6 + $0x58] sm:$0xff]
    %v2398 = vld [vmem:[#allocation6 + $0x60] sm:$0xff]
    %v2399 = vld [vmem:[#allocation6 + $0x68] sm:$0xff]
    %v2400 = vld [vmem:[#allocation6 + $0x70] sm:$0xff]
    %v2401 = vld [vmem:[#allocation6 + $0x78] sm:$0xff]
    %v2402 = vld [vmem:[#allocation6 + $0x80] sm:$0xff]
    %v2403 = vld [vmem:[#allocation6 + $0x88] sm:$0xff]
    %v2404 = vld [vmem:[#allocation6 + $0x90] sm:$0xff]
    %v2405 = vld [vmem:[#allocation6 + $0x98] sm:$0xff]
    %v2406 = vld [vmem:[#allocation6 + $0xa0] sm:$0xff]
    %v2407 = vld [vmem:[#allocation6 + $0xa8] sm:$0xff]
    %v2408 = vld [vmem:[#allocation6 + $0xb0] sm:$0xff]
    %v2409 = vld [vmem:[#allocation6 + $0xb8] sm:$0xff]
    %v2410 = vld [vmem:[#allocation6 + $0xc0] sm:$0xff]
    %v2411 = vld [vmem:[#allocation6 + $0xc8] sm:$0xff]
    %v2412 = vld [vmem:[#allocation6 + $0xd0] sm:$0xff]
    %v2413 = vld [vmem:[#allocation6 + $0xd8] sm:$0xff]
    %v2414 = vld [vmem:[#allocation6 + $0xe0] sm:$0xff]
    %v2415 = vld [vmem:[#allocation6 + $0xe8] sm:$0xff]
    %v2416 = vld [vmem:[#allocation6 + $0xf0] sm:$0xff]
    %v2417 = vld [vmem:[#allocation6 + $0xf8] sm:$0xff]
    %v2418 = vld [vmem:[#allocation6 + $0x100] sm:$0xff]
    %v2419 = vld [vmem:[#allocation6 + $0x108] sm:$0xff]
    %v2420 = vld [vmem:[#allocation6 + $0x110] sm:$0xff]
    %v2421 = vld [vmem:[#allocation6 + $0x118] sm:$0xff]
    %v2422 = vld [vmem:[#allocation6 + $0x120] sm:$0xff]
    %v2423 = vld [vmem:[#allocation6 + $0x128] sm:$0xff]
    %v2424 = vld [vmem:[#allocation6 + $0x130] sm:$0xff]
    %v2425 = vld [vmem:[#allocation6 + $0x138] sm:$0xff]
    %v2426 = vld [vmem:[#allocation6 + $0x140] sm:$0xff]
    %v2427 = vld [vmem:[#allocation6 + $0x148] sm:$0xff]
    %v2428 = vld [vmem:[#allocation6 + $0x150] sm:$0xff]
    %v2429 = vld [vmem:[#allocation6 + $0x158] sm:$0xff]
    %v2430 = vld [vmem:[#allocation6 + $0x160] sm:$0xff]
    %v2431 = vld [vmem:[#allocation6 + $0x168] sm:$0xff]
    %v2432 = vld [vmem:[#allocation6 + $0x170] sm:$0xff]
    %v2433 = vld [vmem:[#allocation6 + $0x178] sm:$0xff]
    %v2434 = vld [vmem:[#allocation6 + $0x180] sm:$0xff]
    %v2435 = vld [vmem:[#allocation6 + $0x188] sm:$0xff]
    %v2436 = vld [vmem:[#allocation6 + $0x190] sm:$0xff]
    %v2437 = vld [vmem:[#allocation6 + $0x198] sm:$0xff]
    %v2438 = vld [vmem:[#allocation6 + $0x1a0] sm:$0xff]
    %v2439 = vld [vmem:[#allocation6 + $0x1a8] sm:$0xff]
    %v2440 = vld [vmem:[#allocation6 + $0x1b0] sm:$0xff]
    %v2441 = vld [vmem:[#allocation6 + $0x1b8] sm:$0xff]
    %v2442 = vld [vmem:[#allocation6 + $0x1c0] sm:$0xff]
    %v2443 = vld [vmem:[#allocation6 + $0x1c8] sm:$0xff]
    %v2444 = vld [vmem:[#allocation6 + $0x1d0] sm:$0xff]
    %v2445 = vld [vmem:[#allocation6 + $0x1d8] sm:$0xff]
    %v2446 = vld [vmem:[#allocation6 + $0x1e0] sm:$0xff]
    %v2447 = vld [vmem:[#allocation6 + $0x1e8] sm:$0xff]
    %v2448 = vld [vmem:[#allocation6 + $0x1f0] sm:$0xff]
    %v2449 = vld [vmem:[#allocation6 + $0x1f8] sm:$0xff]
    %v2450 = vld [vmem:[#allocation6 + $0x200] sm:$0xff]
    %v2451 = vld [vmem:[#allocation6 + $0x208] sm:$0xff]
    %v2452 = vld [vmem:[#allocation6 + $0x210] sm:$0xff]
    %v2453 = vld [vmem:[#allocation6 + $0x218] sm:$0xff]
    %v2454 = vld [vmem:[#allocation6 + $0x220] sm:$0xff]
    %v2455 = vld [vmem:[#allocation6 + $0x228] sm:$0xff]
    %v2456 = vld [vmem:[#allocation6 + $0x230] sm:$0xff]
    %v2457 = vld [vmem:[#allocation6 + $0x238] sm:$0xff]
    %v2458 = vld [vmem:[#allocation6 + $0x240] sm:$0xff]
    %v2459 = vld [vmem:[#allocation6 + $0x248] sm:$0xff]
    %v2460 = vld [vmem:[#allocation6 + $0x250] sm:$0xff]
    %v2461 = vld [vmem:[#allocation6 + $0x258] sm:$0xff]
    %v2462 = vld [vmem:[#allocation6 + $0x260] sm:$0xff]
    %v2463 = vld [vmem:[#allocation6 + $0x268] sm:$0xff]
    %v2464 = vld [vmem:[#allocation6 + $0x270] sm:$0xff]
    %v2465 = vld [vmem:[#allocation6 + $0x278] sm:$0xff]
    %v2466 = vld [vmem:[#allocation6 + $0x280] sm:$0xff]
    %v2467 = vld [vmem:[#allocation6 + $0x288] sm:$0xff]
    %v2468 = vld [vmem:[#allocation6 + $0x290] sm:$0xff]
    %v2469 = vld [vmem:[#allocation6 + $0x298] sm:$0xff]
    %v2470 = vld [vmem:[#allocation6 + $0x2a0] sm:$0xff]
    %v2471 = vld [vmem:[#allocation6 + $0x2a8] sm:$0xff]
    %v2472 = vld [vmem:[#allocation6 + $0x2b0] sm:$0xff]
    %v2473 = vld [vmem:[#allocation6 + $0x2b8] sm:$0xff]
    %v2474 = vld [vmem:[#allocation6 + $0x2c0] sm:$0xff]
    %v2475 = vld [vmem:[#allocation6 + $0x2c8] sm:$0xff]
    %v2476 = vld [vmem:[#allocation6 + $0x2d0] sm:$0xff]
    %v2477 = vld [vmem:[#allocation6 + $0x2d8] sm:$0xff]
    %v2478 = vld [vmem:[#allocation6 + $0x2e0] sm:$0xff]
    %v2479 = vld [vmem:[#allocation6 + $0x2e8] sm:$0xff]
    %v2480 = vld [vmem:[#allocation6 + $0x2f0] sm:$0xff]
    %v2481 = vld [vmem:[#allocation6 + $0x2f8] sm:$0xff]
    %v2482 = vld [vmem:[#allocation6 + $0x300] sm:$0xff]
    %v2483 = vld [vmem:[#allocation6 + $0x308] sm:$0xff]
    %v2484 = vld [vmem:[#allocation6 + $0x310] sm:$0xff]
    %v2485 = vld [vmem:[#allocation6 + $0x318] sm:$0xff]
    %v2486 = vld [vmem:[#allocation6 + $0x320] sm:$0xff]
    %v2487 = vld [vmem:[#allocation6 + $0x328] sm:$0xff]
    %v2488 = vld [vmem:[#allocation6 + $0x330] sm:$0xff]
    %v2489 = vld [vmem:[#allocation6 + $0x338] sm:$0xff]
    %v2490 = vld [vmem:[#allocation6 + $0x340] sm:$0xff]
    %v2491 = vld [vmem:[#allocation6 + $0x348] sm:$0xff]
    %v2492 = vld [vmem:[#allocation6 + $0x350] sm:$0xff]
    %v2493 = vld [vmem:[#allocation6 + $0x358] sm:$0xff]
    %v2494 = vld [vmem:[#allocation6 + $0x360] sm:$0xff]
    %v2495 = vld [vmem:[#allocation6 + $0x368] sm:$0xff]
    %v2496 = vld [vmem:[#allocation6 + $0x370] sm:$0xff]
    %v2497 = vld [vmem:[#allocation6 + $0x378] sm:$0xff]
    %v2498 = vld [vmem:[#allocation6 + $0x380] sm:$0xff]
    %v2499 = vld [vmem:[#allocation6 + $0x388] sm:$0xff]
    %v2500 = vld [vmem:[#allocation6 + $0x390] sm:$0xff]
    %v2501 = vld [vmem:[#allocation6 + $0x398] sm:$0xff]
    %v2502 = vld [vmem:[#allocation6 + $0x3a0] sm:$0xff]
    %v2503 = vld [vmem:[#allocation6 + $0x3a8] sm:$0xff]
    %v2504 = vld [vmem:[#allocation6 + $0x3b0] sm:$0xff]
    %v2505 = vld [vmem:[#allocation6 + $0x3b8] sm:$0xff]
    %v2506 = vld [vmem:[#allocation6 + $0x3c0] sm:$0xff]
    %v2507 = vld [vmem:[#allocation6 + $0x3c8] sm:$0xff]
    %v2508 = vld [vmem:[#allocation6 + $0x3d0] sm:$0xff]
    %v2509 = vld [vmem:[#allocation6 + $0x3d8] sm:$0xff]
    %v2510 = vld [vmem:[#allocation6 + $0x3e0] sm:$0xff]
    %v2511 = vld [vmem:[#allocation6 + $0x3e8] sm:$0xff]
    %v2512 = vld [vmem:[#allocation6 + $0x3f0] sm:$0xff]
    %v2513 = vld [vmem:[#allocation6 + $0x3f8] sm:$0xff]
    %v2514 = vld [vmem:[#allocation9 + $0x80] sm:$0x7]
    %v2515 = vld [vmem:[#allocation9 + $0x88] sm:$0x7]
    %v2516 = vld [vmem:[#allocation9 + $0x90] sm:$0x7]
    %v2517 = vld [vmem:[#allocation9 + $0x98] sm:$0x7]
    %v2518 = vperm.slane %v2514, 0
    %v2519 = vperm.slane %v2515, 0
    %v2520 = vperm.slane %v2516, 0
    %v2521 = vperm.slane %v2517, 0
    %v2650 = vunpack.c.l.b16 %v2386
    %v2651 = vunpack.c.h.b16 %v2386
    %v2652 = vunpack.c.l.b16 %v2387
    %v2653 = vunpack.c.h.b16 %v2387
    %v2654 = vunpack.c.l.b16 %v2388
    %v2655 = vunpack.c.h.b16 %v2388
    %v2656 = vunpack.c.l.b16 %v2389
    %v2657 = vunpack.c.h.b16 %v2389
    %v2658 = vunpack.c.l.b16 %v2390
    %v2659 = vunpack.c.h.b16 %v2390
    %v2660 = vunpack.c.l.b16 %v2391
    %v2661 = vunpack.c.h.b16 %v2391
    %v2662 = vunpack.c.l.b16 %v2392
    %v2663 = vunpack.c.h.b16 %v2392
    %v2664 = vunpack.c.l.b16 %v2393
    %v2665 = vunpack.c.h.b16 %v2393
    %v2666 = vunpack.c.l.b16 %v2394
    %v2667 = vunpack.c.h.b16 %v2394
    %v2668 = vunpack.c.l.b16 %v2395
    %v2669 = vunpack.c.h.b16 %v2395
    %v2670 = vunpack.c.l.b16 %v2396
    %v2671 = vunpack.c.h.b16 %v2396
    %v2672 = vunpack.c.l.b16 %v2397
    %v2673 = vunpack.c.h.b16 %v2397
    %v2674 = vunpack.c.l.b16 %v2398
    %v2675 = vunpack.c.h.b16 %v2398
    %v2676 = vunpack.c.l.b16 %v2399
    %v2677 = vunpack.c.h.b16 %v2399
    %v2678 = vunpack.c.l.b16 %v2400
    %v2679 = vunpack.c.h.b16 %v2400
    %v2680 = vunpack.c.l.b16 %v2401
    %v2681 = vunpack.c.h.b16 %v2401
    %v2682 = vunpack.c.l.b16 %v2402
    %v2683 = vunpack.c.h.b16 %v2402
    %v2684 = vunpack.c.l.b16 %v2403
    %v2685 = vunpack.c.h.b16 %v2403
    %v2686 = vunpack.c.l.b16 %v2404
    %v2687 = vunpack.c.h.b16 %v2404
    %v2688 = vunpack.c.l.b16 %v2405
    %v2689 = vunpack.c.h.b16 %v2405
    %v2690 = vunpack.c.l.b16 %v2406
    %v2691 = vunpack.c.h.b16 %v2406
    %v2692 = vunpack.c.l.b16 %v2407
    %v2693 = vunpack.c.h.b16 %v2407
    %v2694 = vunpack.c.l.b16 %v2408
    %v2695 = vunpack.c.h.b16 %v2408
    %v2696 = vunpack.c.l.b16 %v2409
    %v2697 = vunpack.c.h.b16 %v2409
    %v2698 = vunpack.c.l.b16 %v2410
    %v2699 = vunpack.c.h.b16 %v2410
    %v2700 = vunpack.c.l.b16 %v2411
    %v2701 = vunpack.c.h.b16 %v2411
    %v2702 = vunpack.c.l.b16 %v2412
    %v2703 = vunpack.c.h.b16 %v2412
    %v2704 = vunpack.c.l.b16 %v2413
    %v2705 = vunpack.c.h.b16 %v2413
    %v2706 = vunpack.c.l.b16 %v2414
    %v2707 = vunpack.c.h.b16 %v2414
    %v2708 = vunpack.c.l.b16 %v2415
    %v2709 = vunpack.c.h.b16 %v2415
    %v2710 = vunpack.c.l.b16 %v2416
    %v2711 = vunpack.c.h.b16 %v2416
    %v2712 = vunpack.c.l.b16 %v2417
    %v2713 = vunpack.c.h.b16 %v2417
    %v2714 = vunpack.c.l.b16 %v2418
    %v2715 = vunpack.c.h.b16 %v2418
    %v2716 = vunpack.c.l.b16 %v2419
    %v2717 = vunpack.c.h.b16 %v2419
    %v2718 = vunpack.c.l.b16 %v2420
    %v2719 = vunpack.c.h.b16 %v2420
    %v2720 = vunpack.c.l.b16 %v2421
    %v2721 = vunpack.c.h.b16 %v2421
    %v2722 = vunpack.c.l.b16 %v2422
    %v2723 = vunpack.c.h.b16 %v2422
    %v2724 = vunpack.c.l.b16 %v2423
    %v2725 = vunpack.c.h.b16 %v2423
    %v2726 = vunpack.c.l.b16 %v2424
    %v2727 = vunpack.c.h.b16 %v2424
    %v2728 = vunpack.c.l.b16 %v2425
    %v2729 = vunpack.c.h.b16 %v2425
    %v2730 = vunpack.c.l.b16 %v2426
    %v2731 = vunpack.c.h.b16 %v2426
    %v2732 = vunpack.c.l.b16 %v2427
    %v2733 = vunpack.c.h.b16 %v2427
    %v2734 = vunpack.c.l.b16 %v2428
    %v2735 = vunpack.c.h.b16 %v2428
    %v2736 = vunpack.c.l.b16 %v2429
    %v2737 = vunpack.c.h.b16 %v2429
    %v2738 = vunpack.c.l.b16 %v2430
    %v2739 = vunpack.c.h.b16 %v2430
    %v2740 = vunpack.c.l.b16 %v2431
    %v2741 = vunpack.c.h.b16 %v2431
    %v2742 = vunpack.c.l.b16 %v2432
    %v2743 = vunpack.c.h.b16 %v2432
    %v2744 = vunpack.c.l.b16 %v2433
    %v2745 = vunpack.c.h.b16 %v2433
    %v2746 = vunpack.c.l.b16 %v2434
    %v2747 = vunpack.c.h.b16 %v2434
    %v2748 = vunpack.c.l.b16 %v2435
    %v2749 = vunpack.c.h.b16 %v2435
    %v2750 = vunpack.c.l.b16 %v2436
    %v2751 = vunpack.c.h.b16 %v2436
    %v2752 = vunpack.c.l.b16 %v2437
    %v2753 = vunpack.c.h.b16 %v2437
    %v2754 = vunpack.c.l.b16 %v2438
    %v2755 = vunpack.c.h.b16 %v2438
    %v2756 = vunpack.c.l.b16 %v2439
    %v2757 = vunpack.c.h.b16 %v2439
    %v2758 = vunpack.c.l.b16 %v2440
    %v2759 = vunpack.c.h.b16 %v2440
    %v2760 = vunpack.c.l.b16 %v2441
    %v2761 = vunpack.c.h.b16 %v2441
    %v2762 = vunpack.c.l.b16 %v2442
    %v2763 = vunpack.c.h.b16 %v2442
    %v2764 = vunpack.c.l.b16 %v2443
    %v2765 = vunpack.c.h.b16 %v2443
    %v2766 = vunpack.c.l.b16 %v2444
    %v2767 = vunpack.c.h.b16 %v2444
    %v2768 = vunpack.c.l.b16 %v2445
    %v2769 = vunpack.c.h.b16 %v2445
    %v2770 = vunpack.c.l.b16 %v2446
    %v2771 = vunpack.c.h.b16 %v2446
    %v2772 = vunpack.c.l.b16 %v2447
    %v2773 = vunpack.c.h.b16 %v2447
    %v2774 = vunpack.c.l.b16 %v2448
    %v2775 = vunpack.c.h.b16 %v2448
    %v2776 = vunpack.c.l.b16 %v2449
    %v2777 = vunpack.c.h.b16 %v2449
    %v2778 = vunpack.c.l.b16 %v2450
    %v2779 = vunpack.c.h.b16 %v2450
    %v2780 = vunpack.c.l.b16 %v2451
    %v2781 = vunpack.c.h.b16 %v2451
    %v2782 = vunpack.c.l.b16 %v2452
    %v2783 = vunpack.c.h.b16 %v2452
    %v2784 = vunpack.c.l.b16 %v2453
    %v2785 = vunpack.c.h.b16 %v2453
    %v2786 = vunpack.c.l.b16 %v2454
    %v2787 = vunpack.c.h.b16 %v2454
    %v2788 = vunpack.c.l.b16 %v2455
    %v2789 = vunpack.c.h.b16 %v2455
    %v2790 = vunpack.c.l.b16 %v2456
    %v2791 = vunpack.c.h.b16 %v2456
    %v2792 = vunpack.c.l.b16 %v2457
    %v2793 = vunpack.c.h.b16 %v2457
    %v2794 = vunpack.c.l.b16 %v2458
    %v2795 = vunpack.c.h.b16 %v2458
    %v2796 = vunpack.c.l.b16 %v2459
    %v2797 = vunpack.c.h.b16 %v2459
    %v2798 = vunpack.c.l.b16 %v2460
    %v2799 = vunpack.c.h.b16 %v2460
    %v2800 = vunpack.c.l.b16 %v2461
    %v2801 = vunpack.c.h.b16 %v2461
    %v2802 = vunpack.c.l.b16 %v2462
    %v2803 = vunpack.c.h.b16 %v2462
    %v2804 = vunpack.c.l.b16 %v2463
    %v2805 = vunpack.c.h.b16 %v2463
    %v2806 = vunpack.c.l.b16 %v2464
    %v2807 = vunpack.c.h.b16 %v2464
    %v2808 = vunpack.c.l.b16 %v2465
    %v2809 = vunpack.c.h.b16 %v2465
    %v2810 = vunpack.c.l.b16 %v2466
    %v2811 = vunpack.c.h.b16 %v2466
    %v2812 = vunpack.c.l.b16 %v2467
    %v2813 = vunpack.c.h.b16 %v2467
    %v2814 = vunpack.c.l.b16 %v2468
    %v2815 = vunpack.c.h.b16 %v2468
    %v2816 = vunpack.c.l.b16 %v2469
    %v2817 = vunpack.c.h.b16 %v2469
    %v2818 = vunpack.c.l.b16 %v2470
    %v2819 = vunpack.c.h.b16 %v2470
    %v2820 = vunpack.c.l.b16 %v2471
    %v2821 = vunpack.c.h.b16 %v2471
    %v2822 = vunpack.c.l.b16 %v2472
    %v2823 = vunpack.c.h.b16 %v2472
    %v2824 = vunpack.c.l.b16 %v2473
    %v2825 = vunpack.c.h.b16 %v2473
    %v2826 = vunpack.c.l.b16 %v2474
    %v2827 = vunpack.c.h.b16 %v2474
    %v2828 = vunpack.c.l.b16 %v2475
    %v2829 = vunpack.c.h.b16 %v2475
    %v2830 = vunpack.c.l.b16 %v2476
    %v2831 = vunpack.c.h.b16 %v2476
    %v2832 = vunpack.c.l.b16 %v2477
    %v2833 = vunpack.c.h.b16 %v2477
    %v2834 = vunpack.c.l.b16 %v2478
    %v2835 = vunpack.c.h.b16 %v2478
    %v2836 = vunpack.c.l.b16 %v2479
    %v2837 = vunpack.c.h.b16 %v2479
    %v2838 = vunpack.c.l.b16 %v2480
    %v2839 = vunpack.c.h.b16 %v2480
    %v2840 = vunpack.c.l.b16 %v2481
    %v2841 = vunpack.c.h.b16 %v2481
    %v2842 = vunpack.c.l.b16 %v2482
    %v2843 = vunpack.c.h.b16 %v2482
    %v2844 = vunpack.c.l.b16 %v2483
    %v2845 = vunpack.c.h.b16 %v2483
    %v2846 = vunpack.c.l.b16 %v2484
    %v2847 = vunpack.c.h.b16 %v2484
    %v2848 = vunpack.c.l.b16 %v2485
    %v2849 = vunpack.c.h.b16 %v2485
    %v2850 = vunpack.c.l.b16 %v2486
    %v2851 = vunpack.c.h.b16 %v2486
    %v2852 = vunpack.c.l.b16 %v2487
    %v2853 = vunpack.c.h.b16 %v2487
    %v2854 = vunpack.c.l.b16 %v2488
    %v2855 = vunpack.c.h.b16 %v2488
    %v2856 = vunpack.c.l.b16 %v2489
    %v2857 = vunpack.c.h.b16 %v2489
    %v2858 = vunpack.c.l.b16 %v2490
    %v2859 = vunpack.c.h.b16 %v2490
    %v2860 = vunpack.c.l.b16 %v2491
    %v2861 = vunpack.c.h.b16 %v2491
    %v2862 = vunpack.c.l.b16 %v2492
    %v2863 = vunpack.c.h.b16 %v2492
    %v2864 = vunpack.c.l.b16 %v2493
    %v2865 = vunpack.c.h.b16 %v2493
    %v2866 = vunpack.c.l.b16 %v2494
    %v2867 = vunpack.c.h.b16 %v2494
    %v2868 = vunpack.c.l.b16 %v2495
    %v2869 = vunpack.c.h.b16 %v2495
    %v2870 = vunpack.c.l.b16 %v2496
    %v2871 = vunpack.c.h.b16 %v2496
    %v2872 = vunpack.c.l.b16 %v2497
    %v2873 = vunpack.c.h.b16 %v2497
    %v2874 = vunpack.c.l.b16 %v2498
    %v2875 = vunpack.c.h.b16 %v2498
    %v2876 = vunpack.c.l.b16 %v2499
    %v2877 = vunpack.c.h.b16 %v2499
    %v2878 = vunpack.c.l.b16 %v2500
    %v2879 = vunpack.c.h.b16 %v2500
    %v2880 = vunpack.c.l.b16 %v2501
    %v2881 = vunpack.c.h.b16 %v2501
    %v2882 = vunpack.c.l.b16 %v2502
    %v2883 = vunpack.c.h.b16 %v2502
    %v2884 = vunpack.c.l.b16 %v2503
    %v2885 = vunpack.c.h.b16 %v2503
    %v2886 = vunpack.c.l.b16 %v2504
    %v2887 = vunpack.c.h.b16 %v2504
    %v2888 = vunpack.c.l.b16 %v2505
    %v2889 = vunpack.c.h.b16 %v2505
    %v2890 = vunpack.c.l.b16 %v2506
    %v2891 = vunpack.c.h.b16 %v2506
    %v2892 = vunpack.c.l.b16 %v2507
    %v2893 = vunpack.c.h.b16 %v2507
    %v2894 = vunpack.c.l.b16 %v2508
    %v2895 = vunpack.c.h.b16 %v2508
    %v2896 = vunpack.c.l.b16 %v2509
    %v2897 = vunpack.c.h.b16 %v2509
    %v2898 = vunpack.c.l.b16 %v2510
    %v2899 = vunpack.c.h.b16 %v2510
    %v2900 = vunpack.c.l.b16 %v2511
    %v2901 = vunpack.c.h.b16 %v2511
    %v2902 = vunpack.c.l.b16 %v2512
    %v2903 = vunpack.c.h.b16 %v2512
    %v2904 = vunpack.c.l.b16 %v2513
    %v2905 = vunpack.c.h.b16 %v2513
    %v2906 = vpack.c.b16 %v2654, %v2650
    %v2907 = vpack.c.b16 %v2655, %v2651
    %v2908 = vpack.c.b16 %v2656, %v2652
    %v2909 = vpack.c.b16 %v2657, %v2653
    %v2910 = vpack.c.b16 %v2662, %v2658
    %v2911 = vpack.c.b16 %v2663, %v2659
    %v2912 = vpack.c.b16 %v2664, %v2660
    %v2913 = vpack.c.b16 %v2665, %v2661
    %v2914 = vpack.c.b16 %v2670, %v2666
    %v2915 = vpack.c.b16 %v2671, %v2667
    %v2916 = vpack.c.b16 %v2672, %v2668
    %v2917 = vpack.c.b16 %v2673, %v2669
    %v2918 = vpack.c.b16 %v2678, %v2674
    %v2919 = vpack.c.b16 %v2679, %v2675
    %v2920 = vpack.c.b16 %v2680, %v2676
    %v2921 = vpack.c.b16 %v2681, %v2677
    %v2922 = vpack.c.b16 %v2686, %v2682
    %v2923 = vpack.c.b16 %v2687, %v2683
    %v2924 = vpack.c.b16 %v2688, %v2684
    %v2925 = vpack.c.b16 %v2689, %v2685
    %v2926 = vpack.c.b16 %v2694, %v2690
    %v2927 = vpack.c.b16 %v2695, %v2691
    %v2928 = vpack.c.b16 %v2696, %v2692
    %v2929 = vpack.c.b16 %v2697, %v2693
    %v2930 = vpack.c.b16 %v2702, %v2698
    %v2931 = vpack.c.b16 %v2703, %v2699
    %v2932 = vpack.c.b16 %v2704, %v2700
    %v2933 = vpack.c.b16 %v2705, %v2701
    %v2934 = vpack.c.b16 %v2710, %v2706
    %v2935 = vpack.c.b16 %v2711, %v2707
    %v2936 = vpack.c.b16 %v2712, %v2708
    %v2937 = vpack.c.b16 %v2713, %v2709
    %v2938 = vpack.c.b16 %v2718, %v2714
    %v2939 = vpack.c.b16 %v2719, %v2715
    %v2940 = vpack.c.b16 %v2720, %v2716
    %v2941 = vpack.c.b16 %v2721, %v2717
    %v2942 = vpack.c.b16 %v2726, %v2722
    %v2943 = vpack.c.b16 %v2727, %v2723
    %v2944 = vpack.c.b16 %v2728, %v2724
    %v2945 = vpack.c.b16 %v2729, %v2725
    %v2946 = vpack.c.b16 %v2734, %v2730
    %v2947 = vpack.c.b16 %v2735, %v2731
    %v2948 = vpack.c.b16 %v2736, %v2732
    %v2949 = vpack.c.b16 %v2737, %v2733
    %v2950 = vpack.c.b16 %v2742, %v2738
    %v2951 = vpack.c.b16 %v2743, %v2739
    %v2952 = vpack.c.b16 %v2744, %v2740
    %v2953 = vpack.c.b16 %v2745, %v2741
    %v2954 = vpack.c.b16 %v2750, %v2746
    %v2955 = vpack.c.b16 %v2751, %v2747
    %v2956 = vpack.c.b16 %v2752, %v2748
    %v2957 = vpack.c.b16 %v2753, %v2749
    %v2958 = vpack.c.b16 %v2758, %v2754
    %v2959 = vpack.c.b16 %v2759, %v2755
    %v2960 = vpack.c.b16 %v2760, %v2756
    %v2961 = vpack.c.b16 %v2761, %v2757
    %v2962 = vpack.c.b16 %v2766, %v2762
    %v2963 = vpack.c.b16 %v2767, %v2763
    %v2964 = vpack.c.b16 %v2768, %v2764
    %v2965 = vpack.c.b16 %v2769, %v2765
    %v2966 = vpack.c.b16 %v2774, %v2770
    %v2967 = vpack.c.b16 %v2775, %v2771
    %v2968 = vpack.c.b16 %v2776, %v2772
    %v2969 = vpack.c.b16 %v2777, %v2773
    %v2970 = vpack.c.b16 %v2782, %v2778
    %v2971 = vpack.c.b16 %v2783, %v2779
    %v2972 = vpack.c.b16 %v2784, %v2780
    %v2973 = vpack.c.b16 %v2785, %v2781
    %v2974 = vpack.c.b16 %v2790, %v2786
    %v2975 = vpack.c.b16 %v2791, %v2787
    %v2976 = vpack.c.b16 %v2792, %v2788
    %v2977 = vpack.c.b16 %v2793, %v2789
    %v2978 = vpack.c.b16 %v2798, %v2794
    %v2979 = vpack.c.b16 %v2799, %v2795
    %v2980 = vpack.c.b16 %v2800, %v2796
    %v2981 = vpack.c.b16 %v2801, %v2797
    %v2982 = vpack.c.b16 %v2806, %v2802
    %v2983 = vpack.c.b16 %v2807, %v2803
    %v2984 = vpack.c.b16 %v2808, %v2804
    %v2985 = vpack.c.b16 %v2809, %v2805
    %v2986 = vpack.c.b16 %v2814, %v2810
    %v2987 = vpack.c.b16 %v2815, %v2811
    %v2988 = vpack.c.b16 %v2816, %v2812
    %v2989 = vpack.c.b16 %v2817, %v2813
    %v2990 = vpack.c.b16 %v2822, %v2818
    %v2991 = vpack.c.b16 %v2823, %v2819
    %v2992 = vpack.c.b16 %v2824, %v2820
    %v2993 = vpack.c.b16 %v2825, %v2821
    %v2994 = vpack.c.b16 %v2830, %v2826
    %v2995 = vpack.c.b16 %v2831, %v2827
    %v2996 = vpack.c.b16 %v2832, %v2828
    %v2997 = vpack.c.b16 %v2833, %v2829
    %v2998 = vpack.c.b16 %v2838, %v2834
    %v2999 = vpack.c.b16 %v2839, %v2835
    %v3000 = vpack.c.b16 %v2840, %v2836
    %v3001 = vpack.c.b16 %v2841, %v2837
    %v3002 = vpack.c.b16 %v2846, %v2842
    %v3003 = vpack.c.b16 %v2847, %v2843
    %v3004 = vpack.c.b16 %v2848, %v2844
    %v3005 = vpack.c.b16 %v2849, %v2845
    %v3006 = vpack.c.b16 %v2854, %v2850
    %v3007 = vpack.c.b16 %v2855, %v2851
    %v3008 = vpack.c.b16 %v2856, %v2852
    %v3009 = vpack.c.b16 %v2857, %v2853
    %v3010 = vpack.c.b16 %v2862, %v2858
    %v3011 = vpack.c.b16 %v2863, %v2859
    %v3012 = vpack.c.b16 %v2864, %v2860
    %v3013 = vpack.c.b16 %v2865, %v2861
    %v3014 = vpack.c.b16 %v2870, %v2866
    %v3015 = vpack.c.b16 %v2871, %v2867
    %v3016 = vpack.c.b16 %v2872, %v2868
    %v3017 = vpack.c.b16 %v2873, %v2869
    %v3018 = vpack.c.b16 %v2878, %v2874
    %v3019 = vpack.c.b16 %v2879, %v2875
    %v3020 = vpack.c.b16 %v2880, %v2876
    %v3021 = vpack.c.b16 %v2881, %v2877
    %v3022 = vpack.c.b16 %v2886, %v2882
    %v3023 = vpack.c.b16 %v2887, %v2883
    %v3024 = vpack.c.b16 %v2888, %v2884
    %v3025 = vpack.c.b16 %v2889, %v2885
    %v3026 = vpack.c.b16 %v2894, %v2890
    %v3027 = vpack.c.b16 %v2895, %v2891
    %v3028 = vpack.c.b16 %v2896, %v2892
    %v3029 = vpack.c.b16 %v2897, %v2893
    %v3030 = vpack.c.b16 %v2902, %v2898
    %v3031 = vpack.c.b16 %v2903, %v2899
    %v3032 = vpack.c.b16 %v2904, %v2900
    %v3033 = vpack.c.b16 %v2905, %v2901
    %3162 = vmatpush.bf16.msra.mxu0 %v2934
    %3163 = vmatpush.bf16.msra.mxu0 %v2930
    %3164 = vmatpush.bf16.msra.mxu0 %v2926
    %3165 = vmatpush.bf16.msra.mxu0 %v2922
    %3166 = vmatpush.bf16.msra.mxu0 %v2918
    %3167 = vmatpush.bf16.msra.mxu0 %v2914
    %3168 = vmatpush.bf16.msra.mxu0 %v2910
    %3169 = vmatpush.bf16.msra.mxu0 %v2906
    %3170 = vmatmul.bf16.gmra.mxu0 %v2380
    %v3171 = vpop.f32.mrf.mxu0
    %v3172 = vadd.f32 %v2518, %v3171
    %v3173 = vpop.f32.mrf.mxu0
    %3174 = vdwg.mxu0
    %3175 = vmatpush.bf16.msra.mxu0 %v2966
    %3176 = vmatpush.bf16.msra.mxu0 %v2962
    %3177 = vmatpush.bf16.msra.mxu0 %v2958
    %3178 = vmatpush.bf16.msra.mxu0 %v2954
    %3179 = vmatpush.bf16.msra.mxu0 %v2950
    %3180 = vmatpush.bf16.msra.mxu0 %v2946
    %3181 = vmatpush.bf16.msra.mxu0 %v2942
    %3182 = vmatpush.bf16.msra.mxu0 %v2938
    %3183 = vmatmul.bf16.gmra.mxu0 %v2381
    %v3184 = vpop.f32.mrf.mxu0
    %v3185 = vadd.f32 %v3172, %v3184
    %v3186 = vpop.f32.mrf.mxu0
    %3187 = vdwg.mxu0
    %3188 = vmatpush.bf16.msra.mxu0 %v2998
    %3189 = vmatpush.bf16.msra.mxu0 %v2994
    %3190 = vmatpush.bf16.msra.mxu0 %v2990
    %3191 = vmatpush.bf16.msra.mxu0 %v2986
    %3192 = vmatpush.bf16.msra.mxu0 %v2982
    %3193 = vmatpush.bf16.msra.mxu0 %v2978
    %3194 = vmatpush.bf16.msra.mxu0 %v2974
    %3195 = vmatpush.bf16.msra.mxu0 %v2970
    %3196 = vmatmul.bf16.gmra.mxu0 %v2382
    %v3197 = vpop.f32.mrf.mxu0
    %v3198 = vadd.f32 %v3185, %v3197
    %v3199 = vpop.f32.mrf.mxu0
    %3200 = vdwg.mxu0
    %3201 = vmatpush.bf16.msra.mxu0 %v3030
    %3202 = vmatpush.bf16.msra.mxu0 %v3026
    %3203 = vmatpush.bf16.msra.mxu0 %v3022
    %3204 = vmatpush.bf16.msra.mxu0 %v3018
    %3205 = vmatpush.bf16.msra.mxu0 %v3014
    %3206 = vmatpush.bf16.msra.mxu0 %v3010
    %3207 = vmatpush.bf16.msra.mxu0 %v3006
    %3208 = vmatpush.bf16.msra.mxu0 %v3002
    %3209 = vmatmul.bf16.gmra.mxu0 %v2383
    %v3210 = vpop.f32.mrf.mxu0
    %v3211 = vadd.f32 %v3198, %v3210
    %v3212 = vpop.f32.mrf.mxu0
    %3213 = vdwg.mxu0
    %3214 = vmatpush.bf16.msra.mxu0 %v2935
    %3215 = vmatpush.bf16.msra.mxu0 %v2931
    %3216 = vmatpush.bf16.msra.mxu0 %v2927
    %3217 = vmatpush.bf16.msra.mxu0 %v2923
    %3218 = vmatpush.bf16.msra.mxu0 %v2919
    %3219 = vmatpush.bf16.msra.mxu0 %v2915
    %3220 = vmatpush.bf16.msra.mxu0 %v2911
    %3221 = vmatpush.bf16.msra.mxu0 %v2907
    %3222 = vmatmul.bf16.gmra.mxu0 %v2380
    %v3223 = vpop.f32.mrf.mxu0
    %v3224 = vadd.f32 %v2519, %v3223
    %v3225 = vpop.f32.mrf.mxu0
    %3226 = vdwg.mxu0
    %3227 = vmatpush.bf16.msra.mxu0 %v2967
    %3228 = vmatpush.bf16.msra.mxu0 %v2963
    %3229 = vmatpush.bf16.msra.mxu0 %v2959
    %3230 = vmatpush.bf16.msra.mxu0 %v2955
    %3231 = vmatpush.bf16.msra.mxu0 %v2951
    %3232 = vmatpush.bf16.msra.mxu0 %v2947
    %3233 = vmatpush.bf16.msra.mxu0 %v2943
    %3234 = vmatpush.bf16.msra.mxu0 %v2939
    %3235 = vmatmul.bf16.gmra.mxu0 %v2381
    %v3236 = vpop.f32.mrf.mxu0
    %v3237 = vadd.f32 %v3224, %v3236
    %v3238 = vpop.f32.mrf.mxu0
    %3239 = vdwg.mxu0
    %3240 = vmatpush.bf16.msra.mxu0 %v2999
    %3241 = vmatpush.bf16.msra.mxu0 %v2995
    %3242 = vmatpush.bf16.msra.mxu0 %v2991
    %3243 = vmatpush.bf16.msra.mxu0 %v2987
    %3244 = vmatpush.bf16.msra.mxu0 %v2983
    %3245 = vmatpush.bf16.msra.mxu0 %v2979
    %3246 = vmatpush.bf16.msra.mxu0 %v2975
    %3247 = vmatpush.bf16.msra.mxu0 %v2971
    %3248 = vmatmul.bf16.gmra.mxu0 %v2382
    %v3249 = vpop.f32.mrf.mxu0
    %v3250 = vadd.f32 %v3237, %v3249
    %v3251 = vpop.f32.mrf.mxu0
    %3252 = vdwg.mxu0
    %3253 = vmatpush.bf16.msra.mxu0 %v3031
    %3254 = vmatpush.bf16.msra.mxu0 %v3027
    %3255 = vmatpush.bf16.msra.mxu0 %v3023
    %3256 = vmatpush.bf16.msra.mxu0 %v3019
    %3257 = vmatpush.bf16.msra.mxu0 %v3015
    %3258 = vmatpush.bf16.msra.mxu0 %v3011
    %3259 = vmatpush.bf16.msra.mxu0 %v3007
    %3260 = vmatpush.bf16.msra.mxu0 %v3003
    %3261 = vmatmul.bf16.gmra.mxu0 %v2383
    %v3262 = vpop.f32.mrf.mxu0
    %v3263 = vadd.f32 %v3250, %v3262
    %v3264 = vpop.f32.mrf.mxu0
    %3265 = vdwg.mxu0
    %3266 = vmatpush.bf16.msra.mxu0 %v2936
    %3267 = vmatpush.bf16.msra.mxu0 %v2932
    %3268 = vmatpush.bf16.msra.mxu0 %v2928
    %3269 = vmatpush.bf16.msra.mxu0 %v2924
    %3270 = vmatpush.bf16.msra.mxu0 %v2920
    %3271 = vmatpush.bf16.msra.mxu0 %v2916
    %3272 = vmatpush.bf16.msra.mxu0 %v2912
    %3273 = vmatpush.bf16.msra.mxu0 %v2908
    %3274 = vmatmul.bf16.gmra.mxu0 %v2380
    %v3275 = vpop.f32.mrf.mxu0
    %v3276 = vadd.f32 %v2520, %v3275
    %v3277 = vpop.f32.mrf.mxu0
    %3278 = vdwg.mxu0
    %3279 = vmatpush.bf16.msra.mxu0 %v2968
    %3280 = vmatpush.bf16.msra.mxu0 %v2964
    %3281 = vmatpush.bf16.msra.mxu0 %v2960
    %3282 = vmatpush.bf16.msra.mxu0 %v2956
    %3283 = vmatpush.bf16.msra.mxu0 %v2952
    %3284 = vmatpush.bf16.msra.mxu0 %v2948
    %3285 = vmatpush.bf16.msra.mxu0 %v2944
    %3286 = vmatpush.bf16.msra.mxu0 %v2940
    %3287 = vmatmul.bf16.gmra.mxu0 %v2381
    %v3288 = vpop.f32.mrf.mxu0
    %v3289 = vadd.f32 %v3276, %v3288
    %v3290 = vpop.f32.mrf.mxu0
    %3291 = vdwg.mxu0
    %3292 = vmatpush.bf16.msra.mxu0 %v3000
    %3293 = vmatpush.bf16.msra.mxu0 %v2996
    %3294 = vmatpush.bf16.msra.mxu0 %v2992
    %3295 = vmatpush.bf16.msra.mxu0 %v2988
    %3296 = vmatpush.bf16.msra.mxu0 %v2984
    %3297 = vmatpush.bf16.msra.mxu0 %v2980
    %3298 = vmatpush.bf16.msra.mxu0 %v2976
    %3299 = vmatpush.bf16.msra.mxu0 %v2972
    %3300 = vmatmul.bf16.gmra.mxu0 %v2382
    %v3301 = vpop.f32.mrf.mxu0
    %v3302 = vadd.f32 %v3289, %v3301
    %v3303 = vpop.f32.mrf.mxu0
    %3304 = vdwg.mxu0
    %3305 = vmatpush.bf16.msra.mxu0 %v3032
    %3306 = vmatpush.bf16.msra.mxu0 %v3028
    %3307 = vmatpush.bf16.msra.mxu0 %v3024
    %3308 = vmatpush.bf16.msra.mxu0 %v3020
    %3309 = vmatpush.bf16.msra.mxu0 %v3016
    %3310 = vmatpush.bf16.msra.mxu0 %v3012
    %3311 = vmatpush.bf16.msra.mxu0 %v3008
    %3312 = vmatpush.bf16.msra.mxu0 %v3004
    %3313 = vmatmul.bf16.gmra.mxu0 %v2383
    %v3314 = vpop.f32.mrf.mxu0
    %v3315 = vadd.f32 %v3302, %v3314
    %v3316 = vpop.f32.mrf.mxu0
    %3317 = vdwg.mxu0
    %3318 = vmatpush.bf16.msra.mxu0 %v2937
    %3319 = vmatpush.bf16.msra.mxu0 %v2933
    %3320 = vmatpush.bf16.msra.mxu0 %v2929
    %3321 = vmatpush.bf16.msra.mxu0 %v2925
    %3322 = vmatpush.bf16.msra.mxu0 %v2921
    %3323 = vmatpush.bf16.msra.mxu0 %v2917
    %3324 = vmatpush.bf16.msra.mxu0 %v2913
    %3325 = vmatpush.bf16.msra.mxu0 %v2909
    %3326 = vmatmul.bf16.gmra.mxu0 %v2380
    %v3327 = vpop.f32.mrf.mxu0
    %v3328 = vadd.f32 %v2521, %v3327
    %v3329 = vpop.f32.mrf.mxu0
    %3330 = vdwg.mxu0
    %3331 = vmatpush.bf16.msra.mxu0 %v2969
    %3332 = vmatpush.bf16.msra.mxu0 %v2965
    %3333 = vmatpush.bf16.msra.mxu0 %v2961
    %3334 = vmatpush.bf16.msra.mxu0 %v2957
    %3335 = vmatpush.bf16.msra.mxu0 %v2953
    %3336 = vmatpush.bf16.msra.mxu0 %v2949
    %3337 = vmatpush.bf16.msra.mxu0 %v2945
    %3338 = vmatpush.bf16.msra.mxu0 %v2941
    %3339 = vmatmul.bf16.gmra.mxu0 %v2381
    %v3340 = vpop.f32.mrf.mxu0
    %v3341 = vadd.f32 %v3328, %v3340
    %v3342 = vpop.f32.mrf.mxu0
    %3343 = vdwg.mxu0
    %3344 = vmatpush.bf16.msra.mxu0 %v3001
    %3345 = vmatpush.bf16.msra.mxu0 %v2997
    %3346 = vmatpush.bf16.msra.mxu0 %v2993
    %3347 = vmatpush.bf16.msra.mxu0 %v2989
    %3348 = vmatpush.bf16.msra.mxu0 %v2985
    %3349 = vmatpush.bf16.msra.mxu0 %v2981
    %3350 = vmatpush.bf16.msra.mxu0 %v2977
    %3351 = vmatpush.bf16.msra.mxu0 %v2973
    %3352 = vmatmul.bf16.gmra.mxu0 %v2382
    %v3353 = vpop.f32.mrf.mxu0
    %v3354 = vadd.f32 %v3341, %v3353
    %v3355 = vpop.f32.mrf.mxu0
    %3356 = vdwg.mxu0
    %3357 = vmatpush.bf16.msra.mxu0 %v3033
    %3358 = vmatpush.bf16.msra.mxu0 %v3029
    %3359 = vmatpush.bf16.msra.mxu0 %v3025
    %3360 = vmatpush.bf16.msra.mxu0 %v3021
    %3361 = vmatpush.bf16.msra.mxu0 %v3017
    %3362 = vmatpush.bf16.msra.mxu0 %v3013
    %3363 = vmatpush.bf16.msra.mxu0 %v3009
    %3364 = vmatpush.bf16.msra.mxu0 %v3005
    %3365 = vmatmul.bf16.gmra.mxu0 %v2383
    %v3366 = vpop.f32.mrf.mxu0
    %v3367 = vadd.f32 %v3354, %v3366
    %v3368 = vpop.f32.mrf.mxu0
    %3369 = vdwg.mxu0
    %v3370 = vrot.slane %v3211, 4
    %v3371 = vadd.f32 %v3211, %v3370
    %v3372 = vrot.slane %v3371, 2
    %v3373 = vadd.f32 %v3371, %v3372
    %v3374 = vrot.slane %v3373, 1
    %v3375 = vadd.f32 %v3373, %v3374
    %v3376 = vrot.slane %v3263, 4
    %v3377 = vadd.f32 %v3263, %v3376
    %v3378 = vrot.slane %v3377, 2
    %v3379 = vadd.f32 %v3377, %v3378
    %v3380 = vrot.slane %v3379, 1
    %v3381 = vadd.f32 %v3379, %v3380
    %v3382 = vrot.slane %v3315, 4
    %v3383 = vadd.f32 %v3315, %v3382
    %v3384 = vrot.slane %v3383, 2
    %v3385 = vadd.f32 %v3383, %v3384
    %v3386 = vrot.slane %v3385, 1
    %v3387 = vadd.f32 %v3385, %v3386
    %v3388 = vrot.slane %v3367, 4
    %v3389 = vadd.f32 %v3367, %v3388
    %v3390 = vrot.slane %v3389, 2
    %v3391 = vadd.f32 %v3389, %v3390
    %v3392 = vrot.slane %v3391, 1
    %v3393 = vadd.f32 %v3391, %v3392
    %v3394 = vmul.f32 %v3375, %v406
    %v3395 = vmul.f32 %v3381, %v406
    %v3396 = vmul.f32 %v3387, %v406
    %v3397 = vmul.f32 %v3393, %v406
    %v3398 = vsub.f32 %v3211, %v3394
    %v3399 = vsub.f32 %v3263, %v3395
    %v3400 = vsub.f32 %v3315, %v3396
    %v3401 = vsub.f32 %v3367, %v3397
    %v3402 = vmul.f32 %v3398, %v3398
    %v3403 = vmul.f32 %v3399, %v3399
    %v3404 = vmul.f32 %v3400, %v3400
    %v3405 = vmul.f32 %v3401, %v3401
    %v3406 = vrot.slane %v3402, 4
    %v3407 = vadd.f32 %v3402, %v3406
    %v3408 = vrot.slane %v3407, 2
    %v3409 = vadd.f32 %v3407, %v3408
    %v3410 = vrot.slane %v3409, 1
    %v3411 = vadd.f32 %v3409, %v3410
    %v3412 = vrot.slane %v3403, 4
    %v3413 = vadd.f32 %v3403, %v3412
    %v3414 = vrot.slane %v3413, 2
    %v3415 = vadd.f32 %v3413, %v3414
    %v3416 = vrot.slane %v3415, 1
    %v3417 = vadd.f32 %v3415, %v3416
    %v3418 = vrot.slane %v3404, 4
    %v3419 = vadd.f32 %v3404, %v3418
    %v3420 = vrot.slane %v3419, 2
    %v3421 = vadd.f32 %v3419, %v3420
    %v3422 = vrot.slane %v3421, 1
    %v3423 = vadd.f32 %v3421, %v3422
    %v3424 = vrot.slane %v3405, 4
    %v3425 = vadd.f32 %v3405, %v3424
    %v3426 = vrot.slane %v3425, 2
    %v3427 = vadd.f32 %v3425, %v3426
    %v3428 = vrot.slane %v3427, 1
    %v3429 = vadd.f32 %v3427, %v3428
    %v3430 = vmul.f32 %v3411, %v406
    %v3431 = vmul.f32 %v3417, %v406
    %v3432 = vmul.f32 %v3423, %v406
    %v3433 = vmul.f32 %v3429, %v406
    %v3434 = vadd.f32 %v3430, 1e-05
    %v3435 = vadd.f32 %v3431, 1e-05
    %v3436 = vadd.f32 %v3432, 1e-05
    %v3437 = vadd.f32 %v3433, 1e-05
    %v3438 = vrsqrt.pop %v3434
    %v3439 = vmul.f32 %v3438, %v3434
    %v3440 = vmul.f32 %v3439, %v3438
    %v3441 = vmul.f32 0.5, %v3440
    %v3442 = vsub.f32 1.5, %v3441
    %v3443 = vmul.f32 %v3438, %v3442
    %vm3444 = vweird.f32 %v3434
    %vm3445 = vweird.f32 %v3438
    %vm3446 = vmor %vm3444, %vm3445
    %v3447 = vsel %vm3446, %v3438, %v3443
    %v3448 = vrsqrt.pop %v3435
    %v3449 = vmul.f32 %v3448, %v3435
    %v3450 = vmul.f32 %v3449, %v3448
    %v3451 = vmul.f32 0.5, %v3450
    %v3452 = vsub.f32 1.5, %v3451
    %v3453 = vmul.f32 %v3448, %v3452
    %vm3454 = vweird.f32 %v3435
    %vm3455 = vweird.f32 %v3448
    %vm3456 = vmor %vm3454, %vm3455
    %v3457 = vsel %vm3456, %v3448, %v3453
    %v3458 = vrsqrt.pop %v3436
    %v3459 = vmul.f32 %v3458, %v3436
    %v3460 = vmul.f32 %v3459, %v3458
    %v3461 = vmul.f32 0.5, %v3460
    %v3462 = vsub.f32 1.5, %v3461
    %v3463 = vmul.f32 %v3458, %v3462
    %vm3464 = vweird.f32 %v3436
    %vm3465 = vweird.f32 %v3458
    %vm3466 = vmor %vm3464, %vm3465
    %v3467 = vsel %vm3466, %v3458, %v3463
    %v3468 = vrsqrt.pop %v3437
    %v3469 = vmul.f32 %v3468, %v3437
    %v3470 = vmul.f32 %v3469, %v3468
    %v3471 = vmul.f32 0.5, %v3470
    %v3472 = vsub.f32 1.5, %v3471
    %v3473 = vmul.f32 %v3468, %v3472
    %vm3474 = vweird.f32 %v3437
    %vm3475 = vweird.f32 %v3468
    %vm3476 = vmor %vm3474, %vm3475
    %v3477 = vsel %vm3476, %v3468, %v3473
    %v3478 = vmul.f32 %v3398, %v3447
    %v3479 = vmul.f32 %v3399, %v3457
    %v3480 = vmul.f32 %v3400, %v3467
    %v3481 = vmul.f32 %v3401, %v3477
    %v3482 = vperm.slane %v2514, 1
    %v3483 = vperm.slane %v2515, 1
    %v3484 = vperm.slane %v2516, 1
    %v3485 = vperm.slane %v2517, 1
    %v3486 = vmul.f32 %v3478, %v3482
    %v3487 = vmul.f32 %v3479, %v3483
    %v3488 = vmul.f32 %v3480, %v3484
    %v3489 = vmul.f32 %v3481, %v3485
    %v3490 = vperm.slane %v2514, 2
    %v3491 = vperm.slane %v2515, 2
    %v3492 = vperm.slane %v2516, 2
    %v3493 = vperm.slane %v2517, 2
    %v3494 = vadd.f32 %v3486, %v3490
    %v3495 = vadd.f32 %v3487, %v3491
    %v3496 = vadd.f32 %v3488, %v3492
    %v3497 = vadd.f32 %v3489, %v3493
    %v3498 = vmax.f32 %v3494, 0.0
    %v3499 = vmax.f32 %v3495, 0.0
    %v3500 = vmax.f32 %v3496, 0.0
    %v3501 = vmax.f32 %v3497, 0.0
    %v3502 = vpack.c.bf16 %v3498, %v3498
    %v3503 = vpack.c.bf16 %v3499, %v3499
    %v3504 = vpack.c.bf16 %v3500, %v3500
    %v3505 = vpack.c.bf16 %v3501, %v3501
    %s3506 = sshll.u32 %s1643, 4
    %3507 = dma.done %s105, %s3506
    %v3508 = vld [vmem:[#allocation7] sm:$0xf]
    %v3509 = vld [vmem:[#allocation7 + $0x4] sm:$0xf]
    %v3510 = vld [vmem:[#allocation7 + $0x8] sm:$0xf]
    %v3511 = vld [vmem:[#allocation7 + $0xc] sm:$0xf]
    %v3512 = vld [vmem:[#allocation7 + $0x10] sm:$0xf]
    %v3513 = vld [vmem:[#allocation7 + $0x14] sm:$0xf]
    %v3514 = vld [vmem:[#allocation7 + $0x18] sm:$0xf]
    %v3515 = vld [vmem:[#allocation7 + $0x1c] sm:$0xf]
    %v3516 = vld [vmem:[#allocation7 + $0x20] sm:$0xf]
    %v3517 = vld [vmem:[#allocation7 + $0x24] sm:$0xf]
    %v3518 = vld [vmem:[#allocation7 + $0x28] sm:$0xf]
    %v3519 = vld [vmem:[#allocation7 + $0x2c] sm:$0xf]
    %v3520 = vld [vmem:[#allocation7 + $0x30] sm:$0xf]
    %v3521 = vld [vmem:[#allocation7 + $0x34] sm:$0xf]
    %v3522 = vld [vmem:[#allocation7 + $0x38] sm:$0xf]
    %v3523 = vld [vmem:[#allocation7 + $0x3c] sm:$0xf]
    %v3524 = vld [vmem:[#allocation7 + $0x40] sm:$0xf]
    %v3525 = vld [vmem:[#allocation7 + $0x44] sm:$0xf]
    %v3526 = vld [vmem:[#allocation7 + $0x48] sm:$0xf]
    %v3527 = vld [vmem:[#allocation7 + $0x4c] sm:$0xf]
    %v3528 = vld [vmem:[#allocation7 + $0x50] sm:$0xf]
    %v3529 = vld [vmem:[#allocation7 + $0x54] sm:$0xf]
    %v3530 = vld [vmem:[#allocation7 + $0x58] sm:$0xf]
    %v3531 = vld [vmem:[#allocation7 + $0x5c] sm:$0xf]
    %v3532 = vld [vmem:[#allocation7 + $0x60] sm:$0xf]
    %v3533 = vld [vmem:[#allocation7 + $0x64] sm:$0xf]
    %v3534 = vld [vmem:[#allocation7 + $0x68] sm:$0xf]
    %v3535 = vld [vmem:[#allocation7 + $0x6c] sm:$0xf]
    %v3536 = vld [vmem:[#allocation7 + $0x70] sm:$0xf]
    %v3537 = vld [vmem:[#allocation7 + $0x74] sm:$0xf]
    %v3538 = vld [vmem:[#allocation7 + $0x78] sm:$0xf]
    %v3539 = vld [vmem:[#allocation7 + $0x7c] sm:$0xf]
    %v3540 = vld [vmem:[#allocation7 + $0x80] sm:$0xf]
    %v3541 = vld [vmem:[#allocation7 + $0x84] sm:$0xf]
    %v3542 = vld [vmem:[#allocation7 + $0x88] sm:$0xf]
    %v3543 = vld [vmem:[#allocation7 + $0x8c] sm:$0xf]
    %v3544 = vld [vmem:[#allocation7 + $0x90] sm:$0xf]
    %v3545 = vld [vmem:[#allocation7 + $0x94] sm:$0xf]
    %v3546 = vld [vmem:[#allocation7 + $0x98] sm:$0xf]
    %v3547 = vld [vmem:[#allocation7 + $0x9c] sm:$0xf]
    %v3548 = vld [vmem:[#allocation7 + $0xa0] sm:$0xf]
    %v3549 = vld [vmem:[#allocation7 + $0xa4] sm:$0xf]
    %v3550 = vld [vmem:[#allocation7 + $0xa8] sm:$0xf]
    %v3551 = vld [vmem:[#allocation7 + $0xac] sm:$0xf]
    %v3552 = vld [vmem:[#allocation7 + $0xb0] sm:$0xf]
    %v3553 = vld [vmem:[#allocation7 + $0xb4] sm:$0xf]
    %v3554 = vld [vmem:[#allocation7 + $0xb8] sm:$0xf]
    %v3555 = vld [vmem:[#allocation7 + $0xbc] sm:$0xf]
    %v3556 = vld [vmem:[#allocation7 + $0xc0] sm:$0xf]
    %v3557 = vld [vmem:[#allocation7 + $0xc4] sm:$0xf]
    %v3558 = vld [vmem:[#allocation7 + $0xc8] sm:$0xf]
    %v3559 = vld [vmem:[#allocation7 + $0xcc] sm:$0xf]
    %v3560 = vld [vmem:[#allocation7 + $0xd0] sm:$0xf]
    %v3561 = vld [vmem:[#allocation7 + $0xd4] sm:$0xf]
    %v3562 = vld [vmem:[#allocation7 + $0xd8] sm:$0xf]
    %v3563 = vld [vmem:[#allocation7 + $0xdc] sm:$0xf]
    %v3564 = vld [vmem:[#allocation7 + $0xe0] sm:$0xf]
    %v3565 = vld [vmem:[#allocation7 + $0xe4] sm:$0xf]
    %v3566 = vld [vmem:[#allocation7 + $0xe8] sm:$0xf]
    %v3567 = vld [vmem:[#allocation7 + $0xec] sm:$0xf]
    %v3568 = vld [vmem:[#allocation7 + $0xf0] sm:$0xf]
    %v3569 = vld [vmem:[#allocation7 + $0xf4] sm:$0xf]
    %v3570 = vld [vmem:[#allocation7 + $0xf8] sm:$0xf]
    %v3571 = vld [vmem:[#allocation7 + $0xfc] sm:$0xf]
    %v3572 = vld [vmem:[#allocation9 + $0xa0] sm:$0x7]
    %v3573 = vperm.slane %v3572, 0
    %v3638 = vunpack.c.l.b16 %v3508
    %v3639 = vunpack.c.l.b16 %v3509
    %v3640 = vunpack.c.l.b16 %v3510
    %v3641 = vunpack.c.l.b16 %v3511
    %v3642 = vunpack.c.l.b16 %v3512
    %v3643 = vunpack.c.l.b16 %v3513
    %v3644 = vunpack.c.l.b16 %v3514
    %v3645 = vunpack.c.l.b16 %v3515
    %v3646 = vunpack.c.l.b16 %v3516
    %v3647 = vunpack.c.l.b16 %v3517
    %v3648 = vunpack.c.l.b16 %v3518
    %v3649 = vunpack.c.l.b16 %v3519
    %v3650 = vunpack.c.l.b16 %v3520
    %v3651 = vunpack.c.l.b16 %v3521
    %v3652 = vunpack.c.l.b16 %v3522
    %v3653 = vunpack.c.l.b16 %v3523
    %v3654 = vunpack.c.l.b16 %v3524
    %v3655 = vunpack.c.l.b16 %v3525
    %v3656 = vunpack.c.l.b16 %v3526
    %v3657 = vunpack.c.l.b16 %v3527
    %v3658 = vunpack.c.l.b16 %v3528
    %v3659 = vunpack.c.l.b16 %v3529
    %v3660 = vunpack.c.l.b16 %v3530
    %v3661 = vunpack.c.l.b16 %v3531
    %v3662 = vunpack.c.l.b16 %v3532
    %v3663 = vunpack.c.l.b16 %v3533
    %v3664 = vunpack.c.l.b16 %v3534
    %v3665 = vunpack.c.l.b16 %v3535
    %v3666 = vunpack.c.l.b16 %v3536
    %v3667 = vunpack.c.l.b16 %v3537
    %v3668 = vunpack.c.l.b16 %v3538
    %v3669 = vunpack.c.l.b16 %v3539
    %v3670 = vunpack.c.l.b16 %v3540
    %v3671 = vunpack.c.l.b16 %v3541
    %v3672 = vunpack.c.l.b16 %v3542
    %v3673 = vunpack.c.l.b16 %v3543
    %v3674 = vunpack.c.l.b16 %v3544
    %v3675 = vunpack.c.l.b16 %v3545
    %v3676 = vunpack.c.l.b16 %v3546
    %v3677 = vunpack.c.l.b16 %v3547
    %v3678 = vunpack.c.l.b16 %v3548
    %v3679 = vunpack.c.l.b16 %v3549
    %v3680 = vunpack.c.l.b16 %v3550
    %v3681 = vunpack.c.l.b16 %v3551
    %v3682 = vunpack.c.l.b16 %v3552
    %v3683 = vunpack.c.l.b16 %v3553
    %v3684 = vunpack.c.l.b16 %v3554
    %v3685 = vunpack.c.l.b16 %v3555
    %v3686 = vunpack.c.l.b16 %v3556
    %v3687 = vunpack.c.l.b16 %v3557
    %v3688 = vunpack.c.l.b16 %v3558
    %v3689 = vunpack.c.l.b16 %v3559
    %v3690 = vunpack.c.l.b16 %v3560
    %v3691 = vunpack.c.l.b16 %v3561
    %v3692 = vunpack.c.l.b16 %v3562
    %v3693 = vunpack.c.l.b16 %v3563
    %v3694 = vunpack.c.l.b16 %v3564
    %v3695 = vunpack.c.l.b16 %v3565
    %v3696 = vunpack.c.l.b16 %v3566
    %v3697 = vunpack.c.l.b16 %v3567
    %v3698 = vunpack.c.l.b16 %v3568
    %v3699 = vunpack.c.l.b16 %v3569
    %v3700 = vunpack.c.l.b16 %v3570
    %v3701 = vunpack.c.l.b16 %v3571
    %v3702 = vpack.c.b16 %v3639, %v3638
    %v3703 = vpack.c.b16 %v3641, %v3640
    %v3704 = vpack.c.b16 %v3643, %v3642
    %v3705 = vpack.c.b16 %v3645, %v3644
    %v3706 = vpack.c.b16 %v3647, %v3646
    %v3707 = vpack.c.b16 %v3649, %v3648
    %v3708 = vpack.c.b16 %v3651, %v3650
    %v3709 = vpack.c.b16 %v3653, %v3652
    %v3710 = vpack.c.b16 %v3655, %v3654
    %v3711 = vpack.c.b16 %v3657, %v3656
    %v3712 = vpack.c.b16 %v3659, %v3658
    %v3713 = vpack.c.b16 %v3661, %v3660
    %v3714 = vpack.c.b16 %v3663, %v3662
    %v3715 = vpack.c.b16 %v3665, %v3664
    %v3716 = vpack.c.b16 %v3667, %v3666
    %v3717 = vpack.c.b16 %v3669, %v3668
    %v3718 = vpack.c.b16 %v3671, %v3670
    %v3719 = vpack.c.b16 %v3673, %v3672
    %v3720 = vpack.c.b16 %v3675, %v3674
    %v3721 = vpack.c.b16 %v3677, %v3676
    %v3722 = vpack.c.b16 %v3679, %v3678
    %v3723 = vpack.c.b16 %v3681, %v3680
    %v3724 = vpack.c.b16 %v3683, %v3682
    %v3725 = vpack.c.b16 %v3685, %v3684
    %v3726 = vpack.c.b16 %v3687, %v3686
    %v3727 = vpack.c.b16 %v3689, %v3688
    %v3728 = vpack.c.b16 %v3691, %v3690
    %v3729 = vpack.c.b16 %v3693, %v3692
    %v3730 = vpack.c.b16 %v3695, %v3694
    %v3731 = vpack.c.b16 %v3697, %v3696
    %v3732 = vpack.c.b16 %v3699, %v3698
    %v3733 = vpack.c.b16 %v3701, %v3700
    %3766 = vmatpush.bf16.msra.mxu0 %v3709
    %3767 = vmatpush.bf16.msra.mxu0 %v3708
    %3768 = vmatpush.bf16.msra.mxu0 %v3707
    %3769 = vmatpush.bf16.msra.mxu0 %v3706
    %3770 = vmatpush.bf16.msra.mxu0 %v3705
    %3771 = vmatpush.bf16.msra.mxu0 %v3704
    %3772 = vmatpush.bf16.msra.mxu0 %v3703
    %3773 = vmatpush.bf16.msra.mxu0 %v3702
    %3774 = vmatmul.bf16.gmra.mxu0 %v3502
    %v3775 = vpop.f32.mrf.mxu0
    %v3776 = vadd.f32 %v3573, %v3775
    %v3777 = vpop.f32.mrf.mxu0
    %3778 = vdwg.mxu0
    %3779 = vmatpush.bf16.msra.mxu0 %v3717
    %3780 = vmatpush.bf16.msra.mxu0 %v3716
    %3781 = vmatpush.bf16.msra.mxu0 %v3715
    %3782 = vmatpush.bf16.msra.mxu0 %v3714
    %3783 = vmatpush.bf16.msra.mxu0 %v3713
    %3784 = vmatpush.bf16.msra.mxu0 %v3712
    %3785 = vmatpush.bf16.msra.mxu0 %v3711
    %3786 = vmatpush.bf16.msra.mxu0 %v3710
    %3787 = vmatmul.bf16.gmra.mxu0 %v3503
    %v3788 = vpop.f32.mrf.mxu0
    %v3789 = vadd.f32 %v3776, %v3788
    %v3790 = vpop.f32.mrf.mxu0
    %3791 = vdwg.mxu0
    %3792 = vmatpush.bf16.msra.mxu0 %v3725
    %3793 = vmatpush.bf16.msra.mxu0 %v3724
    %3794 = vmatpush.bf16.msra.mxu0 %v3723
    %3795 = vmatpush.bf16.msra.mxu0 %v3722
    %3796 = vmatpush.bf16.msra.mxu0 %v3721
    %3797 = vmatpush.bf16.msra.mxu0 %v3720
    %3798 = vmatpush.bf16.msra.mxu0 %v3719
    %3799 = vmatpush.bf16.msra.mxu0 %v3718
    %3800 = vmatmul.bf16.gmra.mxu0 %v3504
    %v3801 = vpop.f32.mrf.mxu0
    %v3802 = vadd.f32 %v3789, %v3801
    %v3803 = vpop.f32.mrf.mxu0
    %3804 = vdwg.mxu0
    %3805 = vmatpush.bf16.msra.mxu0 %v3733
    %3806 = vmatpush.bf16.msra.mxu0 %v3732
    %3807 = vmatpush.bf16.msra.mxu0 %v3731
    %3808 = vmatpush.bf16.msra.mxu0 %v3730
    %3809 = vmatpush.bf16.msra.mxu0 %v3729
    %3810 = vmatpush.bf16.msra.mxu0 %v3728
    %3811 = vmatpush.bf16.msra.mxu0 %v3727
    %3812 = vmatpush.bf16.msra.mxu0 %v3726
    %3813 = vmatmul.bf16.gmra.mxu0 %v3505
    %v3814 = vpop.f32.mrf.mxu0
    %v3815 = vadd.f32 %v3802, %v3814
    %v3816 = vpop.f32.mrf.mxu0
    %3817 = vdwg.mxu0
    %v3818 = vrot.slane %v3815, 4
    %v3819 = vadd.f32 %v3815, %v3818
    %v3820 = vrot.slane %v3819, 2
    %v3821 = vadd.f32 %v3819, %v3820
    %v3822 = vrot.slane %v3821, 1
    %v3823 = vadd.f32 %v3821, %v3822
    %v3824 = vmul.f32 %v3823, %v406
    %v3825 = vsub.f32 %v3815, %v3824
    %v3826 = vmul.f32 %v3825, %v3825
    %v3827 = vrot.slane %v3826, 4
    %v3828 = vadd.f32 %v3826, %v3827
    %v3829 = vrot.slane %v3828, 2
    %v3830 = vadd.f32 %v3828, %v3829
    %v3831 = vrot.slane %v3830, 1
    %v3832 = vadd.f32 %v3830, %v3831
    %v3833 = vmul.f32 %v3832, %v406
    %v3834 = vadd.f32 %v3833, 1e-05
    %v3835 = vrsqrt.pop %v3834
    %v3836 = vmul.f32 %v3835, %v3834
    %v3837 = vmul.f32 %v3836, %v3835
    %v3838 = vmul.f32 0.5, %v3837
    %v3839 = vsub.f32 1.5, %v3838
    %v3840 = vmul.f32 %v3835, %v3839
    %vm3841 = vweird.f32 %v3834
    %vm3842 = vweird.f32 %v3835
    %vm3843 = vmor %vm3841, %vm3842
    %v3844 = vsel %vm3843, %v3835, %v3840
    %v3845 = vmul.f32 %v3825, %v3844
    %v3846 = vperm.slane %v3572, 1
    %v3847 = vmul.f32 %v3845, %v3846
    %v3848 = vperm.slane %v3572, 2
    %v3849 = vadd.f32 %v3847, %v3848
    %v3850 = vmul.f32 %v3849, 0.5
    %v3851 = vtanh.pop %v3850
    %v3852 = vmul.f32 %v3851, 0.5
    %v3853 = vadd.f32 %v3852, 0.5
    %3854 = vst [vmem:[#allocation12] sm:$0xff] %v3853
    // Predicated region
    $region38: #{autoencoder_forward.1} parent=1 // pred_check
      _
    $region39: #{autoencoder_forward.1} parent=1 // pred_check_branch
      %3856 = sbr.rel (0) target = $region41
    $region40: #{autoencoder_forward.1} parent=1 // pred_region
      _
    $region41: #{autoencoder_forward.1} parent=1 // pred_fallthru
      _
    // Predicated region
    $region42: #{autoencoder_forward.1} parent=1 // pred_check
      _
    $region43: #{autoencoder_forward.1} parent=1 // pred_check_branch
      %3858 = sbr.rel (0) target = $region45
    $region44: #{autoencoder_forward.1} parent=1 // pred_region
      %3860 = vsyncadd [#allocation11], 0
      %s3862 = sshll.u32 [#allocation12], 4
      %s3863 = int_to_ptr.vmem [resolvable:$true] %s3862
      %s3864 = sshll.u32 %s5, 4
      %s3865 = int_to_ptr.hbm [resolvable:$true] %s3864
      %3867 = dma.vmem_to_hbm [thread:$0]  %s3863, 128, %s3865, [#allocation11]
    $region45: #{autoencoder_forward.1} parent=1 // pred_fallthru
      _
    // Predicated region
    $region46: #{autoencoder_forward.1} parent=1 // pred_check
      _
    $region47: #{autoencoder_forward.1} parent=1 // pred_check_branch
      %3869 = sbr.rel (0) target = $region49
    $region48: #{autoencoder_forward.1} parent=1 // pred_region
      _
    $region49: #{autoencoder_forward.1} parent=1 // pred_fallthru
      _
    // Predicated region
    $region50: #{autoencoder_forward.1} parent=1 // pred_check
      _
    $region51: #{autoencoder_forward.1} parent=1 // pred_check_branch
      %3871 = sbr.rel (0) target = $region53
    $region52: #{autoencoder_forward.1} parent=1 // pred_region
      %3873 = dma.done [#allocation11], 128
    $region53: #{autoencoder_forward.1} parent=1 // pred_fallthru
      _
    %3874 = vsyncpa [#allocation10], 1
    %3875 = vsyncpa [#allocation11], 1
  %3876 = vsyncmov [#allocation8]
  %s3877 = vpop.sfrf %3876
  %p3878 = scmp.eq.s32.totalorder %s3877, 0
  %p3879 = pneg %p3878
  %3881 = shalt.err (%p3879)
  %s3882 = scalar_lea.sflag [#allocation8], 1
  %3883 = vsyncmov %s3882
  %s3884 = vpop.sfrf %3883
  %p3885 = scmp.eq.s32.totalorder %s3884, 0
  %p3886 = pneg %p3885
  %3888 = shalt.err (%p3886)
  %s3889 = scalar_lea.sflag [#allocation8], 2
  %3890 = vsyncmov %s3889
  %s3891 = vpop.sfrf %3890
  %p3892 = scmp.eq.s32.totalorder %s3891, 0
  %p3893 = pneg %p3892
  %3895 = shalt.err (%p3893)
  %s3896 = scalar_lea.sflag [#allocation8], 3
  %3897 = vsyncmov %s3896
  %s3898 = vpop.sfrf %3897
  %p3899 = scmp.eq.s32.totalorder %s3898, 0
  %p3900 = pneg %p3899
  %3902 = shalt.err (%p3900)
  %s3903 = scalar_lea.sflag [#allocation8], 4
  %3904 = vsyncmov %s3903
  %s3905 = vpop.sfrf %3904
  %p3906 = scmp.eq.s32.totalorder %s3905, 0
  %p3907 = pneg %p3906
  %3909 = shalt.err (%p3907)
  %s3910 = scalar_lea.sflag [#allocation8], 5
  %3911 = vsyncmov %s3910
  %s3912 = vpop.sfrf %3911
  %p3913 = scmp.eq.s32.totalorder %s3912, 0
  %p3914 = pneg %p3913
  %3916 = shalt.err (%p3914)

</llo_original>
